<compile_context>
chip_gen: v7x
topology: tpu7x:2x2x1
jax: 0.10.0
libtpu: 0.0.40
codegen_flags: <defaults>
</compile_context>

<pallas_src>
import functools

import jax
import jax.numpy as jnp
import numpy as np
from jax import lax
from jax.experimental import pallas as pl
from jax.experimental.pallas import tpu as pltpu


def _make_kernel(n_layers: int, T: int, H: int, Ns: int, mask_tail: bool, unroll: int):
    L = n_layers
    n_in = 4 + 4 * (L - 1)

    def kernel(*refs):
        (xproj_ref,            # [T, Nb, 3H]  hoisted layer-0 projection (incl. b_ih0)
         h0_ref,               # [L, Nb, H]   initial GRU state
         w_hh0_ref, b_hh0_ref  # [H, 3H], [1, 3H]
         ) = refs[:4]
        upper = refs[4:n_in]                      # (w_ih, b_ih, w_hh, b_hh) per layer >0
        xseq_ref, h_out_ref = refs[n_in], refs[n_in + 1]
        h_scr = refs[n_in + 2]                    # [L, Nb, H] running hidden state

        blk = pl.program_id(0)

        # --- init (first block only): load the initial state into scratch ---
        @pl.when(blk == 0)
        def _init():
            h_scr[...] = h0_ref[...].astype(jnp.float32)

        def gru_gates(gi, gh, h_prev):
            # PyTorch GRU semantics, gate order (r, z, n), fused along the lane axis.
            # n-gate uses r * (W_hn h + b_hn): b_hh stays on the recurrent side.
            r = jax.nn.sigmoid(gi[:, :H] + gh[:, :H])
            z = jax.nn.sigmoid(gi[:, H:2 * H] + gh[:, H:2 * H])
            n = jnp.tanh(gi[:, 2 * H:] + r * gh[:, 2 * H:])
            return (1.0 - z) * n + z * h_prev

        def step(t, hs):
            if mask_tail:
                valid = (blk * T + t) < Ns

            # layer 0: input projection already hoisted; only the recurrent matmul.
            h_prev = hs[0]
            gi = xproj_ref[t].astype(jnp.float32)
            gh = (jnp.dot(h_prev, w_hh0_ref[...], preferred_element_type=jnp.float32)
                  + b_hh0_ref[...])
            h_new = gru_gates(gi, gh, h_prev)
            if mask_tail:
                h_new = jnp.where(valid, h_new, h_prev)
            new_hs = [h_new]
            x = h_new

            # layers 1..L-1: fused-gate matmuls (2 per layer), weights streamed from VMEM.
            for l in range(1, L):
                w_ih_ref, b_ih_ref, w_hh_ref, b_hh_ref = upper[4 * (l - 1):4 * l]
                h_prev = hs[l]
                gi = (jnp.dot(x, w_ih_ref[...], preferred_element_type=jnp.float32)
                      + b_ih_ref[...])
                gh = (jnp.dot(h_prev, w_hh_ref[...], preferred_element_type=jnp.float32)
                      + b_hh_ref[...])
                h_new = gru_gates(gi, gh, h_prev)
                if mask_tail:
                    h_new = jnp.where(valid, h_new, h_prev)
                new_hs.append(h_new)
                x = h_new

            # lane-dense per-step output: last-layer hidden, [Nb, H]
            xseq_ref[t] = x
            return tuple(new_hs)

        carry0 = tuple(h_scr[l] for l in range(L))
        final = lax.fori_loop(0, T, step, carry0, unroll=unroll)

        # flush the carried state to scratch once per block (not per step)
        for l in range(L):
            h_scr[l] = final[l]

        # --- write the final GRU state once, on the last block only ---
        @pl.when(blk == pl.num_programs(0) - 1)
        def _finalize():
            h_out_ref[...] = h_scr[...].astype(h_out_ref.dtype)

    return kernel


def two_step_network_forward(data, metadata, state, params, n_layers,
                             time_block=128, xproj_dtype=jnp.float32):
    """data: [Nb, Ns, Din], metadata: [Nb, Dm], state: [n_layers, Nb, H]."""
    Nb, Ns, Din = data.shape
    H = state.shape[-1]

    # v6e can profitably use time_block up to ~256-512; v7x should keep the
    # double-buffered xproj tile well under its 64 MiB VMEM (halve T or use bf16 xproj).
    T = int(min(time_block, Ns))
    num_blocks = -(-Ns // T)
    Ns_pad = num_blocks * T
    mask_tail = Ns_pad != Ns
    unroll = int(min(T, 8))   # partial unroll of the time loop

    w_ih0, w_hh0, b_ih0, b_hh0 = params["layers"][0]

    # Normalization + hoisted layer-0 input projection: one big matmul over all rows,
    # produced directly time-major (no separate HBM transpose pass); pad the narrow
    # Din-wide input, not the 3H-wide projection.
    x_norm = (data - params["d_mean"]) * params["d_inv_std"]            # [Nb, Ns, Din]
    if mask_tail:
        x_norm = jnp.pad(x_norm, ((0, 0), (0, Ns_pad - Ns), (0, 0)))
    xproj = (jnp.einsum("bti,ig->tbg", x_norm, w_ih0) + b_ih0).astype(xproj_dtype)

    def const_spec(shape):
        rank = len(shape)
        # NOTE: add pipeline_mode=pl.Buffered(1) at production H to drop the second
        # (unused) weight buffer; left default here (weights are tiny at test sizes).
        return pl.BlockSpec(shape, lambda b, _r=rank: (0,) * _r)

    in_specs = [
        pl.BlockSpec((T, Nb, 3 * H), lambda b: (b, 0, 0)),   # per-block layer-0 projection
        const_spec((n_layers, Nb, H)),                       # initial state
        const_spec((H, 3 * H)), const_spec((1, 3 * H)),      # layer-0 W_hh, b_hh
    ]
    inputs = [xproj, state, w_hh0, b_hh0]
    for l in range(1, n_layers):
        w_ih, w_hh, b_ih, b_hh = params["layers"][l]
        in_specs += [const_spec((H, 3 * H)), const_spec((1, 3 * H)),
                     const_spec((H, 3 * H)), const_spec((1, 3 * H))]
        inputs += [w_ih, b_ih, w_hh, b_hh]

    out_specs = [
        pl.BlockSpec((T, Nb, H), lambda b: (b, 0, 0)),          # per-block hidden sequence
        pl.BlockSpec((n_layers, Nb, H), lambda b: (0, 0, 0)),   # final GRU state
    ]
    out_shape = (
        jax.ShapeDtypeStruct((Ns_pad, Nb, H), jnp.float32),
        jax.ShapeDtypeStruct((n_layers, Nb, H), jnp.float32),
    )
    scratch_shapes = [pltpu.VMEM((n_layers, Nb, H), jnp.float32)]   # running hidden state

    # Explicit VMEM budget: 2x (xproj tile + out tile) + 2x constants + state, with
    # headroom; clamped to [32 MiB, 64 MiB] so it is valid on v5e / v6e / v7x alike.
    xproj_tile = T * Nb * 3 * H * np.dtype(xproj_dtype).itemsize
    xseq_tile = T * Nb * H * 4
    const_bytes = sum(int(np.prod(a.shape)) * 4 for a in inputs[1:])
    state_bytes = 3 * n_layers * Nb * H * 4
    est = 2 * (xproj_tile + xseq_tile) + 2 * const_bytes + state_bytes
    vmem_limit = int(min(max(int(est * 1.3) + (2 << 20), 32 << 20), 64 << 20))

    xseq_tm, h_out = pl.pallas_call(
        _make_kernel(n_layers, T, H, Ns, mask_tail, unroll),
        out_shape=out_shape,
        grid_spec=pltpu.PrefetchScalarGridSpec(
            num_scalar_prefetch=0,
            grid=(num_blocks,),
            in_specs=in_specs,
            out_specs=out_specs,
            scratch_shapes=scratch_shapes,
        ),
        compiler_params=pltpu.CompilerParams(
            dimension_semantics=("arbitrary",),     # sequential recurrence across blocks
            vmem_limit_bytes=vmem_limit,
        ),
    )(*inputs)

    # Heads + metadata branch (time-invariant) as lane-dense XLA matmuls in the wrapper:
    # out[..., 0] = RainHead, out[..., 1] = WetDryHead (split-weight equivalent of the
    # concat([gru_out, tiled_meta]) @ head formulation).
    x_seq = xseq_tm[:Ns]                                               # [Ns, Nb, H]
    m_norm = (metadata - params["m_mean"]) * params["m_inv_std"]
    mf = jax.nn.relu(m_norm @ params["fc_w"] + params["fc_b"])         # [Nb, Fm]
    meta_head = mf @ params["head_w_m"] + params["head_b"]             # [Nb, 2]
    out = jnp.einsum("tbh,hk->btk", x_seq, params["head_w_x"]) + meta_head[:, None, :]
    return out, h_out


def init_params(key, n_layers, Din, Dm, H, Fm):
    ks = jax.random.split(key, 9)
    u = lambda k, shape, s=0.2: jax.random.uniform(k, shape, jnp.float32, -s, s)
    params = {
        "d_mean": u(ks[0], (1, Din)),
        "d_inv_std": 1.0 / (1.0 + jnp.abs(u(ks[1], (1, Din)))),
        "m_mean": u(ks[2], (1, Dm)),
        "m_inv_std": 1.0 / (1.0 + jnp.abs(u(ks[3], (1, Dm)))),
        "fc_w": u(ks[4], (Dm, Fm)),
        "fc_b": u(ks[5], (1, Fm)),
        "head_w_x": u(ks[6], (H, 2)),    # rain / wet-dry head weights on GRU features
        "head_w_m": u(ks[7], (Fm, 2)),   # rain / wet-dry head weights on metadata features
        "head_b": u(ks[8], (1, 2)),
        "layers": [],
    }
    for l in range(n_layers):
        in_size = Din if l == 0 else H
        lk = jax.random.split(jax.random.fold_in(key, 100 + l), 4)
        params["layers"].append((
            u(lk[0], (in_size, 3 * H)),  # W_ih, gate-concat (r,z,n) along last axis
            u(lk[1], (H, 3 * H)),        # W_hh
            u(lk[2], (1, 3 * H)),        # b_ih
            u(lk[3], (1, 3 * H)),        # b_hh
        ))
    return params


def reference_forward(data, metadata, state, params, n_layers):
    """Pure-JAX reference with identical semantics (PyTorch GRU gate order r,z,n)."""
    Nb, Ns, Din = data.shape
    H = state.shape[-1]
    x_all = (data - params["d_mean"]) * params["d_inv_std"]
    m = (metadata - params["m_mean"]) * params["m_inv_std"]
    mf = jax.nn.relu(m @ params["fc_w"] + params["fc_b"])
    h = [state[l] for l in range(n_layers)]
    outs = []
    for t in range(Ns):
        x = x_all[:, t, :]
        for l in range(n_layers):
            w_ih, w_hh, b_ih, b_hh = params["layers"][l]
            gi = x @ w_ih + b_ih
            gh = h[l] @ w_hh + b_hh
            r = jax.nn.sigmoid(gi[:, :H] + gh[:, :H])
            z = jax.nn.sigmoid(gi[:, H:2 * H] + gh[:, H:2 * H])
            n = jnp.tanh(gi[:, 2 * H:] + r * gh[:, 2 * H:])
            hn = (1.0 - z) * n + z * h[l]
            h[l] = hn
            x = hn
        heads = x @ params["head_w_x"] + mf @ params["head_w_m"] + params["head_b"]
        outs.append(heads)
    return jnp.stack(outs, axis=1), jnp.stack(h, axis=0)


if __name__ == "__main__":
    # Small shapes consistent with the module's forward signature.
    Nb, Ns = 2, 8                 # batch, sequence length
    Din, Dm = 4, 4                # rnn_input_size, metadata_input_size
    H, Fm = 32, 32                # rnn_n_features, metadata_n_features
    n_layers = 2

    key = jax.random.PRNGKey(0)
    k_data, k_meta, k_par = jax.random.split(key, 3)
    data = jax.random.normal(k_data, (Nb, Ns, Din), jnp.float32)
    metadata = jax.random.normal(k_meta, (Nb, Dm), jnp.float32)
    state = jnp.zeros((n_layers, Nb, H), jnp.float32)   # == init_state(batch_size=Nb)
    params = init_params(k_par, n_layers, Din, Dm, H, Fm)

    fwd = jax.jit(functools.partial(two_step_network_forward, n_layers=n_layers))
    out, new_state = fwd(data, metadata, state, params)
    jax.block_until_ready((out, new_state))

    ref_out, ref_state = reference_forward(data, metadata, state, params, n_layers)
    assert out.shape == (Nb, Ns, 2) and new_state.shape == (n_layers, Nb, H)
    np.testing.assert_allclose(np.asarray(out), np.asarray(ref_out), rtol=2e-3, atol=2e-3)
    np.testing.assert_allclose(np.asarray(new_state), np.asarray(ref_state),
                               rtol=2e-3, atol=2e-3)

    print("KERNEL_OK")
</pallas_src>

<mosaic_0001>
module attributes {stable_mosaic.version = 11 : i64} {
  func.func @kernel(%arg0: i32, %arg1: memref<8x2x96xf32, #tpu.memory_space<vmem>>, %arg2: memref<2x2x32xf32, #tpu.memory_space<vmem>>, %arg3: memref<32x96xf32, #tpu.memory_space<vmem>>, %arg4: memref<1x96xf32, #tpu.memory_space<vmem>>, %arg5: memref<32x96xf32, #tpu.memory_space<vmem>>, %arg6: memref<1x96xf32, #tpu.memory_space<vmem>>, %arg7: memref<32x96xf32, #tpu.memory_space<vmem>>, %arg8: memref<1x96xf32, #tpu.memory_space<vmem>>, %arg9: memref<8x2x32xf32, #tpu.memory_space<vmem>>, %arg10: memref<2x2x32xf32, #tpu.memory_space<vmem>>, %arg11: memref<2x2x32xf32, #tpu.memory_space<vmem>>) attributes {dimension_semantics = [#tpu.dimension_semantics<arbitrary>], iteration_bounds = array<i64: 1>, scalar_prefetch = 0 : i64, scratch_operands = 1 : i64, tpu.core_type = #tpu.core_type<tc>, window_params = [{transform_indices = @transform_0, window_bounds = array<i64: 8, 2, 96>}, {pipeline_mode = #tpu.pipeline_mode<synchronous>, transform_indices = @transform_1, window_bounds = array<i64: 2, 2, 32>}, {pipeline_mode = #tpu.pipeline_mode<synchronous>, transform_indices = @transform_2, window_bounds = array<i64: 32, 96>}, {pipeline_mode = #tpu.pipeline_mode<synchronous>, transform_indices = @transform_3, window_bounds = array<i64: 1, 96>}, {pipeline_mode = #tpu.pipeline_mode<synchronous>, transform_indices = @transform_4, window_bounds = array<i64: 32, 96>}, {pipeline_mode = #tpu.pipeline_mode<synchronous>, transform_indices = @transform_5, window_bounds = array<i64: 1, 96>}, {pipeline_mode = #tpu.pipeline_mode<synchronous>, transform_indices = @transform_6, window_bounds = array<i64: 32, 96>}, {pipeline_mode = #tpu.pipeline_mode<synchronous>, transform_indices = @transform_7, window_bounds = array<i64: 1, 96>}, {transform_indices = @transform_8, window_bounds = array<i64: 8, 2, 32>}, {pipeline_mode = #tpu.pipeline_mode<synchronous>, transform_indices = @transform_9, window_bounds = array<i64: 2, 2, 32>}]} {
    %c0_i32 = arith.constant 0 : i32
    %0 = arith.cmpi eq, %arg0, %c0_i32 : i32
    %1 = arith.extui %0 : i1 to i32
    %c0_i32_0 = arith.constant 0 : i32
    %2 = arith.cmpi ne, %1, %c0_i32_0 : i32
    scf.if %2 {
      %c0_213 = arith.constant 0 : index
      %c0_214 = arith.constant 0 : index
      %c0_215 = arith.constant 0 : index
      %608 = vector.load %arg2[%c0_213, %c0_214, %c0_215] : memref<2x2x32xf32, #tpu.memory_space<vmem>>, vector<2x2x32xf32>
      %c0_216 = arith.constant 0 : index
      %c0_217 = arith.constant 0 : index
      %c0_218 = arith.constant 0 : index
      %609 = vector.load %arg11[%c0_216, %c0_217, %c0_218] : memref<2x2x32xf32, #tpu.memory_space<vmem>>, vector<2x2x32xf32>
      tpu.vector_store %arg11[%c0_216, %c0_217, %c0_218], %608 {strides = array<i32>} : memref<2x2x32xf32, #tpu.memory_space<vmem>>, vector<2x2x32xf32>,
    } else {
    }
    %c0 = arith.constant 0 : index
    %c0_1 = arith.constant 0 : index
    %c0_2 = arith.constant 0 : index
    %3 = vector.load %arg11[%c0, %c0_1, %c0_2] : memref<2x2x32xf32, #tpu.memory_space<vmem>>, vector<1x2x32xf32>
    %4 = vector.shape_cast %3 : vector<1x2x32xf32> to vector<2x32xf32>
    %c1 = arith.constant 1 : index
    %c0_3 = arith.constant 0 : index
    %c0_4 = arith.constant 0 : index
    %5 = vector.load %arg11[%c1, %c0_3, %c0_4] : memref<2x2x32xf32, #tpu.memory_space<vmem>>, vector<1x2x32xf32>
    %6 = vector.shape_cast %5 : vector<1x2x32xf32> to vector<2x32xf32>
    %c0_i32_5 = arith.constant 0 : i32
    %7 = arith.index_cast %c0_i32_5 : i32 to index
    %c0_6 = arith.constant 0 : index
    %c0_7 = arith.constant 0 : index
    %8 = vector.load %arg1[%7, %c0_6, %c0_7] : memref<8x2x96xf32, #tpu.memory_space<vmem>>, vector<1x2x96xf32>
    %9 = vector.shape_cast %8 : vector<1x2x96xf32> to vector<2x96xf32>
    %c0_8 = arith.constant 0 : index
    %c0_9 = arith.constant 0 : index
    %10 = vector.load %arg3[%c0_8, %c0_9] : memref<32x96xf32, #tpu.memory_space<vmem>>, vector<32x96xf32>
    %cst = arith.constant dense<0.000000e+00> : vector<2x96xf32>
    %11 = tpu.matmul %4, %10, %cst {dimension_numbers = #tpu.dot_dimension_numbers<[1], [0], [0], [1], [0, 0, 1, 1], [], []>} : vector<2x32xf32>, vector<32x96xf32>, vector<2x96xf32> -> vector<2x96xf32>
    %c0_10 = arith.constant 0 : index
    %c0_11 = arith.constant 0 : index
    %12 = vector.load %arg4[%c0_10, %c0_11] : memref<1x96xf32, #tpu.memory_space<vmem>>, vector<1x96xf32>
    %13 = vector.broadcast %12 : vector<1x96xf32> to vector<2x96xf32>
    %14 = arith.addf %11, %13 : vector<2x96xf32>
    %15 = vector.extract_strided_slice %9 {offsets = [0, 0], sizes = [2, 32], strides = [1, 1]} : vector<2x96xf32> to vector<2x32xf32>
    %16 = vector.extract_strided_slice %14 {offsets = [0, 0], sizes = [2, 32], strides = [1, 1]} : vector<2x96xf32> to vector<2x32xf32>
    %17 = arith.addf %15, %16 : vector<2x32xf32>
    %18 = arith.negf %17 : vector<2x32xf32>
    %19 = math.exp %18 : vector<2x32xf32>
    %cst_12 = arith.constant 1.000000e+00 : f32
    %20 = vector.broadcast %cst_12 : f32 to vector<2x32xf32>
    %21 = arith.addf %20, %19 : vector<2x32xf32>
    %22 = arith.divf %20, %21 : vector<2x32xf32>
    %23 = vector.extract_strided_slice %9 {offsets = [0, 32], sizes = [2, 32], strides = [1, 1]} : vector<2x96xf32> to vector<2x32xf32>
    %24 = vector.extract_strided_slice %14 {offsets = [0, 32], sizes = [2, 32], strides = [1, 1]} : vector<2x96xf32> to vector<2x32xf32>
    %25 = arith.addf %23, %24 : vector<2x32xf32>
    %26 = arith.negf %25 : vector<2x32xf32>
    %27 = math.exp %26 : vector<2x32xf32>
    %cst_13 = arith.constant 1.000000e+00 : f32
    %28 = vector.broadcast %cst_13 : f32 to vector<2x32xf32>
    %29 = arith.addf %28, %27 : vector<2x32xf32>
    %30 = arith.divf %28, %29 : vector<2x32xf32>
    %31 = vector.extract_strided_slice %9 {offsets = [0, 64], sizes = [2, 32], strides = [1, 1]} : vector<2x96xf32> to vector<2x32xf32>
    %32 = vector.extract_strided_slice %14 {offsets = [0, 64], sizes = [2, 32], strides = [1, 1]} : vector<2x96xf32> to vector<2x32xf32>
    %33 = arith.mulf %22, %32 : vector<2x32xf32>
    %34 = arith.addf %31, %33 : vector<2x32xf32>
    %35 = math.tanh %34 : vector<2x32xf32>
    %cst_14 = arith.constant 1.000000e+00 : f32
    %36 = vector.broadcast %cst_14 : f32 to vector<2x32xf32>
    %37 = arith.subf %36, %30 : vector<2x32xf32>
    %38 = arith.mulf %37, %35 : vector<2x32xf32>
    %39 = arith.mulf %30, %4 : vector<2x32xf32>
    %40 = arith.addf %38, %39 : vector<2x32xf32>
    %c0_15 = arith.constant 0 : index
    %c0_16 = arith.constant 0 : index
    %41 = vector.load %arg5[%c0_15, %c0_16] : memref<32x96xf32, #tpu.memory_space<vmem>>, vector<32x96xf32>
    %cst_17 = arith.constant dense<0.000000e+00> : vector<2x96xf32>
    %42 = tpu.matmul %40, %41, %cst_17 {dimension_numbers = #tpu.dot_dimension_numbers<[1], [0], [0], [1], [0, 0, 1, 1], [], []>} : vector<2x32xf32>, vector<32x96xf32>, vector<2x96xf32> -> vector<2x96xf32>
    %c0_18 = arith.constant 0 : index
    %c0_19 = arith.constant 0 : index
    %43 = vector.load %arg6[%c0_18, %c0_19] : memref<1x96xf32, #tpu.memory_space<vmem>>, vector<1x96xf32>
    %44 = vector.broadcast %43 : vector<1x96xf32> to vector<2x96xf32>
    %45 = arith.addf %42, %44 : vector<2x96xf32>
    %c0_20 = arith.constant 0 : index
    %c0_21 = arith.constant 0 : index
    %46 = vector.load %arg7[%c0_20, %c0_21] : memref<32x96xf32, #tpu.memory_space<vmem>>, vector<32x96xf32>
    %cst_22 = arith.constant dense<0.000000e+00> : vector<2x96xf32>
    %47 = tpu.matmul %6, %46, %cst_22 {dimension_numbers = #tpu.dot_dimension_numbers<[1], [0], [0], [1], [0, 0, 1, 1], [], []>} : vector<2x32xf32>, vector<32x96xf32>, vector<2x96xf32> -> vector<2x96xf32>
    %c0_23 = arith.constant 0 : index
    %c0_24 = arith.constant 0 : index
    %48 = vector.load %arg8[%c0_23, %c0_24] : memref<1x96xf32, #tpu.memory_space<vmem>>, vector<1x96xf32>
    %49 = vector.broadcast %48 : vector<1x96xf32> to vector<2x96xf32>
    %50 = arith.addf %47, %49 : vector<2x96xf32>
    %51 = vector.extract_strided_slice %45 {offsets = [0, 0], sizes = [2, 32], strides = [1, 1]} : vector<2x96xf32> to vector<2x32xf32>
    %52 = vector.extract_strided_slice %50 {offsets = [0, 0], sizes = [2, 32], strides = [1, 1]} : vector<2x96xf32> to vector<2x32xf32>
    %53 = arith.addf %51, %52 : vector<2x32xf32>
    %54 = arith.negf %53 : vector<2x32xf32>
    %55 = math.exp %54 : vector<2x32xf32>
    %cst_25 = arith.constant 1.000000e+00 : f32
    %56 = vector.broadcast %cst_25 : f32 to vector<2x32xf32>
    %57 = arith.addf %56, %55 : vector<2x32xf32>
    %58 = arith.divf %56, %57 : vector<2x32xf32>
    %59 = vector.extract_strided_slice %45 {offsets = [0, 32], sizes = [2, 32], strides = [1, 1]} : vector<2x96xf32> to vector<2x32xf32>
    %60 = vector.extract_strided_slice %50 {offsets = [0, 32], sizes = [2, 32], strides = [1, 1]} : vector<2x96xf32> to vector<2x32xf32>
    %61 = arith.addf %59, %60 : vector<2x32xf32>
    %62 = arith.negf %61 : vector<2x32xf32>
    %63 = math.exp %62 : vector<2x32xf32>
    %cst_26 = arith.constant 1.000000e+00 : f32
    %64 = vector.broadcast %cst_26 : f32 to vector<2x32xf32>
    %65 = arith.addf %64, %63 : vector<2x32xf32>
    %66 = arith.divf %64, %65 : vector<2x32xf32>
    %67 = vector.extract_strided_slice %45 {offsets = [0, 64], sizes = [2, 32], strides = [1, 1]} : vector<2x96xf32> to vector<2x32xf32>
    %68 = vector.extract_strided_slice %50 {offsets = [0, 64], sizes = [2, 32], strides = [1, 1]} : vector<2x96xf32> to vector<2x32xf32>
    %69 = arith.mulf %58, %68 : vector<2x32xf32>
    %70 = arith.addf %67, %69 : vector<2x32xf32>
    %71 = math.tanh %70 : vector<2x32xf32>
    %cst_27 = arith.constant 1.000000e+00 : f32
    %72 = vector.broadcast %cst_27 : f32 to vector<2x32xf32>
    %73 = arith.subf %72, %66 : vector<2x32xf32>
    %74 = arith.mulf %73, %71 : vector<2x32xf32>
    %75 = arith.mulf %66, %6 : vector<2x32xf32>
    %76 = arith.addf %74, %75 : vector<2x32xf32>
    %77 = arith.index_cast %c0_i32_5 : i32 to index
    %c0_28 = arith.constant 0 : index
    %c0_29 = arith.constant 0 : index
    %78 = vector.load %arg9[%77, %c0_28, %c0_29] : memref<8x2x32xf32, #tpu.memory_space<vmem>>, vector<1x2x32xf32>
    %79 = vector.shape_cast %78 : vector<1x2x32xf32> to vector<2x32xf32>
    %80 = vector.shape_cast %76 : vector<2x32xf32> to vector<1x2x32xf32>
    tpu.vector_store %arg9[%77, %c0_28, %c0_29], %80 {strides = array<i32>} : memref<8x2x32xf32, #tpu.memory_space<vmem>>, vector<1x2x32xf32>,
    %c1_i32 = arith.constant 1 : i32
    %81 = arith.index_cast %c1_i32 : i32 to index
    %c0_30 = arith.constant 0 : index
    %c0_31 = arith.constant 0 : index
    %82 = vector.load %arg1[%81, %c0_30, %c0_31] : memref<8x2x96xf32, #tpu.memory_space<vmem>>, vector<1x2x96xf32>
    %83 = vector.shape_cast %82 : vector<1x2x96xf32> to vector<2x96xf32>
    %c0_32 = arith.constant 0 : index
    %c0_33 = arith.constant 0 : index
    %84 = vector.load %arg3[%c0_32, %c0_33] : memref<32x96xf32, #tpu.memory_space<vmem>>, vector<32x96xf32>
    %cst_34 = arith.constant dense<0.000000e+00> : vector<2x96xf32>
    %85 = tpu.matmul %40, %84, %cst_34 {dimension_numbers = #tpu.dot_dimension_numbers<[1], [0], [0], [1], [0, 0, 1, 1], [], []>} : vector<2x32xf32>, vector<32x96xf32>, vector<2x96xf32> -> vector<2x96xf32>
    %c0_35 = arith.constant 0 : index
    %c0_36 = arith.constant 0 : index
    %86 = vector.load %arg4[%c0_35, %c0_36] : memref<1x96xf32, #tpu.memory_space<vmem>>, vector<1x96xf32>
    %87 = vector.broadcast %86 : vector<1x96xf32> to vector<2x96xf32>
    %88 = arith.addf %85, %87 : vector<2x96xf32>
    %89 = vector.extract_strided_slice %83 {offsets = [0, 0], sizes = [2, 32], strides = [1, 1]} : vector<2x96xf32> to vector<2x32xf32>
    %90 = vector.extract_strided_slice %88 {offsets = [0, 0], sizes = [2, 32], strides = [1, 1]} : vector<2x96xf32> to vector<2x32xf32>
    %91 = arith.addf %89, %90 : vector<2x32xf32>
    %92 = arith.negf %91 : vector<2x32xf32>
    %93 = math.exp %92 : vector<2x32xf32>
    %cst_37 = arith.constant 1.000000e+00 : f32
    %94 = vector.broadcast %cst_37 : f32 to vector<2x32xf32>
    %95 = arith.addf %94, %93 : vector<2x32xf32>
    %96 = arith.divf %94, %95 : vector<2x32xf32>
    %97 = vector.extract_strided_slice %83 {offsets = [0, 32], sizes = [2, 32], strides = [1, 1]} : vector<2x96xf32> to vector<2x32xf32>
    %98 = vector.extract_strided_slice %88 {offsets = [0, 32], sizes = [2, 32], strides = [1, 1]} : vector<2x96xf32> to vector<2x32xf32>
    %99 = arith.addf %97, %98 : vector<2x32xf32>
    %100 = arith.negf %99 : vector<2x32xf32>
    %101 = math.exp %100 : vector<2x32xf32>
    %cst_38 = arith.constant 1.000000e+00 : f32
    %102 = vector.broadcast %cst_38 : f32 to vector<2x32xf32>
    %103 = arith.addf %102, %101 : vector<2x32xf32>
    %104 = arith.divf %102, %103 : vector<2x32xf32>
    %105 = vector.extract_strided_slice %83 {offsets = [0, 64], sizes = [2, 32], strides = [1, 1]} : vector<2x96xf32> to vector<2x32xf32>
    %106 = vector.extract_strided_slice %88 {offsets = [0, 64], sizes = [2, 32], strides = [1, 1]} : vector<2x96xf32> to vector<2x32xf32>
    %107 = arith.mulf %96, %106 : vector<2x32xf32>
    %108 = arith.addf %105, %107 : vector<2x32xf32>
    %109 = math.tanh %108 : vector<2x32xf32>
    %cst_39 = arith.constant 1.000000e+00 : f32
    %110 = vector.broadcast %cst_39 : f32 to vector<2x32xf32>
    %111 = arith.subf %110, %104 : vector<2x32xf32>
    %112 = arith.mulf %111, %109 : vector<2x32xf32>
    %113 = arith.mulf %104, %40 : vector<2x32xf32>
    %114 = arith.addf %112, %113 : vector<2x32xf32>
    %c0_40 = arith.constant 0 : index
    %c0_41 = arith.constant 0 : index
    %115 = vector.load %arg5[%c0_40, %c0_41] : memref<32x96xf32, #tpu.memory_space<vmem>>, vector<32x96xf32>
    %cst_42 = arith.constant dense<0.000000e+00> : vector<2x96xf32>
    %116 = tpu.matmul %114, %115, %cst_42 {dimension_numbers = #tpu.dot_dimension_numbers<[1], [0], [0], [1], [0, 0, 1, 1], [], []>} : vector<2x32xf32>, vector<32x96xf32>, vector<2x96xf32> -> vector<2x96xf32>
    %c0_43 = arith.constant 0 : index
    %c0_44 = arith.constant 0 : index
    %117 = vector.load %arg6[%c0_43, %c0_44] : memref<1x96xf32, #tpu.memory_space<vmem>>, vector<1x96xf32>
    %118 = vector.broadcast %117 : vector<1x96xf32> to vector<2x96xf32>
    %119 = arith.addf %116, %118 : vector<2x96xf32>
    %c0_45 = arith.constant 0 : index
    %c0_46 = arith.constant 0 : index
    %120 = vector.load %arg7[%c0_45, %c0_46] : memref<32x96xf32, #tpu.memory_space<vmem>>, vector<32x96xf32>
    %cst_47 = arith.constant dense<0.000000e+00> : vector<2x96xf32>
    %121 = tpu.matmul %76, %120, %cst_47 {dimension_numbers = #tpu.dot_dimension_numbers<[1], [0], [0], [1], [0, 0, 1, 1], [], []>} : vector<2x32xf32>, vector<32x96xf32>, vector<2x96xf32> -> vector<2x96xf32>
    %c0_48 = arith.constant 0 : index
    %c0_49 = arith.constant 0 : index
    %122 = vector.load %arg8[%c0_48, %c0_49] : memref<1x96xf32, #tpu.memory_space<vmem>>, vector<1x96xf32>
    %123 = vector.broadcast %122 : vector<1x96xf32> to vector<2x96xf32>
    %124 = arith.addf %121, %123 : vector<2x96xf32>
    %125 = vector.extract_strided_slice %119 {offsets = [0, 0], sizes = [2, 32], strides = [1, 1]} : vector<2x96xf32> to vector<2x32xf32>
    %126 = vector.extract_strided_slice %124 {offsets = [0, 0], sizes = [2, 32], strides = [1, 1]} : vector<2x96xf32> to vector<2x32xf32>
    %127 = arith.addf %125, %126 : vector<2x32xf32>
    %128 = arith.negf %127 : vector<2x32xf32>
    %129 = math.exp %128 : vector<2x32xf32>
    %cst_50 = arith.constant 1.000000e+00 : f32
    %130 = vector.broadcast %cst_50 : f32 to vector<2x32xf32>
    %131 = arith.addf %130, %129 : vector<2x32xf32>
    %132 = arith.divf %130, %131 : vector<2x32xf32>
    %133 = vector.extract_strided_slice %119 {offsets = [0, 32], sizes = [2, 32], strides = [1, 1]} : vector<2x96xf32> to vector<2x32xf32>
    %134 = vector.extract_strided_slice %124 {offsets = [0, 32], sizes = [2, 32], strides = [1, 1]} : vector<2x96xf32> to vector<2x32xf32>
    %135 = arith.addf %133, %134 : vector<2x32xf32>
    %136 = arith.negf %135 : vector<2x32xf32>
    %137 = math.exp %136 : vector<2x32xf32>
    %cst_51 = arith.constant 1.000000e+00 : f32
    %138 = vector.broadcast %cst_51 : f32 to vector<2x32xf32>
    %139 = arith.addf %138, %137 : vector<2x32xf32>
    %140 = arith.divf %138, %139 : vector<2x32xf32>
    %141 = vector.extract_strided_slice %119 {offsets = [0, 64], sizes = [2, 32], strides = [1, 1]} : vector<2x96xf32> to vector<2x32xf32>
    %142 = vector.extract_strided_slice %124 {offsets = [0, 64], sizes = [2, 32], strides = [1, 1]} : vector<2x96xf32> to vector<2x32xf32>
    %143 = arith.mulf %132, %142 : vector<2x32xf32>
    %144 = arith.addf %141, %143 : vector<2x32xf32>
    %145 = math.tanh %144 : vector<2x32xf32>
    %cst_52 = arith.constant 1.000000e+00 : f32
    %146 = vector.broadcast %cst_52 : f32 to vector<2x32xf32>
    %147 = arith.subf %146, %140 : vector<2x32xf32>
    %148 = arith.mulf %147, %145 : vector<2x32xf32>
    %149 = arith.mulf %140, %76 : vector<2x32xf32>
    %150 = arith.addf %148, %149 : vector<2x32xf32>
    %151 = arith.index_cast %c1_i32 : i32 to index
    %c0_53 = arith.constant 0 : index
    %c0_54 = arith.constant 0 : index
    %152 = vector.load %arg9[%151, %c0_53, %c0_54] : memref<8x2x32xf32, #tpu.memory_space<vmem>>, vector<1x2x32xf32>
    %153 = vector.shape_cast %152 : vector<1x2x32xf32> to vector<2x32xf32>
    %154 = vector.shape_cast %150 : vector<2x32xf32> to vector<1x2x32xf32>
    tpu.vector_store %arg9[%151, %c0_53, %c0_54], %154 {strides = array<i32>} : memref<8x2x32xf32, #tpu.memory_space<vmem>>, vector<1x2x32xf32>,
    %c2_i32 = arith.constant 2 : i32
    %155 = arith.index_cast %c2_i32 : i32 to index
    %c0_55 = arith.constant 0 : index
    %c0_56 = arith.constant 0 : index
    %156 = vector.load %arg1[%155, %c0_55, %c0_56] : memref<8x2x96xf32, #tpu.memory_space<vmem>>, vector<1x2x96xf32>
    %157 = vector.shape_cast %156 : vector<1x2x96xf32> to vector<2x96xf32>
    %c0_57 = arith.constant 0 : index
    %c0_58 = arith.constant 0 : index
    %158 = vector.load %arg3[%c0_57, %c0_58] : memref<32x96xf32, #tpu.memory_space<vmem>>, vector<32x96xf32>
    %cst_59 = arith.constant dense<0.000000e+00> : vector<2x96xf32>
    %159 = tpu.matmul %114, %158, %cst_59 {dimension_numbers = #tpu.dot_dimension_numbers<[1], [0], [0], [1], [0, 0, 1, 1], [], []>} : vector<2x32xf32>, vector<32x96xf32>, vector<2x96xf32> -> vector<2x96xf32>
    %c0_60 = arith.constant 0 : index
    %c0_61 = arith.constant 0 : index
    %160 = vector.load %arg4[%c0_60, %c0_61] : memref<1x96xf32, #tpu.memory_space<vmem>>, vector<1x96xf32>
    %161 = vector.broadcast %160 : vector<1x96xf32> to vector<2x96xf32>
    %162 = arith.addf %159, %161 : vector<2x96xf32>
    %163 = vector.extract_strided_slice %157 {offsets = [0, 0], sizes = [2, 32], strides = [1, 1]} : vector<2x96xf32> to vector<2x32xf32>
    %164 = vector.extract_strided_slice %162 {offsets = [0, 0], sizes = [2, 32], strides = [1, 1]} : vector<2x96xf32> to vector<2x32xf32>
    %165 = arith.addf %163, %164 : vector<2x32xf32>
    %166 = arith.negf %165 : vector<2x32xf32>
    %167 = math.exp %166 : vector<2x32xf32>
    %cst_62 = arith.constant 1.000000e+00 : f32
    %168 = vector.broadcast %cst_62 : f32 to vector<2x32xf32>
    %169 = arith.addf %168, %167 : vector<2x32xf32>
    %170 = arith.divf %168, %169 : vector<2x32xf32>
    %171 = vector.extract_strided_slice %157 {offsets = [0, 32], sizes = [2, 32], strides = [1, 1]} : vector<2x96xf32> to vector<2x32xf32>
    %172 = vector.extract_strided_slice %162 {offsets = [0, 32], sizes = [2, 32], strides = [1, 1]} : vector<2x96xf32> to vector<2x32xf32>
    %173 = arith.addf %171, %172 : vector<2x32xf32>
    %174 = arith.negf %173 : vector<2x32xf32>
    %175 = math.exp %174 : vector<2x32xf32>
    %cst_63 = arith.constant 1.000000e+00 : f32
    %176 = vector.broadcast %cst_63 : f32 to vector<2x32xf32>
    %177 = arith.addf %176, %175 : vector<2x32xf32>
    %178 = arith.divf %176, %177 : vector<2x32xf32>
    %179 = vector.extract_strided_slice %157 {offsets = [0, 64], sizes = [2, 32], strides = [1, 1]} : vector<2x96xf32> to vector<2x32xf32>
    %180 = vector.extract_strided_slice %162 {offsets = [0, 64], sizes = [2, 32], strides = [1, 1]} : vector<2x96xf32> to vector<2x32xf32>
    %181 = arith.mulf %170, %180 : vector<2x32xf32>
    %182 = arith.addf %179, %181 : vector<2x32xf32>
    %183 = math.tanh %182 : vector<2x32xf32>
    %cst_64 = arith.constant 1.000000e+00 : f32
    %184 = vector.broadcast %cst_64 : f32 to vector<2x32xf32>
    %185 = arith.subf %184, %178 : vector<2x32xf32>
    %186 = arith.mulf %185, %183 : vector<2x32xf32>
    %187 = arith.mulf %178, %114 : vector<2x32xf32>
    %188 = arith.addf %186, %187 : vector<2x32xf32>
    %c0_65 = arith.constant 0 : index
    %c0_66 = arith.constant 0 : index
    %189 = vector.load %arg5[%c0_65, %c0_66] : memref<32x96xf32, #tpu.memory_space<vmem>>, vector<32x96xf32>
    %cst_67 = arith.constant dense<0.000000e+00> : vector<2x96xf32>
    %190 = tpu.matmul %188, %189, %cst_67 {dimension_numbers = #tpu.dot_dimension_numbers<[1], [0], [0], [1], [0, 0, 1, 1], [], []>} : vector<2x32xf32>, vector<32x96xf32>, vector<2x96xf32> -> vector<2x96xf32>
    %c0_68 = arith.constant 0 : index
    %c0_69 = arith.constant 0 : index
    %191 = vector.load %arg6[%c0_68, %c0_69] : memref<1x96xf32, #tpu.memory_space<vmem>>, vector<1x96xf32>
    %192 = vector.broadcast %191 : vector<1x96xf32> to vector<2x96xf32>
    %193 = arith.addf %190, %192 : vector<2x96xf32>
    %c0_70 = arith.constant 0 : index
    %c0_71 = arith.constant 0 : index
    %194 = vector.load %arg7[%c0_70, %c0_71] : memref<32x96xf32, #tpu.memory_space<vmem>>, vector<32x96xf32>
    %cst_72 = arith.constant dense<0.000000e+00> : vector<2x96xf32>
    %195 = tpu.matmul %150, %194, %cst_72 {dimension_numbers = #tpu.dot_dimension_numbers<[1], [0], [0], [1], [0, 0, 1, 1], [], []>} : vector<2x32xf32>, vector<32x96xf32>, vector<2x96xf32> -> vector<2x96xf32>
    %c0_73 = arith.constant 0 : index
    %c0_74 = arith.constant 0 : index
    %196 = vector.load %arg8[%c0_73, %c0_74] : memref<1x96xf32, #tpu.memory_space<vmem>>, vector<1x96xf32>
    %197 = vector.broadcast %196 : vector<1x96xf32> to vector<2x96xf32>
    %198 = arith.addf %195, %197 : vector<2x96xf32>
    %199 = vector.extract_strided_slice %193 {offsets = [0, 0], sizes = [2, 32], strides = [1, 1]} : vector<2x96xf32> to vector<2x32xf32>
    %200 = vector.extract_strided_slice %198 {offsets = [0, 0], sizes = [2, 32], strides = [1, 1]} : vector<2x96xf32> to vector<2x32xf32>
    %201 = arith.addf %199, %200 : vector<2x32xf32>
    %202 = arith.negf %201 : vector<2x32xf32>
    %203 = math.exp %202 : vector<2x32xf32>
    %cst_75 = arith.constant 1.000000e+00 : f32
    %204 = vector.broadcast %cst_75 : f32 to vector<2x32xf32>
    %205 = arith.addf %204, %203 : vector<2x32xf32>
    %206 = arith.divf %204, %205 : vector<2x32xf32>
    %207 = vector.extract_strided_slice %193 {offsets = [0, 32], sizes = [2, 32], strides = [1, 1]} : vector<2x96xf32> to vector<2x32xf32>
    %208 = vector.extract_strided_slice %198 {offsets = [0, 32], sizes = [2, 32], strides = [1, 1]} : vector<2x96xf32> to vector<2x32xf32>
    %209 = arith.addf %207, %208 : vector<2x32xf32>
    %210 = arith.negf %209 : vector<2x32xf32>
    %211 = math.exp %210 : vector<2x32xf32>
    %cst_76 = arith.constant 1.000000e+00 : f32
    %212 = vector.broadcast %cst_76 : f32 to vector<2x32xf32>
    %213 = arith.addf %212, %211 : vector<2x32xf32>
    %214 = arith.divf %212, %213 : vector<2x32xf32>
    %215 = vector.extract_strided_slice %193 {offsets = [0, 64], sizes = [2, 32], strides = [1, 1]} : vector<2x96xf32> to vector<2x32xf32>
    %216 = vector.extract_strided_slice %198 {offsets = [0, 64], sizes = [2, 32], strides = [1, 1]} : vector<2x96xf32> to vector<2x32xf32>
    %217 = arith.mulf %206, %216 : vector<2x32xf32>
    %218 = arith.addf %215, %217 : vector<2x32xf32>
    %219 = math.tanh %218 : vector<2x32xf32>
    %cst_77 = arith.constant 1.000000e+00 : f32
    %220 = vector.broadcast %cst_77 : f32 to vector<2x32xf32>
    %221 = arith.subf %220, %214 : vector<2x32xf32>
    %222 = arith.mulf %221, %219 : vector<2x32xf32>
    %223 = arith.mulf %214, %150 : vector<2x32xf32>
    %224 = arith.addf %222, %223 : vector<2x32xf32>
    %225 = arith.index_cast %c2_i32 : i32 to index
    %c0_78 = arith.constant 0 : index
    %c0_79 = arith.constant 0 : index
    %226 = vector.load %arg9[%225, %c0_78, %c0_79] : memref<8x2x32xf32, #tpu.memory_space<vmem>>, vector<1x2x32xf32>
    %227 = vector.shape_cast %226 : vector<1x2x32xf32> to vector<2x32xf32>
    %228 = vector.shape_cast %224 : vector<2x32xf32> to vector<1x2x32xf32>
    tpu.vector_store %arg9[%225, %c0_78, %c0_79], %228 {strides = array<i32>} : memref<8x2x32xf32, #tpu.memory_space<vmem>>, vector<1x2x32xf32>,
    %c3_i32 = arith.constant 3 : i32
    %229 = arith.index_cast %c3_i32 : i32 to index
    %c0_80 = arith.constant 0 : index
    %c0_81 = arith.constant 0 : index
    %230 = vector.load %arg1[%229, %c0_80, %c0_81] : memref<8x2x96xf32, #tpu.memory_space<vmem>>, vector<1x2x96xf32>
    %231 = vector.shape_cast %230 : vector<1x2x96xf32> to vector<2x96xf32>
    %c0_82 = arith.constant 0 : index
    %c0_83 = arith.constant 0 : index
    %232 = vector.load %arg3[%c0_82, %c0_83] : memref<32x96xf32, #tpu.memory_space<vmem>>, vector<32x96xf32>
    %cst_84 = arith.constant dense<0.000000e+00> : vector<2x96xf32>
    %233 = tpu.matmul %188, %232, %cst_84 {dimension_numbers = #tpu.dot_dimension_numbers<[1], [0], [0], [1], [0, 0, 1, 1], [], []>} : vector<2x32xf32>, vector<32x96xf32>, vector<2x96xf32> -> vector<2x96xf32>
    %c0_85 = arith.constant 0 : index
    %c0_86 = arith.constant 0 : index
    %234 = vector.load %arg4[%c0_85, %c0_86] : memref<1x96xf32, #tpu.memory_space<vmem>>, vector<1x96xf32>
    %235 = vector.broadcast %234 : vector<1x96xf32> to vector<2x96xf32>
    %236 = arith.addf %233, %235 : vector<2x96xf32>
    %237 = vector.extract_strided_slice %231 {offsets = [0, 0], sizes = [2, 32], strides = [1, 1]} : vector<2x96xf32> to vector<2x32xf32>
    %238 = vector.extract_strided_slice %236 {offsets = [0, 0], sizes = [2, 32], strides = [1, 1]} : vector<2x96xf32> to vector<2x32xf32>
    %239 = arith.addf %237, %238 : vector<2x32xf32>
    %240 = arith.negf %239 : vector<2x32xf32>
    %241 = math.exp %240 : vector<2x32xf32>
    %cst_87 = arith.constant 1.000000e+00 : f32
    %242 = vector.broadcast %cst_87 : f32 to vector<2x32xf32>
    %243 = arith.addf %242, %241 : vector<2x32xf32>
    %244 = arith.divf %242, %243 : vector<2x32xf32>
    %245 = vector.extract_strided_slice %231 {offsets = [0, 32], sizes = [2, 32], strides = [1, 1]} : vector<2x96xf32> to vector<2x32xf32>
    %246 = vector.extract_strided_slice %236 {offsets = [0, 32], sizes = [2, 32], strides = [1, 1]} : vector<2x96xf32> to vector<2x32xf32>
    %247 = arith.addf %245, %246 : vector<2x32xf32>
    %248 = arith.negf %247 : vector<2x32xf32>
    %249 = math.exp %248 : vector<2x32xf32>
    %cst_88 = arith.constant 1.000000e+00 : f32
    %250 = vector.broadcast %cst_88 : f32 to vector<2x32xf32>
    %251 = arith.addf %250, %249 : vector<2x32xf32>
    %252 = arith.divf %250, %251 : vector<2x32xf32>
    %253 = vector.extract_strided_slice %231 {offsets = [0, 64], sizes = [2, 32], strides = [1, 1]} : vector<2x96xf32> to vector<2x32xf32>
    %254 = vector.extract_strided_slice %236 {offsets = [0, 64], sizes = [2, 32], strides = [1, 1]} : vector<2x96xf32> to vector<2x32xf32>
    %255 = arith.mulf %244, %254 : vector<2x32xf32>
    %256 = arith.addf %253, %255 : vector<2x32xf32>
    %257 = math.tanh %256 : vector<2x32xf32>
    %cst_89 = arith.constant 1.000000e+00 : f32
    %258 = vector.broadcast %cst_89 : f32 to vector<2x32xf32>
    %259 = arith.subf %258, %252 : vector<2x32xf32>
    %260 = arith.mulf %259, %257 : vector<2x32xf32>
    %261 = arith.mulf %252, %188 : vector<2x32xf32>
    %262 = arith.addf %260, %261 : vector<2x32xf32>
    %c0_90 = arith.constant 0 : index
    %c0_91 = arith.constant 0 : index
    %263 = vector.load %arg5[%c0_90, %c0_91] : memref<32x96xf32, #tpu.memory_space<vmem>>, vector<32x96xf32>
    %cst_92 = arith.constant dense<0.000000e+00> : vector<2x96xf32>
    %264 = tpu.matmul %262, %263, %cst_92 {dimension_numbers = #tpu.dot_dimension_numbers<[1], [0], [0], [1], [0, 0, 1, 1], [], []>} : vector<2x32xf32>, vector<32x96xf32>, vector<2x96xf32> -> vector<2x96xf32>
    %c0_93 = arith.constant 0 : index
    %c0_94 = arith.constant 0 : index
    %265 = vector.load %arg6[%c0_93, %c0_94] : memref<1x96xf32, #tpu.memory_space<vmem>>, vector<1x96xf32>
    %266 = vector.broadcast %265 : vector<1x96xf32> to vector<2x96xf32>
    %267 = arith.addf %264, %266 : vector<2x96xf32>
    %c0_95 = arith.constant 0 : index
    %c0_96 = arith.constant 0 : index
    %268 = vector.load %arg7[%c0_95, %c0_96] : memref<32x96xf32, #tpu.memory_space<vmem>>, vector<32x96xf32>
    %cst_97 = arith.constant dense<0.000000e+00> : vector<2x96xf32>
    %269 = tpu.matmul %224, %268, %cst_97 {dimension_numbers = #tpu.dot_dimension_numbers<[1], [0], [0], [1], [0, 0, 1, 1], [], []>} : vector<2x32xf32>, vector<32x96xf32>, vector<2x96xf32> -> vector<2x96xf32>
    %c0_98 = arith.constant 0 : index
    %c0_99 = arith.constant 0 : index
    %270 = vector.load %arg8[%c0_98, %c0_99] : memref<1x96xf32, #tpu.memory_space<vmem>>, vector<1x96xf32>
    %271 = vector.broadcast %270 : vector<1x96xf32> to vector<2x96xf32>
    %272 = arith.addf %269, %271 : vector<2x96xf32>
    %273 = vector.extract_strided_slice %267 {offsets = [0, 0], sizes = [2, 32], strides = [1, 1]} : vector<2x96xf32> to vector<2x32xf32>
    %274 = vector.extract_strided_slice %272 {offsets = [0, 0], sizes = [2, 32], strides = [1, 1]} : vector<2x96xf32> to vector<2x32xf32>
    %275 = arith.addf %273, %274 : vector<2x32xf32>
    %276 = arith.negf %275 : vector<2x32xf32>
    %277 = math.exp %276 : vector<2x32xf32>
    %cst_100 = arith.constant 1.000000e+00 : f32
    %278 = vector.broadcast %cst_100 : f32 to vector<2x32xf32>
    %279 = arith.addf %278, %277 : vector<2x32xf32>
    %280 = arith.divf %278, %279 : vector<2x32xf32>
    %281 = vector.extract_strided_slice %267 {offsets = [0, 32], sizes = [2, 32], strides = [1, 1]} : vector<2x96xf32> to vector<2x32xf32>
    %282 = vector.extract_strided_slice %272 {offsets = [0, 32], sizes = [2, 32], strides = [1, 1]} : vector<2x96xf32> to vector<2x32xf32>
    %283 = arith.addf %281, %282 : vector<2x32xf32>
    %284 = arith.negf %283 : vector<2x32xf32>
    %285 = math.exp %284 : vector<2x32xf32>
    %cst_101 = arith.constant 1.000000e+00 : f32
    %286 = vector.broadcast %cst_101 : f32 to vector<2x32xf32>
    %287 = arith.addf %286, %285 : vector<2x32xf32>
    %288 = arith.divf %286, %287 : vector<2x32xf32>
    %289 = vector.extract_strided_slice %267 {offsets = [0, 64], sizes = [2, 32], strides = [1, 1]} : vector<2x96xf32> to vector<2x32xf32>
    %290 = vector.extract_strided_slice %272 {offsets = [0, 64], sizes = [2, 32], strides = [1, 1]} : vector<2x96xf32> to vector<2x32xf32>
    %291 = arith.mulf %280, %290 : vector<2x32xf32>
    %292 = arith.addf %289, %291 : vector<2x32xf32>
    %293 = math.tanh %292 : vector<2x32xf32>
    %cst_102 = arith.constant 1.000000e+00 : f32
    %294 = vector.broadcast %cst_102 : f32 to vector<2x32xf32>
    %295 = arith.subf %294, %288 : vector<2x32xf32>
    %296 = arith.mulf %295, %293 : vector<2x32xf32>
    %297 = arith.mulf %288, %224 : vector<2x32xf32>
    %298 = arith.addf %296, %297 : vector<2x32xf32>
    %299 = arith.index_cast %c3_i32 : i32 to index
    %c0_103 = arith.constant 0 : index
    %c0_104 = arith.constant 0 : index
    %300 = vector.load %arg9[%299, %c0_103, %c0_104] : memref<8x2x32xf32, #tpu.memory_space<vmem>>, vector<1x2x32xf32>
    %301 = vector.shape_cast %300 : vector<1x2x32xf32> to vector<2x32xf32>
    %302 = vector.shape_cast %298 : vector<2x32xf32> to vector<1x2x32xf32>
    tpu.vector_store %arg9[%299, %c0_103, %c0_104], %302 {strides = array<i32>} : memref<8x2x32xf32, #tpu.memory_space<vmem>>, vector<1x2x32xf32>,
    %c4_i32 = arith.constant 4 : i32
    %303 = arith.index_cast %c4_i32 : i32 to index
    %c0_105 = arith.constant 0 : index
    %c0_106 = arith.constant 0 : index
    %304 = vector.load %arg1[%303, %c0_105, %c0_106] : memref<8x2x96xf32, #tpu.memory_space<vmem>>, vector<1x2x96xf32>
    %305 = vector.shape_cast %304 : vector<1x2x96xf32> to vector<2x96xf32>
    %c0_107 = arith.constant 0 : index
    %c0_108 = arith.constant 0 : index
    %306 = vector.load %arg3[%c0_107, %c0_108] : memref<32x96xf32, #tpu.memory_space<vmem>>, vector<32x96xf32>
    %cst_109 = arith.constant dense<0.000000e+00> : vector<2x96xf32>
    %307 = tpu.matmul %262, %306, %cst_109 {dimension_numbers = #tpu.dot_dimension_numbers<[1], [0], [0], [1], [0, 0, 1, 1], [], []>} : vector<2x32xf32>, vector<32x96xf32>, vector<2x96xf32> -> vector<2x96xf32>
    %c0_110 = arith.constant 0 : index
    %c0_111 = arith.constant 0 : index
    %308 = vector.load %arg4[%c0_110, %c0_111] : memref<1x96xf32, #tpu.memory_space<vmem>>, vector<1x96xf32>
    %309 = vector.broadcast %308 : vector<1x96xf32> to vector<2x96xf32>
    %310 = arith.addf %307, %309 : vector<2x96xf32>
    %311 = vector.extract_strided_slice %305 {offsets = [0, 0], sizes = [2, 32], strides = [1, 1]} : vector<2x96xf32> to vector<2x32xf32>
    %312 = vector.extract_strided_slice %310 {offsets = [0, 0], sizes = [2, 32], strides = [1, 1]} : vector<2x96xf32> to vector<2x32xf32>
    %313 = arith.addf %311, %312 : vector<2x32xf32>
    %314 = arith.negf %313 : vector<2x32xf32>
    %315 = math.exp %314 : vector<2x32xf32>
    %cst_112 = arith.constant 1.000000e+00 : f32
    %316 = vector.broadcast %cst_112 : f32 to vector<2x32xf32>
    %317 = arith.addf %316, %315 : vector<2x32xf32>
    %318 = arith.divf %316, %317 : vector<2x32xf32>
    %319 = vector.extract_strided_slice %305 {offsets = [0, 32], sizes = [2, 32], strides = [1, 1]} : vector<2x96xf32> to vector<2x32xf32>
    %320 = vector.extract_strided_slice %310 {offsets = [0, 32], sizes = [2, 32], strides = [1, 1]} : vector<2x96xf32> to vector<2x32xf32>
    %321 = arith.addf %319, %320 : vector<2x32xf32>
    %322 = arith.negf %321 : vector<2x32xf32>
    %323 = math.exp %322 : vector<2x32xf32>
    %cst_113 = arith.constant 1.000000e+00 : f32
    %324 = vector.broadcast %cst_113 : f32 to vector<2x32xf32>
    %325 = arith.addf %324, %323 : vector<2x32xf32>
    %326 = arith.divf %324, %325 : vector<2x32xf32>
    %327 = vector.extract_strided_slice %305 {offsets = [0, 64], sizes = [2, 32], strides = [1, 1]} : vector<2x96xf32> to vector<2x32xf32>
    %328 = vector.extract_strided_slice %310 {offsets = [0, 64], sizes = [2, 32], strides = [1, 1]} : vector<2x96xf32> to vector<2x32xf32>
    %329 = arith.mulf %318, %328 : vector<2x32xf32>
    %330 = arith.addf %327, %329 : vector<2x32xf32>
    %331 = math.tanh %330 : vector<2x32xf32>
    %cst_114 = arith.constant 1.000000e+00 : f32
    %332 = vector.broadcast %cst_114 : f32 to vector<2x32xf32>
    %333 = arith.subf %332, %326 : vector<2x32xf32>
    %334 = arith.mulf %333, %331 : vector<2x32xf32>
    %335 = arith.mulf %326, %262 : vector<2x32xf32>
    %336 = arith.addf %334, %335 : vector<2x32xf32>
    %c0_115 = arith.constant 0 : index
    %c0_116 = arith.constant 0 : index
    %337 = vector.load %arg5[%c0_115, %c0_116] : memref<32x96xf32, #tpu.memory_space<vmem>>, vector<32x96xf32>
    %cst_117 = arith.constant dense<0.000000e+00> : vector<2x96xf32>
    %338 = tpu.matmul %336, %337, %cst_117 {dimension_numbers = #tpu.dot_dimension_numbers<[1], [0], [0], [1], [0, 0, 1, 1], [], []>} : vector<2x32xf32>, vector<32x96xf32>, vector<2x96xf32> -> vector<2x96xf32>
    %c0_118 = arith.constant 0 : index
    %c0_119 = arith.constant 0 : index
    %339 = vector.load %arg6[%c0_118, %c0_119] : memref<1x96xf32, #tpu.memory_space<vmem>>, vector<1x96xf32>
    %340 = vector.broadcast %339 : vector<1x96xf32> to vector<2x96xf32>
    %341 = arith.addf %338, %340 : vector<2x96xf32>
    %c0_120 = arith.constant 0 : index
    %c0_121 = arith.constant 0 : index
    %342 = vector.load %arg7[%c0_120, %c0_121] : memref<32x96xf32, #tpu.memory_space<vmem>>, vector<32x96xf32>
    %cst_122 = arith.constant dense<0.000000e+00> : vector<2x96xf32>
    %343 = tpu.matmul %298, %342, %cst_122 {dimension_numbers = #tpu.dot_dimension_numbers<[1], [0], [0], [1], [0, 0, 1, 1], [], []>} : vector<2x32xf32>, vector<32x96xf32>, vector<2x96xf32> -> vector<2x96xf32>
    %c0_123 = arith.constant 0 : index
    %c0_124 = arith.constant 0 : index
    %344 = vector.load %arg8[%c0_123, %c0_124] : memref<1x96xf32, #tpu.memory_space<vmem>>, vector<1x96xf32>
    %345 = vector.broadcast %344 : vector<1x96xf32> to vector<2x96xf32>
    %346 = arith.addf %343, %345 : vector<2x96xf32>
    %347 = vector.extract_strided_slice %341 {offsets = [0, 0], sizes = [2, 32], strides = [1, 1]} : vector<2x96xf32> to vector<2x32xf32>
    %348 = vector.extract_strided_slice %346 {offsets = [0, 0], sizes = [2, 32], strides = [1, 1]} : vector<2x96xf32> to vector<2x32xf32>
    %349 = arith.addf %347, %348 : vector<2x32xf32>
    %350 = arith.negf %349 : vector<2x32xf32>
    %351 = math.exp %350 : vector<2x32xf32>
    %cst_125 = arith.constant 1.000000e+00 : f32
    %352 = vector.broadcast %cst_125 : f32 to vector<2x32xf32>
    %353 = arith.addf %352, %351 : vector<2x32xf32>
    %354 = arith.divf %352, %353 : vector<2x32xf32>
    %355 = vector.extract_strided_slice %341 {offsets = [0, 32], sizes = [2, 32], strides = [1, 1]} : vector<2x96xf32> to vector<2x32xf32>
    %356 = vector.extract_strided_slice %346 {offsets = [0, 32], sizes = [2, 32], strides = [1, 1]} : vector<2x96xf32> to vector<2x32xf32>
    %357 = arith.addf %355, %356 : vector<2x32xf32>
    %358 = arith.negf %357 : vector<2x32xf32>
    %359 = math.exp %358 : vector<2x32xf32>
    %cst_126 = arith.constant 1.000000e+00 : f32
    %360 = vector.broadcast %cst_126 : f32 to vector<2x32xf32>
    %361 = arith.addf %360, %359 : vector<2x32xf32>
    %362 = arith.divf %360, %361 : vector<2x32xf32>
    %363 = vector.extract_strided_slice %341 {offsets = [0, 64], sizes = [2, 32], strides = [1, 1]} : vector<2x96xf32> to vector<2x32xf32>
    %364 = vector.extract_strided_slice %346 {offsets = [0, 64], sizes = [2, 32], strides = [1, 1]} : vector<2x96xf32> to vector<2x32xf32>
    %365 = arith.mulf %354, %364 : vector<2x32xf32>
    %366 = arith.addf %363, %365 : vector<2x32xf32>
    %367 = math.tanh %366 : vector<2x32xf32>
    %cst_127 = arith.constant 1.000000e+00 : f32
    %368 = vector.broadcast %cst_127 : f32 to vector<2x32xf32>
    %369 = arith.subf %368, %362 : vector<2x32xf32>
    %370 = arith.mulf %369, %367 : vector<2x32xf32>
    %371 = arith.mulf %362, %298 : vector<2x32xf32>
    %372 = arith.addf %370, %371 : vector<2x32xf32>
    %373 = arith.index_cast %c4_i32 : i32 to index
    %c0_128 = arith.constant 0 : index
    %c0_129 = arith.constant 0 : index
    %374 = vector.load %arg9[%373, %c0_128, %c0_129] : memref<8x2x32xf32, #tpu.memory_space<vmem>>, vector<1x2x32xf32>
    %375 = vector.shape_cast %374 : vector<1x2x32xf32> to vector<2x32xf32>
    %376 = vector.shape_cast %372 : vector<2x32xf32> to vector<1x2x32xf32>
    tpu.vector_store %arg9[%373, %c0_128, %c0_129], %376 {strides = array<i32>} : memref<8x2x32xf32, #tpu.memory_space<vmem>>, vector<1x2x32xf32>,
    %c5_i32 = arith.constant 5 : i32
    %377 = arith.index_cast %c5_i32 : i32 to index
    %c0_130 = arith.constant 0 : index
    %c0_131 = arith.constant 0 : index
    %378 = vector.load %arg1[%377, %c0_130, %c0_131] : memref<8x2x96xf32, #tpu.memory_space<vmem>>, vector<1x2x96xf32>
    %379 = vector.shape_cast %378 : vector<1x2x96xf32> to vector<2x96xf32>
    %c0_132 = arith.constant 0 : index
    %c0_133 = arith.constant 0 : index
    %380 = vector.load %arg3[%c0_132, %c0_133] : memref<32x96xf32, #tpu.memory_space<vmem>>, vector<32x96xf32>
    %cst_134 = arith.constant dense<0.000000e+00> : vector<2x96xf32>
    %381 = tpu.matmul %336, %380, %cst_134 {dimension_numbers = #tpu.dot_dimension_numbers<[1], [0], [0], [1], [0, 0, 1, 1], [], []>} : vector<2x32xf32>, vector<32x96xf32>, vector<2x96xf32> -> vector<2x96xf32>
    %c0_135 = arith.constant 0 : index
    %c0_136 = arith.constant 0 : index
    %382 = vector.load %arg4[%c0_135, %c0_136] : memref<1x96xf32, #tpu.memory_space<vmem>>, vector<1x96xf32>
    %383 = vector.broadcast %382 : vector<1x96xf32> to vector<2x96xf32>
    %384 = arith.addf %381, %383 : vector<2x96xf32>
    %385 = vector.extract_strided_slice %379 {offsets = [0, 0], sizes = [2, 32], strides = [1, 1]} : vector<2x96xf32> to vector<2x32xf32>
    %386 = vector.extract_strided_slice %384 {offsets = [0, 0], sizes = [2, 32], strides = [1, 1]} : vector<2x96xf32> to vector<2x32xf32>
    %387 = arith.addf %385, %386 : vector<2x32xf32>
    %388 = arith.negf %387 : vector<2x32xf32>
    %389 = math.exp %388 : vector<2x32xf32>
    %cst_137 = arith.constant 1.000000e+00 : f32
    %390 = vector.broadcast %cst_137 : f32 to vector<2x32xf32>
    %391 = arith.addf %390, %389 : vector<2x32xf32>
    %392 = arith.divf %390, %391 : vector<2x32xf32>
    %393 = vector.extract_strided_slice %379 {offsets = [0, 32], sizes = [2, 32], strides = [1, 1]} : vector<2x96xf32> to vector<2x32xf32>
    %394 = vector.extract_strided_slice %384 {offsets = [0, 32], sizes = [2, 32], strides = [1, 1]} : vector<2x96xf32> to vector<2x32xf32>
    %395 = arith.addf %393, %394 : vector<2x32xf32>
    %396 = arith.negf %395 : vector<2x32xf32>
    %397 = math.exp %396 : vector<2x32xf32>
    %cst_138 = arith.constant 1.000000e+00 : f32
    %398 = vector.broadcast %cst_138 : f32 to vector<2x32xf32>
    %399 = arith.addf %398, %397 : vector<2x32xf32>
    %400 = arith.divf %398, %399 : vector<2x32xf32>
    %401 = vector.extract_strided_slice %379 {offsets = [0, 64], sizes = [2, 32], strides = [1, 1]} : vector<2x96xf32> to vector<2x32xf32>
    %402 = vector.extract_strided_slice %384 {offsets = [0, 64], sizes = [2, 32], strides = [1, 1]} : vector<2x96xf32> to vector<2x32xf32>
    %403 = arith.mulf %392, %402 : vector<2x32xf32>
    %404 = arith.addf %401, %403 : vector<2x32xf32>
    %405 = math.tanh %404 : vector<2x32xf32>
    %cst_139 = arith.constant 1.000000e+00 : f32
    %406 = vector.broadcast %cst_139 : f32 to vector<2x32xf32>
    %407 = arith.subf %406, %400 : vector<2x32xf32>
    %408 = arith.mulf %407, %405 : vector<2x32xf32>
    %409 = arith.mulf %400, %336 : vector<2x32xf32>
    %410 = arith.addf %408, %409 : vector<2x32xf32>
    %c0_140 = arith.constant 0 : index
    %c0_141 = arith.constant 0 : index
    %411 = vector.load %arg5[%c0_140, %c0_141] : memref<32x96xf32, #tpu.memory_space<vmem>>, vector<32x96xf32>
    %cst_142 = arith.constant dense<0.000000e+00> : vector<2x96xf32>
    %412 = tpu.matmul %410, %411, %cst_142 {dimension_numbers = #tpu.dot_dimension_numbers<[1], [0], [0], [1], [0, 0, 1, 1], [], []>} : vector<2x32xf32>, vector<32x96xf32>, vector<2x96xf32> -> vector<2x96xf32>
    %c0_143 = arith.constant 0 : index
    %c0_144 = arith.constant 0 : index
    %413 = vector.load %arg6[%c0_143, %c0_144] : memref<1x96xf32, #tpu.memory_space<vmem>>, vector<1x96xf32>
    %414 = vector.broadcast %413 : vector<1x96xf32> to vector<2x96xf32>
    %415 = arith.addf %412, %414 : vector<2x96xf32>
    %c0_145 = arith.constant 0 : index
    %c0_146 = arith.constant 0 : index
    %416 = vector.load %arg7[%c0_145, %c0_146] : memref<32x96xf32, #tpu.memory_space<vmem>>, vector<32x96xf32>
    %cst_147 = arith.constant dense<0.000000e+00> : vector<2x96xf32>
    %417 = tpu.matmul %372, %416, %cst_147 {dimension_numbers = #tpu.dot_dimension_numbers<[1], [0], [0], [1], [0, 0, 1, 1], [], []>} : vector<2x32xf32>, vector<32x96xf32>, vector<2x96xf32> -> vector<2x96xf32>
    %c0_148 = arith.constant 0 : index
    %c0_149 = arith.constant 0 : index
    %418 = vector.load %arg8[%c0_148, %c0_149] : memref<1x96xf32, #tpu.memory_space<vmem>>, vector<1x96xf32>
    %419 = vector.broadcast %418 : vector<1x96xf32> to vector<2x96xf32>
    %420 = arith.addf %417, %419 : vector<2x96xf32>
    %421 = vector.extract_strided_slice %415 {offsets = [0, 0], sizes = [2, 32], strides = [1, 1]} : vector<2x96xf32> to vector<2x32xf32>
    %422 = vector.extract_strided_slice %420 {offsets = [0, 0], sizes = [2, 32], strides = [1, 1]} : vector<2x96xf32> to vector<2x32xf32>
    %423 = arith.addf %421, %422 : vector<2x32xf32>
    %424 = arith.negf %423 : vector<2x32xf32>
    %425 = math.exp %424 : vector<2x32xf32>
    %cst_150 = arith.constant 1.000000e+00 : f32
    %426 = vector.broadcast %cst_150 : f32 to vector<2x32xf32>
    %427 = arith.addf %426, %425 : vector<2x32xf32>
    %428 = arith.divf %426, %427 : vector<2x32xf32>
    %429 = vector.extract_strided_slice %415 {offsets = [0, 32], sizes = [2, 32], strides = [1, 1]} : vector<2x96xf32> to vector<2x32xf32>
    %430 = vector.extract_strided_slice %420 {offsets = [0, 32], sizes = [2, 32], strides = [1, 1]} : vector<2x96xf32> to vector<2x32xf32>
    %431 = arith.addf %429, %430 : vector<2x32xf32>
    %432 = arith.negf %431 : vector<2x32xf32>
    %433 = math.exp %432 : vector<2x32xf32>
    %cst_151 = arith.constant 1.000000e+00 : f32
    %434 = vector.broadcast %cst_151 : f32 to vector<2x32xf32>
    %435 = arith.addf %434, %433 : vector<2x32xf32>
    %436 = arith.divf %434, %435 : vector<2x32xf32>
    %437 = vector.extract_strided_slice %415 {offsets = [0, 64], sizes = [2, 32], strides = [1, 1]} : vector<2x96xf32> to vector<2x32xf32>
    %438 = vector.extract_strided_slice %420 {offsets = [0, 64], sizes = [2, 32], strides = [1, 1]} : vector<2x96xf32> to vector<2x32xf32>
    %439 = arith.mulf %428, %438 : vector<2x32xf32>
    %440 = arith.addf %437, %439 : vector<2x32xf32>
    %441 = math.tanh %440 : vector<2x32xf32>
    %cst_152 = arith.constant 1.000000e+00 : f32
    %442 = vector.broadcast %cst_152 : f32 to vector<2x32xf32>
    %443 = arith.subf %442, %436 : vector<2x32xf32>
    %444 = arith.mulf %443, %441 : vector<2x32xf32>
    %445 = arith.mulf %436, %372 : vector<2x32xf32>
    %446 = arith.addf %444, %445 : vector<2x32xf32>
    %447 = arith.index_cast %c5_i32 : i32 to index
    %c0_153 = arith.constant 0 : index
    %c0_154 = arith.constant 0 : index
    %448 = vector.load %arg9[%447, %c0_153, %c0_154] : memref<8x2x32xf32, #tpu.memory_space<vmem>>, vector<1x2x32xf32>
    %449 = vector.shape_cast %448 : vector<1x2x32xf32> to vector<2x32xf32>
    %450 = vector.shape_cast %446 : vector<2x32xf32> to vector<1x2x32xf32>
    tpu.vector_store %arg9[%447, %c0_153, %c0_154], %450 {strides = array<i32>} : memref<8x2x32xf32, #tpu.memory_space<vmem>>, vector<1x2x32xf32>,
    %c6_i32 = arith.constant 6 : i32
    %451 = arith.index_cast %c6_i32 : i32 to index
    %c0_155 = arith.constant 0 : index
    %c0_156 = arith.constant 0 : index
    %452 = vector.load %arg1[%451, %c0_155, %c0_156] : memref<8x2x96xf32, #tpu.memory_space<vmem>>, vector<1x2x96xf32>
    %453 = vector.shape_cast %452 : vector<1x2x96xf32> to vector<2x96xf32>
    %c0_157 = arith.constant 0 : index
    %c0_158 = arith.constant 0 : index
    %454 = vector.load %arg3[%c0_157, %c0_158] : memref<32x96xf32, #tpu.memory_space<vmem>>, vector<32x96xf32>
    %cst_159 = arith.constant dense<0.000000e+00> : vector<2x96xf32>
    %455 = tpu.matmul %410, %454, %cst_159 {dimension_numbers = #tpu.dot_dimension_numbers<[1], [0], [0], [1], [0, 0, 1, 1], [], []>} : vector<2x32xf32>, vector<32x96xf32>, vector<2x96xf32> -> vector<2x96xf32>
    %c0_160 = arith.constant 0 : index
    %c0_161 = arith.constant 0 : index
    %456 = vector.load %arg4[%c0_160, %c0_161] : memref<1x96xf32, #tpu.memory_space<vmem>>, vector<1x96xf32>
    %457 = vector.broadcast %456 : vector<1x96xf32> to vector<2x96xf32>
    %458 = arith.addf %455, %457 : vector<2x96xf32>
    %459 = vector.extract_strided_slice %453 {offsets = [0, 0], sizes = [2, 32], strides = [1, 1]} : vector<2x96xf32> to vector<2x32xf32>
    %460 = vector.extract_strided_slice %458 {offsets = [0, 0], sizes = [2, 32], strides = [1, 1]} : vector<2x96xf32> to vector<2x32xf32>
    %461 = arith.addf %459, %460 : vector<2x32xf32>
    %462 = arith.negf %461 : vector<2x32xf32>
    %463 = math.exp %462 : vector<2x32xf32>
    %cst_162 = arith.constant 1.000000e+00 : f32
    %464 = vector.broadcast %cst_162 : f32 to vector<2x32xf32>
    %465 = arith.addf %464, %463 : vector<2x32xf32>
    %466 = arith.divf %464, %465 : vector<2x32xf32>
    %467 = vector.extract_strided_slice %453 {offsets = [0, 32], sizes = [2, 32], strides = [1, 1]} : vector<2x96xf32> to vector<2x32xf32>
    %468 = vector.extract_strided_slice %458 {offsets = [0, 32], sizes = [2, 32], strides = [1, 1]} : vector<2x96xf32> to vector<2x32xf32>
    %469 = arith.addf %467, %468 : vector<2x32xf32>
    %470 = arith.negf %469 : vector<2x32xf32>
    %471 = math.exp %470 : vector<2x32xf32>
    %cst_163 = arith.constant 1.000000e+00 : f32
    %472 = vector.broadcast %cst_163 : f32 to vector<2x32xf32>
    %473 = arith.addf %472, %471 : vector<2x32xf32>
    %474 = arith.divf %472, %473 : vector<2x32xf32>
    %475 = vector.extract_strided_slice %453 {offsets = [0, 64], sizes = [2, 32], strides = [1, 1]} : vector<2x96xf32> to vector<2x32xf32>
    %476 = vector.extract_strided_slice %458 {offsets = [0, 64], sizes = [2, 32], strides = [1, 1]} : vector<2x96xf32> to vector<2x32xf32>
    %477 = arith.mulf %466, %476 : vector<2x32xf32>
    %478 = arith.addf %475, %477 : vector<2x32xf32>
    %479 = math.tanh %478 : vector<2x32xf32>
    %cst_164 = arith.constant 1.000000e+00 : f32
    %480 = vector.broadcast %cst_164 : f32 to vector<2x32xf32>
    %481 = arith.subf %480, %474 : vector<2x32xf32>
    %482 = arith.mulf %481, %479 : vector<2x32xf32>
    %483 = arith.mulf %474, %410 : vector<2x32xf32>
    %484 = arith.addf %482, %483 : vector<2x32xf32>
    %c0_165 = arith.constant 0 : index
    %c0_166 = arith.constant 0 : index
    %485 = vector.load %arg5[%c0_165, %c0_166] : memref<32x96xf32, #tpu.memory_space<vmem>>, vector<32x96xf32>
    %cst_167 = arith.constant dense<0.000000e+00> : vector<2x96xf32>
    %486 = tpu.matmul %484, %485, %cst_167 {dimension_numbers = #tpu.dot_dimension_numbers<[1], [0], [0], [1], [0, 0, 1, 1], [], []>} : vector<2x32xf32>, vector<32x96xf32>, vector<2x96xf32> -> vector<2x96xf32>
    %c0_168 = arith.constant 0 : index
    %c0_169 = arith.constant 0 : index
    %487 = vector.load %arg6[%c0_168, %c0_169] : memref<1x96xf32, #tpu.memory_space<vmem>>, vector<1x96xf32>
    %488 = vector.broadcast %487 : vector<1x96xf32> to vector<2x96xf32>
    %489 = arith.addf %486, %488 : vector<2x96xf32>
    %c0_170 = arith.constant 0 : index
    %c0_171 = arith.constant 0 : index
    %490 = vector.load %arg7[%c0_170, %c0_171] : memref<32x96xf32, #tpu.memory_space<vmem>>, vector<32x96xf32>
    %cst_172 = arith.constant dense<0.000000e+00> : vector<2x96xf32>
    %491 = tpu.matmul %446, %490, %cst_172 {dimension_numbers = #tpu.dot_dimension_numbers<[1], [0], [0], [1], [0, 0, 1, 1], [], []>} : vector<2x32xf32>, vector<32x96xf32>, vector<2x96xf32> -> vector<2x96xf32>
    %c0_173 = arith.constant 0 : index
    %c0_174 = arith.constant 0 : index
    %492 = vector.load %arg8[%c0_173, %c0_174] : memref<1x96xf32, #tpu.memory_space<vmem>>, vector<1x96xf32>
    %493 = vector.broadcast %492 : vector<1x96xf32> to vector<2x96xf32>
    %494 = arith.addf %491, %493 : vector<2x96xf32>
    %495 = vector.extract_strided_slice %489 {offsets = [0, 0], sizes = [2, 32], strides = [1, 1]} : vector<2x96xf32> to vector<2x32xf32>
    %496 = vector.extract_strided_slice %494 {offsets = [0, 0], sizes = [2, 32], strides = [1, 1]} : vector<2x96xf32> to vector<2x32xf32>
    %497 = arith.addf %495, %496 : vector<2x32xf32>
    %498 = arith.negf %497 : vector<2x32xf32>
    %499 = math.exp %498 : vector<2x32xf32>
    %cst_175 = arith.constant 1.000000e+00 : f32
    %500 = vector.broadcast %cst_175 : f32 to vector<2x32xf32>
    %501 = arith.addf %500, %499 : vector<2x32xf32>
    %502 = arith.divf %500, %501 : vector<2x32xf32>
    %503 = vector.extract_strided_slice %489 {offsets = [0, 32], sizes = [2, 32], strides = [1, 1]} : vector<2x96xf32> to vector<2x32xf32>
    %504 = vector.extract_strided_slice %494 {offsets = [0, 32], sizes = [2, 32], strides = [1, 1]} : vector<2x96xf32> to vector<2x32xf32>
    %505 = arith.addf %503, %504 : vector<2x32xf32>
    %506 = arith.negf %505 : vector<2x32xf32>
    %507 = math.exp %506 : vector<2x32xf32>
    %cst_176 = arith.constant 1.000000e+00 : f32
    %508 = vector.broadcast %cst_176 : f32 to vector<2x32xf32>
    %509 = arith.addf %508, %507 : vector<2x32xf32>
    %510 = arith.divf %508, %509 : vector<2x32xf32>
    %511 = vector.extract_strided_slice %489 {offsets = [0, 64], sizes = [2, 32], strides = [1, 1]} : vector<2x96xf32> to vector<2x32xf32>
    %512 = vector.extract_strided_slice %494 {offsets = [0, 64], sizes = [2, 32], strides = [1, 1]} : vector<2x96xf32> to vector<2x32xf32>
    %513 = arith.mulf %502, %512 : vector<2x32xf32>
    %514 = arith.addf %511, %513 : vector<2x32xf32>
    %515 = math.tanh %514 : vector<2x32xf32>
    %cst_177 = arith.constant 1.000000e+00 : f32
    %516 = vector.broadcast %cst_177 : f32 to vector<2x32xf32>
    %517 = arith.subf %516, %510 : vector<2x32xf32>
    %518 = arith.mulf %517, %515 : vector<2x32xf32>
    %519 = arith.mulf %510, %446 : vector<2x32xf32>
    %520 = arith.addf %518, %519 : vector<2x32xf32>
    %521 = arith.index_cast %c6_i32 : i32 to index
    %c0_178 = arith.constant 0 : index
    %c0_179 = arith.constant 0 : index
    %522 = vector.load %arg9[%521, %c0_178, %c0_179] : memref<8x2x32xf32, #tpu.memory_space<vmem>>, vector<1x2x32xf32>
    %523 = vector.shape_cast %522 : vector<1x2x32xf32> to vector<2x32xf32>
    %524 = vector.shape_cast %520 : vector<2x32xf32> to vector<1x2x32xf32>
    tpu.vector_store %arg9[%521, %c0_178, %c0_179], %524 {strides = array<i32>} : memref<8x2x32xf32, #tpu.memory_space<vmem>>, vector<1x2x32xf32>,
    %c7_i32 = arith.constant 7 : i32
    %525 = arith.index_cast %c7_i32 : i32 to index
    %c0_180 = arith.constant 0 : index
    %c0_181 = arith.constant 0 : index
    %526 = vector.load %arg1[%525, %c0_180, %c0_181] : memref<8x2x96xf32, #tpu.memory_space<vmem>>, vector<1x2x96xf32>
    %527 = vector.shape_cast %526 : vector<1x2x96xf32> to vector<2x96xf32>
    %c0_182 = arith.constant 0 : index
    %c0_183 = arith.constant 0 : index
    %528 = vector.load %arg3[%c0_182, %c0_183] : memref<32x96xf32, #tpu.memory_space<vmem>>, vector<32x96xf32>
    %cst_184 = arith.constant dense<0.000000e+00> : vector<2x96xf32>
    %529 = tpu.matmul %484, %528, %cst_184 {dimension_numbers = #tpu.dot_dimension_numbers<[1], [0], [0], [1], [0, 0, 1, 1], [], []>} : vector<2x32xf32>, vector<32x96xf32>, vector<2x96xf32> -> vector<2x96xf32>
    %c0_185 = arith.constant 0 : index
    %c0_186 = arith.constant 0 : index
    %530 = vector.load %arg4[%c0_185, %c0_186] : memref<1x96xf32, #tpu.memory_space<vmem>>, vector<1x96xf32>
    %531 = vector.broadcast %530 : vector<1x96xf32> to vector<2x96xf32>
    %532 = arith.addf %529, %531 : vector<2x96xf32>
    %533 = vector.extract_strided_slice %527 {offsets = [0, 0], sizes = [2, 32], strides = [1, 1]} : vector<2x96xf32> to vector<2x32xf32>
    %534 = vector.extract_strided_slice %532 {offsets = [0, 0], sizes = [2, 32], strides = [1, 1]} : vector<2x96xf32> to vector<2x32xf32>
    %535 = arith.addf %533, %534 : vector<2x32xf32>
    %536 = arith.negf %535 : vector<2x32xf32>
    %537 = math.exp %536 : vector<2x32xf32>
    %cst_187 = arith.constant 1.000000e+00 : f32
    %538 = vector.broadcast %cst_187 : f32 to vector<2x32xf32>
    %539 = arith.addf %538, %537 : vector<2x32xf32>
    %540 = arith.divf %538, %539 : vector<2x32xf32>
    %541 = vector.extract_strided_slice %527 {offsets = [0, 32], sizes = [2, 32], strides = [1, 1]} : vector<2x96xf32> to vector<2x32xf32>
    %542 = vector.extract_strided_slice %532 {offsets = [0, 32], sizes = [2, 32], strides = [1, 1]} : vector<2x96xf32> to vector<2x32xf32>
    %543 = arith.addf %541, %542 : vector<2x32xf32>
    %544 = arith.negf %543 : vector<2x32xf32>
    %545 = math.exp %544 : vector<2x32xf32>
    %cst_188 = arith.constant 1.000000e+00 : f32
    %546 = vector.broadcast %cst_188 : f32 to vector<2x32xf32>
    %547 = arith.addf %546, %545 : vector<2x32xf32>
    %548 = arith.divf %546, %547 : vector<2x32xf32>
    %549 = vector.extract_strided_slice %527 {offsets = [0, 64], sizes = [2, 32], strides = [1, 1]} : vector<2x96xf32> to vector<2x32xf32>
    %550 = vector.extract_strided_slice %532 {offsets = [0, 64], sizes = [2, 32], strides = [1, 1]} : vector<2x96xf32> to vector<2x32xf32>
    %551 = arith.mulf %540, %550 : vector<2x32xf32>
    %552 = arith.addf %549, %551 : vector<2x32xf32>
    %553 = math.tanh %552 : vector<2x32xf32>
    %cst_189 = arith.constant 1.000000e+00 : f32
    %554 = vector.broadcast %cst_189 : f32 to vector<2x32xf32>
    %555 = arith.subf %554, %548 : vector<2x32xf32>
    %556 = arith.mulf %555, %553 : vector<2x32xf32>
    %557 = arith.mulf %548, %484 : vector<2x32xf32>
    %558 = arith.addf %556, %557 : vector<2x32xf32>
    %c0_190 = arith.constant 0 : index
    %c0_191 = arith.constant 0 : index
    %559 = vector.load %arg5[%c0_190, %c0_191] : memref<32x96xf32, #tpu.memory_space<vmem>>, vector<32x96xf32>
    %cst_192 = arith.constant dense<0.000000e+00> : vector<2x96xf32>
    %560 = tpu.matmul %558, %559, %cst_192 {dimension_numbers = #tpu.dot_dimension_numbers<[1], [0], [0], [1], [0, 0, 1, 1], [], []>} : vector<2x32xf32>, vector<32x96xf32>, vector<2x96xf32> -> vector<2x96xf32>
    %c0_193 = arith.constant 0 : index
    %c0_194 = arith.constant 0 : index
    %561 = vector.load %arg6[%c0_193, %c0_194] : memref<1x96xf32, #tpu.memory_space<vmem>>, vector<1x96xf32>
    %562 = vector.broadcast %561 : vector<1x96xf32> to vector<2x96xf32>
    %563 = arith.addf %560, %562 : vector<2x96xf32>
    %c0_195 = arith.constant 0 : index
    %c0_196 = arith.constant 0 : index
    %564 = vector.load %arg7[%c0_195, %c0_196] : memref<32x96xf32, #tpu.memory_space<vmem>>, vector<32x96xf32>
    %cst_197 = arith.constant dense<0.000000e+00> : vector<2x96xf32>
    %565 = tpu.matmul %520, %564, %cst_197 {dimension_numbers = #tpu.dot_dimension_numbers<[1], [0], [0], [1], [0, 0, 1, 1], [], []>} : vector<2x32xf32>, vector<32x96xf32>, vector<2x96xf32> -> vector<2x96xf32>
    %c0_198 = arith.constant 0 : index
    %c0_199 = arith.constant 0 : index
    %566 = vector.load %arg8[%c0_198, %c0_199] : memref<1x96xf32, #tpu.memory_space<vmem>>, vector<1x96xf32>
    %567 = vector.broadcast %566 : vector<1x96xf32> to vector<2x96xf32>
    %568 = arith.addf %565, %567 : vector<2x96xf32>
    %569 = vector.extract_strided_slice %563 {offsets = [0, 0], sizes = [2, 32], strides = [1, 1]} : vector<2x96xf32> to vector<2x32xf32>
    %570 = vector.extract_strided_slice %568 {offsets = [0, 0], sizes = [2, 32], strides = [1, 1]} : vector<2x96xf32> to vector<2x32xf32>
    %571 = arith.addf %569, %570 : vector<2x32xf32>
    %572 = arith.negf %571 : vector<2x32xf32>
    %573 = math.exp %572 : vector<2x32xf32>
    %cst_200 = arith.constant 1.000000e+00 : f32
    %574 = vector.broadcast %cst_200 : f32 to vector<2x32xf32>
    %575 = arith.addf %574, %573 : vector<2x32xf32>
    %576 = arith.divf %574, %575 : vector<2x32xf32>
    %577 = vector.extract_strided_slice %563 {offsets = [0, 32], sizes = [2, 32], strides = [1, 1]} : vector<2x96xf32> to vector<2x32xf32>
    %578 = vector.extract_strided_slice %568 {offsets = [0, 32], sizes = [2, 32], strides = [1, 1]} : vector<2x96xf32> to vector<2x32xf32>
    %579 = arith.addf %577, %578 : vector<2x32xf32>
    %580 = arith.negf %579 : vector<2x32xf32>
    %581 = math.exp %580 : vector<2x32xf32>
    %cst_201 = arith.constant 1.000000e+00 : f32
    %582 = vector.broadcast %cst_201 : f32 to vector<2x32xf32>
    %583 = arith.addf %582, %581 : vector<2x32xf32>
    %584 = arith.divf %582, %583 : vector<2x32xf32>
    %585 = vector.extract_strided_slice %563 {offsets = [0, 64], sizes = [2, 32], strides = [1, 1]} : vector<2x96xf32> to vector<2x32xf32>
    %586 = vector.extract_strided_slice %568 {offsets = [0, 64], sizes = [2, 32], strides = [1, 1]} : vector<2x96xf32> to vector<2x32xf32>
    %587 = arith.mulf %576, %586 : vector<2x32xf32>
    %588 = arith.addf %585, %587 : vector<2x32xf32>
    %589 = math.tanh %588 : vector<2x32xf32>
    %cst_202 = arith.constant 1.000000e+00 : f32
    %590 = vector.broadcast %cst_202 : f32 to vector<2x32xf32>
    %591 = arith.subf %590, %584 : vector<2x32xf32>
    %592 = arith.mulf %591, %589 : vector<2x32xf32>
    %593 = arith.mulf %584, %520 : vector<2x32xf32>
    %594 = arith.addf %592, %593 : vector<2x32xf32>
    %595 = arith.index_cast %c7_i32 : i32 to index
    %c0_203 = arith.constant 0 : index
    %c0_204 = arith.constant 0 : index
    %596 = vector.load %arg9[%595, %c0_203, %c0_204] : memref<8x2x32xf32, #tpu.memory_space<vmem>>, vector<1x2x32xf32>
    %597 = vector.shape_cast %596 : vector<1x2x32xf32> to vector<2x32xf32>
    %598 = vector.shape_cast %594 : vector<2x32xf32> to vector<1x2x32xf32>
    tpu.vector_store %arg9[%595, %c0_203, %c0_204], %598 {strides = array<i32>} : memref<8x2x32xf32, #tpu.memory_space<vmem>>, vector<1x2x32xf32>,
    %c8_i32 = arith.constant 8 : i32
    %c0_205 = arith.constant 0 : index
    %c0_206 = arith.constant 0 : index
    %c0_207 = arith.constant 0 : index
    %599 = vector.load %arg11[%c0_205, %c0_206, %c0_207] : memref<2x2x32xf32, #tpu.memory_space<vmem>>, vector<1x2x32xf32>
    %600 = vector.shape_cast %599 : vector<1x2x32xf32> to vector<2x32xf32>
    %601 = vector.shape_cast %558 : vector<2x32xf32> to vector<1x2x32xf32>
    tpu.vector_store %arg11[%c0_205, %c0_206, %c0_207], %601 {strides = array<i32>} : memref<2x2x32xf32, #tpu.memory_space<vmem>>, vector<1x2x32xf32>,
    %c1_208 = arith.constant 1 : index
    %c0_209 = arith.constant 0 : index
    %c0_210 = arith.constant 0 : index
    %602 = vector.load %arg11[%c1_208, %c0_209, %c0_210] : memref<2x2x32xf32, #tpu.memory_space<vmem>>, vector<1x2x32xf32>
    %603 = vector.shape_cast %602 : vector<1x2x32xf32> to vector<2x32xf32>
    %604 = vector.shape_cast %594 : vector<2x32xf32> to vector<1x2x32xf32>
    tpu.vector_store %arg11[%c1_208, %c0_209, %c0_210], %604 {strides = array<i32>} : memref<2x2x32xf32, #tpu.memory_space<vmem>>, vector<1x2x32xf32>,
    %c0_i32_211 = arith.constant 0 : i32
    %605 = arith.cmpi eq, %arg0, %c0_i32_211 : i32
    %606 = arith.extui %605 : i1 to i32
    %c0_i32_212 = arith.constant 0 : i32
    %607 = arith.cmpi ne, %606, %c0_i32_212 : i32
    scf.if %607 {
      %c0_213 = arith.constant 0 : index
      %c0_214 = arith.constant 0 : index
      %c0_215 = arith.constant 0 : index
      %608 = vector.load %arg11[%c0_213, %c0_214, %c0_215] : memref<2x2x32xf32, #tpu.memory_space<vmem>>, vector<2x2x32xf32>
      %c0_216 = arith.constant 0 : index
      %c0_217 = arith.constant 0 : index
      %c0_218 = arith.constant 0 : index
      %609 = vector.load %arg10[%c0_216, %c0_217, %c0_218] : memref<2x2x32xf32, #tpu.memory_space<vmem>>, vector<2x2x32xf32>
      tpu.vector_store %arg10[%c0_216, %c0_217, %c0_218], %608 {strides = array<i32>} : memref<2x2x32xf32, #tpu.memory_space<vmem>>, vector<2x2x32xf32>,
    } else {
    }
    return
  }
  func.func @transform_0(%arg0: i32) -> (i32, i32, i32) {
    %c0_i32 = arith.constant 0 : i32
    %c0_i32_0 = arith.constant 0 : i32
    %c0_i32_1 = arith.constant 0 : i32
    return %arg0, %c0_i32, %c0_i32_0 : i32, i32, i32
  }
  func.func @transform_1(%arg0: i32) -> (i32, i32, i32) {
    %c0_i32 = arith.constant 0 : i32
    %c0_i32_0 = arith.constant 0 : i32
    %c0_i32_1 = arith.constant 0 : i32
    %c0_i32_2 = arith.constant 0 : i32
    return %c0_i32, %c0_i32_0, %c0_i32_1 : i32, i32, i32
  }
  func.func @transform_2(%arg0: i32) -> (i32, i32) {
    %c0_i32 = arith.constant 0 : i32
    %c0_i32_0 = arith.constant 0 : i32
    %c0_i32_1 = arith.constant 0 : i32
    return %c0_i32, %c0_i32_0 : i32, i32
  }
  func.func @transform_3(%arg0: i32) -> (i32, i32) {
    %c0_i32 = arith.constant 0 : i32
    %c0_i32_0 = arith.constant 0 : i32
    %c0_i32_1 = arith.constant 0 : i32
    return %c0_i32, %c0_i32_0 : i32, i32
  }
  func.func @transform_4(%arg0: i32) -> (i32, i32) {
    %c0_i32 = arith.constant 0 : i32
    %c0_i32_0 = arith.constant 0 : i32
    %c0_i32_1 = arith.constant 0 : i32
    return %c0_i32, %c0_i32_0 : i32, i32
  }
  func.func @transform_5(%arg0: i32) -> (i32, i32) {
    %c0_i32 = arith.constant 0 : i32
    %c0_i32_0 = arith.constant 0 : i32
    %c0_i32_1 = arith.constant 0 : i32
    return %c0_i32, %c0_i32_0 : i32, i32
  }
  func.func @transform_6(%arg0: i32) -> (i32, i32) {
    %c0_i32 = arith.constant 0 : i32
    %c0_i32_0 = arith.constant 0 : i32
    %c0_i32_1 = arith.constant 0 : i32
    return %c0_i32, %c0_i32_0 : i32, i32
  }
  func.func @transform_7(%arg0: i32) -> (i32, i32) {
    %c0_i32 = arith.constant 0 : i32
    %c0_i32_0 = arith.constant 0 : i32
    %c0_i32_1 = arith.constant 0 : i32
    return %c0_i32, %c0_i32_0 : i32, i32
  }
  func.func @transform_8(%arg0: i32) -> (i32, i32, i32) {
    %c0_i32 = arith.constant 0 : i32
    %c0_i32_0 = arith.constant 0 : i32
    %c0_i32_1 = arith.constant 0 : i32
    return %arg0, %c0_i32, %c0_i32_0 : i32, i32, i32
  }
  func.func @transform_9(%arg0: i32) -> (i32, i32, i32) {
    %c0_i32 = arith.constant 0 : i32
    %c0_i32_0 = arith.constant 0 : i32
    %c0_i32_1 = arith.constant 0 : i32
    %c0_i32_2 = arith.constant 0 : i32
    return %c0_i32, %c0_i32_0, %c0_i32_1 : i32, i32, i32
  }
}

</mosaic_0001>

<llo_original>
// kernel: two_step_network_forward.1
$region0: #{two_step_network_forward.1}
  #allocation0 [shape = 'u32[]', space=smem, size = 0x4, offset = 0x4, fixed_abs, tag = 'smem constant byte address 0x4 - core index']
  #allocation1 [shape = 'u32[144,128]{1,0:T(1,128)}', space=vmem, size = 0x12000, scoped, tag = 'internal scratch']
  #allocation2 [shape = 'f32[2,2,32]{2,1,0:T(2,128)}', space=vmem, size = 0x800, scoped, tag = 'scratch operand']
  %s0 = inlined_call_operand.vmem [shape: f32[8,2,96], index: 0, kind: input, shape index: {}]
  %s1 = inlined_call_operand.vmem [shape: f32[2,2,32], index: 1, kind: input, shape index: {}]
  %s2 = inlined_call_operand.vmem [shape: f32[32,96], index: 2, kind: input, shape index: {}]
  %s3 = inlined_call_operand.vmem [shape: f32[1,96], index: 3, kind: input, shape index: {}]
  %s4 = inlined_call_operand.vmem [shape: f32[32,96], index: 4, kind: input, shape index: {}]
  %s5 = inlined_call_operand.vmem [shape: f32[1,96], index: 5, kind: input, shape index: {}]
  %s6 = inlined_call_operand.vmem [shape: f32[32,96], index: 6, kind: input, shape index: {}]
  %s7 = inlined_call_operand.vmem [shape: f32[1,96], index: 7, kind: input, shape index: {}]
  %s8 = inlined_call_operand.vmem [shape: f32[8,2,32], index: 8, kind: output, shape index: {0}]
  %s9 = inlined_call_operand.hbm [shape: f32[2,2,32], index: 9, kind: output, shape index: {1}]
  %10 = xla_tuple %s8, %s9
  %s11 = sld [smem:[#allocation0]]
  $region58: #{two_step_network_forward.1} parent=0
    _
  %s13 = ssub.s32 1, %s11
  %s14 = scalar_select 0, %s13, %s11
  $region1: #{two_step_network_forward.1} parent=0
    #allocation3 [shape = 'u8[2048]{0}', space=vmem, size = 0x800, scoped, tag = 'output window, operand 1, single buffered']
    #allocation4 [shape = 's32[1]{0}', space=sflag, size = 0x4, scoped, tag = 'scoped memory for two_step_network_forward.1']
    %15 = vsyncpa [#allocation4], 0
    // Predicated region
    $region2: #{two_step_network_forward.1} parent=1 // pred_check
      _
    $region3: #{two_step_network_forward.1} parent=1 // pred_check_branch
      %17 = sbr.rel (0) target = $region5
    $region4: #{two_step_network_forward.1} parent=1 // pred_region
      _
    $region5: #{two_step_network_forward.1} parent=1 // pred_fallthru
      _
    // Predicated region
    $region6: #{two_step_network_forward.1} parent=1 // pred_check
      _
    $region7: #{two_step_network_forward.1} parent=1 // pred_check_branch
      %19 = sbr.rel (0) target = $region9
    $region8: #{two_step_network_forward.1} parent=1 // pred_region
      _
    $region9: #{two_step_network_forward.1} parent=1 // pred_fallthru
      _
    // Predicated region
    $region10: #{two_step_network_forward.1} parent=1 // pred_check
      _
    $region11: #{two_step_network_forward.1} parent=1 // pred_check_branch
      %21 = sbr.rel (0) target = $region13
    $region12: #{two_step_network_forward.1} parent=1 // pred_region
      _
    $region13: #{two_step_network_forward.1} parent=1 // pred_fallthru
      _
    // Predicated region
    $region14: #{two_step_network_forward.1} parent=1 // pred_check
      _
    $region15: #{two_step_network_forward.1} parent=1 // pred_check_branch
      %23 = sbr.rel (0) target = $region17
    $region16: #{two_step_network_forward.1} parent=1 // pred_region
      _
    $region17: #{two_step_network_forward.1} parent=1 // pred_fallthru
      _
    // Predicated region
    $region18: #{two_step_network_forward.1} parent=1 // pred_check
      _
    $region19: #{two_step_network_forward.1} parent=1 // pred_check_branch
      %25 = sbr.rel (0) target = $region21
    $region20: #{two_step_network_forward.1} parent=1 // pred_region
      _
    $region21: #{two_step_network_forward.1} parent=1 // pred_fallthru
      _
    // Predicated region
    $region22: #{two_step_network_forward.1} parent=1 // pred_check
      _
    $region23: #{two_step_network_forward.1} parent=1 // pred_check_branch
      %27 = sbr.rel (0) target = $region25
    $region24: #{two_step_network_forward.1} parent=1 // pred_region
      _
    $region25: #{two_step_network_forward.1} parent=1 // pred_fallthru
      _
    // Predicated region
    $region26: #{two_step_network_forward.1} parent=1 // pred_check
      _
    $region27: #{two_step_network_forward.1} parent=1 // pred_check_branch
      %29 = sbr.rel (0) target = $region29
    $region28: #{two_step_network_forward.1} parent=1 // pred_region
      _
    $region29: #{two_step_network_forward.1} parent=1 // pred_fallthru
      _
    // Predicated region
    $region30: #{two_step_network_forward.1} parent=1 // pred_check
      _
    $region31: #{two_step_network_forward.1} parent=1 // pred_check_branch
      %31 = sbr.rel (0) target = $region33
    $region32: #{two_step_network_forward.1} parent=1 // pred_region
      _
    $region33: #{two_step_network_forward.1} parent=1 // pred_fallthru
      _
    %p32 = scmp.eq.s32.totalorder 0, 0
    // Predicated region
    $region34: #{two_step_network_forward.1} parent=1 // pred_check
      %p33 = pneg %p32
    $region35: #{two_step_network_forward.1} parent=1 // pred_check_branch
      %35 = sbr.rel (%p33) target = $region37
    $region36: #{two_step_network_forward.1} parent=1 // pred_region
      %v36 = vld [vmem:[%s1] sm:$0x3]
      %v37 = vld [vmem:[%s1 + $0x2] sm:$0x3]
      %vm38 = vcmask 254976
      %39 = vst.msk [vmem:[#allocation2] sm:$0x3] %vm38, %v36
      %40 = vst.msk [vmem:[#allocation2 + $0x2] sm:$0x3] %vm38, %v37
    $region37: #{two_step_network_forward.1} parent=1 // pred_fallthru
      _
    %v41 = vld [vmem:[#allocation2] sm:$0x3]
    %s42 = scalar_lea.vmem [#allocation2], 2
    %v43 = vld [vmem:[%s42] sm:$0x3]
    %v44 = vld [vmem:[%s0] sm:$0x3]
    %v45 = vld [vmem:[%s2] sm:$0xff]
    %v46 = vld [vmem:[%s2 + $0x8] sm:$0xff]
    %v47 = vld [vmem:[%s2 + $0x10] sm:$0xff]
    %v48 = vld [vmem:[%s2 + $0x18] sm:$0xff]
    %v49 = vld [vmem:[%s3] sm:$0x1]
    %v51 = vlaneseq
    %v52 = vshrl.u32 %v51, 7
    %v53 = vsub.s32 0, %v52
    %v54 = vrot.slane %v49, %v53
    %vm56 = vcmask 261120
    %v58 = vsel %vm56, %v41, 0
    %60 = vmatprep.subr.mxu0 0.0
    %61 = vmatpush1.msra.mxu0 %v45
    %62 = vmatprep.subr.mxu0 0.0
    %63 = vmatpush1.msra.mxu0 %v46
    %64 = vmatprep.subr.mxu0 0.0
    %65 = vmatpush1.msra.mxu0 %v47
    %66 = vmatprep.subr.mxu0 0.0
    %67 = vmatpush1.msra.mxu0 %v48
    %68 = vmatprep.subr.mxu0 0.0
    %69 = vmatpush1.msra.mxu0 0.0
    %70 = vmatprep.subr.mxu0 0.0
    %71 = vmatpush1.msra.mxu0 0.0
    %72 = vmatprep.subr.mxu0 0.0
    %73 = vmatpush1.msra.mxu0 0.0
    %74 = vmatprep.subr.mxu0 0.0
    %75 = vmatpush1.msra.mxu0 0.0
    %76 = vmatprep.subr.mxu0 0.0
    %77 = vmatpush1.msra.mxu0 0.0
    %78 = vmatprep.subr.mxu0 0.0
    %79 = vmatpush1.msra.mxu0 0.0
    %80 = vmatprep.subr.mxu0 0.0
    %81 = vmatpush1.msra.mxu0 0.0
    %82 = vmatprep.subr.mxu0 0.0
    %83 = vmatpush1.msra.mxu0 0.0
    %84 = vmatprep.subr.mxu0 0.0
    %85 = vmatpush1.msra.mxu0 0.0
    %86 = vmatprep.subr.mxu0 0.0
    %87 = vmatpush1.msra.mxu0 0.0
    %88 = vmatprep.subr.mxu0 0.0
    %89 = vmatpush1.msra.mxu0 0.0
    %90 = vmatprep.subr.mxu0 0.0
    %91 = vmatpush1.msra.mxu0 0.0
    %92 = vmatprep.subr.mxu0 0.0
    %93 = vmatpush1.msra.mxu0 0.0
    %94 = vmatprep.subr.mxu0 0.0
    %95 = vmatpush1.msra.mxu0 0.0
    %96 = vmatprep.subr.mxu0 0.0
    %97 = vmatpush1.msra.mxu0 0.0
    %98 = vmatprep.subr.mxu0 0.0
    %99 = vmatpush1.msra.mxu0 0.0
    %100 = vmatprep.subr.mxu0 0.0
    %101 = vmatpush1.msra.mxu0 0.0
    %102 = vmatprep.subr.mxu0 0.0
    %103 = vmatpush1.msra.mxu0 0.0
    %104 = vmatprep.subr.mxu0 0.0
    %105 = vmatpush1.msra.mxu0 0.0
    %106 = vmatprep.subr.mxu0 0.0
    %107 = vmatpush1.msra.mxu0 0.0
    %108 = vmatprep.subr.mxu0 0.0
    %109 = vmatpush1.msra.mxu0 0.0
    %110 = vmatprep.subr.mxu0 0.0
    %111 = vmatpush1.msra.mxu0 0.0
    %112 = vmatprep.subr.mxu0 0.0
    %113 = vmatpush1.msra.mxu0 0.0
    %114 = vmatprep.subr.mxu0 0.0
    %115 = vmatpush1.msra.mxu0 0.0
    %116 = vmatprep.subr.mxu0 0.0
    %117 = vmatpush1.msra.mxu0 0.0
    %118 = vmatprep.subr.mxu0 0.0
    %119 = vmatpush1.msra.mxu0 0.0
    %120 = vmatprep.subr.mxu0 0.0
    %121 = vmatpush1.msra.mxu0 0.0
    %122 = vmatprep.subr.mxu0 0.0
    %123 = vmatpush1.msra.mxu0 0.0
    %124 = vmatprep.mubr.f32.mxu0 0.0
    %125 = vmatmul.mubr.f32.gmra.mrb[0].mxu0 %v58
    %v126 = vpop.f32.mrb[0].mxu0
    %v127 = vadd.f32 %v54, %v126
    %v128 = vpop.f32.mrb[0].mxu0
    %129 = vdwg.mxu0
    %v130 = vadd.f32 %v44, %v127
    %v131 = vxor.u32 %v130, 2147483648
    %v132 = vmul.f32 %v131, 1.442695
    %v133 = vpow.pop %v132
    %v134 = vadd.f32 %v133, 1.0
    %v135 = vrcp.pop %v134
    %v136 = vmul.f32 1.0, %v135
    %138 = vrot.lane.b32.xlu0 %v127, 64
    %v139 = vpop.permute.xlu0 %138
    %v141 = vmul.f32 %v136, %v139
    %143 = vrot.lane.b32.xlu0 %v141, 64
    %v144 = vpop.permute.xlu0 %143
    %v146 = vadd.f32 %v44, %v144
    %v147 = vtanh.pop %v146
    %v148 = vsub.f32 1.0, %v136
    %150 = vrot.lane.b32.xlu0 %v147, 96
    %v151 = vpop.permute.xlu0 %150
    %v153 = vmul.f32 %v148, %v151
    %154 = vrot.lane.b32.xlu0 %v41, 32
    %v155 = vpop.permute.xlu0 %154
    %v157 = vmul.f32 %v136, %v155
    %v158 = vadd.f32 %v153, %v157
    %v159 = vld [vmem:[%s4] sm:$0xff]
    %v160 = vld [vmem:[%s4 + $0x8] sm:$0xff]
    %v161 = vld [vmem:[%s4 + $0x10] sm:$0xff]
    %v162 = vld [vmem:[%s4 + $0x18] sm:$0xff]
    %v163 = vld [vmem:[%s5] sm:$0x1]
    %v165 = vlaneseq
    %v166 = vshrl.u32 %v165, 7
    %v167 = vsub.s32 0, %v166
    %v168 = vrot.slane %v163, %v167
    %171 = vrot.lane.b32.xlu0 %v158, 96
    %v172 = vpop.permute.xlu0 %171
    %v173 = vsel %vm56, %v172, 0
    %175 = vmatprep.subr.mxu0 0.0
    %176 = vmatpush1.msra.mxu0 %v159
    %177 = vmatprep.subr.mxu0 0.0
    %178 = vmatpush1.msra.mxu0 %v160
    %179 = vmatprep.subr.mxu0 0.0
    %180 = vmatpush1.msra.mxu0 %v161
    %181 = vmatprep.subr.mxu0 0.0
    %182 = vmatpush1.msra.mxu0 %v162
    %183 = vmatprep.subr.mxu0 0.0
    %184 = vmatpush1.msra.mxu0 0.0
    %185 = vmatprep.subr.mxu0 0.0
    %186 = vmatpush1.msra.mxu0 0.0
    %187 = vmatprep.subr.mxu0 0.0
    %188 = vmatpush1.msra.mxu0 0.0
    %189 = vmatprep.subr.mxu0 0.0
    %190 = vmatpush1.msra.mxu0 0.0
    %191 = vmatprep.subr.mxu0 0.0
    %192 = vmatpush1.msra.mxu0 0.0
    %193 = vmatprep.subr.mxu0 0.0
    %194 = vmatpush1.msra.mxu0 0.0
    %195 = vmatprep.subr.mxu0 0.0
    %196 = vmatpush1.msra.mxu0 0.0
    %197 = vmatprep.subr.mxu0 0.0
    %198 = vmatpush1.msra.mxu0 0.0
    %199 = vmatprep.subr.mxu0 0.0
    %200 = vmatpush1.msra.mxu0 0.0
    %201 = vmatprep.subr.mxu0 0.0
    %202 = vmatpush1.msra.mxu0 0.0
    %203 = vmatprep.subr.mxu0 0.0
    %204 = vmatpush1.msra.mxu0 0.0
    %205 = vmatprep.subr.mxu0 0.0
    %206 = vmatpush1.msra.mxu0 0.0
    %207 = vmatprep.subr.mxu0 0.0
    %208 = vmatpush1.msra.mxu0 0.0
    %209 = vmatprep.subr.mxu0 0.0
    %210 = vmatpush1.msra.mxu0 0.0
    %211 = vmatprep.subr.mxu0 0.0
    %212 = vmatpush1.msra.mxu0 0.0
    %213 = vmatprep.subr.mxu0 0.0
    %214 = vmatpush1.msra.mxu0 0.0
    %215 = vmatprep.subr.mxu0 0.0
    %216 = vmatpush1.msra.mxu0 0.0
    %217 = vmatprep.subr.mxu0 0.0
    %218 = vmatpush1.msra.mxu0 0.0
    %219 = vmatprep.subr.mxu0 0.0
    %220 = vmatpush1.msra.mxu0 0.0
    %221 = vmatprep.subr.mxu0 0.0
    %222 = vmatpush1.msra.mxu0 0.0
    %223 = vmatprep.subr.mxu0 0.0
    %224 = vmatpush1.msra.mxu0 0.0
    %225 = vmatprep.subr.mxu0 0.0
    %226 = vmatpush1.msra.mxu0 0.0
    %227 = vmatprep.subr.mxu0 0.0
    %228 = vmatpush1.msra.mxu0 0.0
    %229 = vmatprep.subr.mxu0 0.0
    %230 = vmatpush1.msra.mxu0 0.0
    %231 = vmatprep.subr.mxu0 0.0
    %232 = vmatpush1.msra.mxu0 0.0
    %233 = vmatprep.subr.mxu0 0.0
    %234 = vmatpush1.msra.mxu0 0.0
    %235 = vmatprep.subr.mxu0 0.0
    %236 = vmatpush1.msra.mxu0 0.0
    %237 = vmatprep.subr.mxu0 0.0
    %238 = vmatpush1.msra.mxu0 0.0
    %239 = vmatprep.mubr.f32.mxu0 0.0
    %240 = vmatmul.mubr.f32.gmra.mrb[0].mxu0 %v173
    %v241 = vpop.f32.mrb[0].mxu0
    %v242 = vadd.f32 %v168, %v241
    %v243 = vpop.f32.mrb[0].mxu0
    %244 = vdwg.mxu0
    %v245 = vld [vmem:[%s6] sm:$0xff]
    %v246 = vld [vmem:[%s6 + $0x8] sm:$0xff]
    %v247 = vld [vmem:[%s6 + $0x10] sm:$0xff]
    %v248 = vld [vmem:[%s6 + $0x18] sm:$0xff]
    %v249 = vld [vmem:[%s7] sm:$0x1]
    %v251 = vlaneseq
    %v252 = vshrl.u32 %v251, 7
    %v253 = vsub.s32 0, %v252
    %v254 = vrot.slane %v249, %v253
    %v257 = vsel %vm56, %v43, 0
    %259 = vmatprep.subr.mxu0 0.0
    %260 = vmatpush1.msra.mxu0 %v245
    %261 = vmatprep.subr.mxu0 0.0
    %262 = vmatpush1.msra.mxu0 %v246
    %263 = vmatprep.subr.mxu0 0.0
    %264 = vmatpush1.msra.mxu0 %v247
    %265 = vmatprep.subr.mxu0 0.0
    %266 = vmatpush1.msra.mxu0 %v248
    %267 = vmatprep.subr.mxu0 0.0
    %268 = vmatpush1.msra.mxu0 0.0
    %269 = vmatprep.subr.mxu0 0.0
    %270 = vmatpush1.msra.mxu0 0.0
    %271 = vmatprep.subr.mxu0 0.0
    %272 = vmatpush1.msra.mxu0 0.0
    %273 = vmatprep.subr.mxu0 0.0
    %274 = vmatpush1.msra.mxu0 0.0
    %275 = vmatprep.subr.mxu0 0.0
    %276 = vmatpush1.msra.mxu0 0.0
    %277 = vmatprep.subr.mxu0 0.0
    %278 = vmatpush1.msra.mxu0 0.0
    %279 = vmatprep.subr.mxu0 0.0
    %280 = vmatpush1.msra.mxu0 0.0
    %281 = vmatprep.subr.mxu0 0.0
    %282 = vmatpush1.msra.mxu0 0.0
    %283 = vmatprep.subr.mxu0 0.0
    %284 = vmatpush1.msra.mxu0 0.0
    %285 = vmatprep.subr.mxu0 0.0
    %286 = vmatpush1.msra.mxu0 0.0
    %287 = vmatprep.subr.mxu0 0.0
    %288 = vmatpush1.msra.mxu0 0.0
    %289 = vmatprep.subr.mxu0 0.0
    %290 = vmatpush1.msra.mxu0 0.0
    %291 = vmatprep.subr.mxu0 0.0
    %292 = vmatpush1.msra.mxu0 0.0
    %293 = vmatprep.subr.mxu0 0.0
    %294 = vmatpush1.msra.mxu0 0.0
    %295 = vmatprep.subr.mxu0 0.0
    %296 = vmatpush1.msra.mxu0 0.0
    %297 = vmatprep.subr.mxu0 0.0
    %298 = vmatpush1.msra.mxu0 0.0
    %299 = vmatprep.subr.mxu0 0.0
    %300 = vmatpush1.msra.mxu0 0.0
    %301 = vmatprep.subr.mxu0 0.0
    %302 = vmatpush1.msra.mxu0 0.0
    %303 = vmatprep.subr.mxu0 0.0
    %304 = vmatpush1.msra.mxu0 0.0
    %305 = vmatprep.subr.mxu0 0.0
    %306 = vmatpush1.msra.mxu0 0.0
    %307 = vmatprep.subr.mxu0 0.0
    %308 = vmatpush1.msra.mxu0 0.0
    %309 = vmatprep.subr.mxu0 0.0
    %310 = vmatpush1.msra.mxu0 0.0
    %311 = vmatprep.subr.mxu0 0.0
    %312 = vmatpush1.msra.mxu0 0.0
    %313 = vmatprep.subr.mxu0 0.0
    %314 = vmatpush1.msra.mxu0 0.0
    %315 = vmatprep.subr.mxu0 0.0
    %316 = vmatpush1.msra.mxu0 0.0
    %317 = vmatprep.subr.mxu0 0.0
    %318 = vmatpush1.msra.mxu0 0.0
    %319 = vmatprep.subr.mxu0 0.0
    %320 = vmatpush1.msra.mxu0 0.0
    %321 = vmatprep.subr.mxu0 0.0
    %322 = vmatpush1.msra.mxu0 0.0
    %323 = vmatprep.mubr.f32.mxu0 0.0
    %324 = vmatmul.mubr.f32.gmra.mrb[0].mxu0 %v257
    %v325 = vpop.f32.mrb[0].mxu0
    %v326 = vadd.f32 %v254, %v325
    %v327 = vpop.f32.mrb[0].mxu0
    %328 = vdwg.mxu0
    %v329 = vadd.f32 %v242, %v326
    %v330 = vxor.u32 %v329, 2147483648
    %v331 = vmul.f32 %v330, 1.442695
    %v332 = vpow.pop %v331
    %v333 = vadd.f32 %v332, 1.0
    %v334 = vrcp.pop %v333
    %v335 = vmul.f32 1.0, %v334
    %337 = vrot.lane.b32.xlu0 %v326, 64
    %v338 = vpop.permute.xlu0 %337
    %v340 = vmul.f32 %v335, %v338
    %342 = vrot.lane.b32.xlu0 %v340, 64
    %v343 = vpop.permute.xlu0 %342
    %v345 = vadd.f32 %v242, %v343
    %v346 = vtanh.pop %v345
    %v347 = vsub.f32 1.0, %v335
    %349 = vrot.lane.b32.xlu0 %v346, 96
    %v350 = vpop.permute.xlu0 %349
    %v352 = vmul.f32 %v347, %v350
    %353 = vrot.lane.b32.xlu0 %v43, 32
    %v354 = vpop.permute.xlu0 %353
    %v356 = vmul.f32 %v335, %v354
    %v357 = vadd.f32 %v352, %v356
    %359 = vrot.lane.b32.xlu0 %v357, 96
    %v360 = vpop.permute.xlu0 %359
    %vm362 = vcmask 254976
    %363 = vst.msk [vmem:[%s8] sm:$0x3] %vm362, %v360
    %s364 = scalar_lea.vmem %s0, 2
    %v365 = vld [vmem:[%s364] sm:$0x3]
    %v366 = vld [vmem:[%s2] sm:$0xff]
    %v367 = vld [vmem:[%s2 + $0x8] sm:$0xff]
    %v368 = vld [vmem:[%s2 + $0x10] sm:$0xff]
    %v369 = vld [vmem:[%s2 + $0x18] sm:$0xff]
    %v370 = vld [vmem:[%s3] sm:$0x1]
    %v372 = vlaneseq
    %v373 = vshrl.u32 %v372, 7
    %v374 = vsub.s32 0, %v373
    %v375 = vrot.slane %v370, %v374
    %377 = vmatprep.subr.mxu0 0.0
    %378 = vmatpush1.msra.mxu0 %v366
    %379 = vmatprep.subr.mxu0 0.0
    %380 = vmatpush1.msra.mxu0 %v367
    %381 = vmatprep.subr.mxu0 0.0
    %382 = vmatpush1.msra.mxu0 %v368
    %383 = vmatprep.subr.mxu0 0.0
    %384 = vmatpush1.msra.mxu0 %v369
    %385 = vmatprep.subr.mxu0 0.0
    %386 = vmatpush1.msra.mxu0 0.0
    %387 = vmatprep.subr.mxu0 0.0
    %388 = vmatpush1.msra.mxu0 0.0
    %389 = vmatprep.subr.mxu0 0.0
    %390 = vmatpush1.msra.mxu0 0.0
    %391 = vmatprep.subr.mxu0 0.0
    %392 = vmatpush1.msra.mxu0 0.0
    %393 = vmatprep.subr.mxu0 0.0
    %394 = vmatpush1.msra.mxu0 0.0
    %395 = vmatprep.subr.mxu0 0.0
    %396 = vmatpush1.msra.mxu0 0.0
    %397 = vmatprep.subr.mxu0 0.0
    %398 = vmatpush1.msra.mxu0 0.0
    %399 = vmatprep.subr.mxu0 0.0
    %400 = vmatpush1.msra.mxu0 0.0
    %401 = vmatprep.subr.mxu0 0.0
    %402 = vmatpush1.msra.mxu0 0.0
    %403 = vmatprep.subr.mxu0 0.0
    %404 = vmatpush1.msra.mxu0 0.0
    %405 = vmatprep.subr.mxu0 0.0
    %406 = vmatpush1.msra.mxu0 0.0
    %407 = vmatprep.subr.mxu0 0.0
    %408 = vmatpush1.msra.mxu0 0.0
    %409 = vmatprep.subr.mxu0 0.0
    %410 = vmatpush1.msra.mxu0 0.0
    %411 = vmatprep.subr.mxu0 0.0
    %412 = vmatpush1.msra.mxu0 0.0
    %413 = vmatprep.subr.mxu0 0.0
    %414 = vmatpush1.msra.mxu0 0.0
    %415 = vmatprep.subr.mxu0 0.0
    %416 = vmatpush1.msra.mxu0 0.0
    %417 = vmatprep.subr.mxu0 0.0
    %418 = vmatpush1.msra.mxu0 0.0
    %419 = vmatprep.subr.mxu0 0.0
    %420 = vmatpush1.msra.mxu0 0.0
    %421 = vmatprep.subr.mxu0 0.0
    %422 = vmatpush1.msra.mxu0 0.0
    %423 = vmatprep.subr.mxu0 0.0
    %424 = vmatpush1.msra.mxu0 0.0
    %425 = vmatprep.subr.mxu0 0.0
    %426 = vmatpush1.msra.mxu0 0.0
    %427 = vmatprep.subr.mxu0 0.0
    %428 = vmatpush1.msra.mxu0 0.0
    %429 = vmatprep.subr.mxu0 0.0
    %430 = vmatpush1.msra.mxu0 0.0
    %431 = vmatprep.subr.mxu0 0.0
    %432 = vmatpush1.msra.mxu0 0.0
    %433 = vmatprep.subr.mxu0 0.0
    %434 = vmatpush1.msra.mxu0 0.0
    %435 = vmatprep.subr.mxu0 0.0
    %436 = vmatpush1.msra.mxu0 0.0
    %437 = vmatprep.subr.mxu0 0.0
    %438 = vmatpush1.msra.mxu0 0.0
    %439 = vmatprep.subr.mxu0 0.0
    %440 = vmatpush1.msra.mxu0 0.0
    %441 = vmatprep.mubr.f32.mxu0 0.0
    %442 = vmatmul.mubr.f32.gmra.mrb[0].mxu0 %v173
    %v443 = vpop.f32.mrb[0].mxu0
    %v444 = vadd.f32 %v375, %v443
    %v445 = vpop.f32.mrb[0].mxu0
    %446 = vdwg.mxu0
    %v447 = vadd.f32 %v365, %v444
    %v448 = vxor.u32 %v447, 2147483648
    %v449 = vmul.f32 %v448, 1.442695
    %v450 = vpow.pop %v449
    %v451 = vadd.f32 %v450, 1.0
    %v452 = vrcp.pop %v451
    %v453 = vmul.f32 1.0, %v452
    %455 = vrot.lane.b32.xlu0 %v444, 64
    %v456 = vpop.permute.xlu0 %455
    %v458 = vmul.f32 %v453, %v456
    %460 = vrot.lane.b32.xlu0 %v458, 64
    %v461 = vpop.permute.xlu0 %460
    %v463 = vadd.f32 %v365, %v461
    %v464 = vtanh.pop %v463
    %v465 = vsub.f32 1.0, %v453
    %467 = vrot.lane.b32.xlu0 %v464, 96
    %v468 = vpop.permute.xlu0 %467
    %v470 = vmul.f32 %v465, %v468
    %v471 = vmul.f32 %v453, %v158
    %v472 = vadd.f32 %v470, %v471
    %v473 = vld [vmem:[%s4] sm:$0xff]
    %v474 = vld [vmem:[%s4 + $0x8] sm:$0xff]
    %v475 = vld [vmem:[%s4 + $0x10] sm:$0xff]
    %v476 = vld [vmem:[%s4 + $0x18] sm:$0xff]
    %v477 = vld [vmem:[%s5] sm:$0x1]
    %v479 = vlaneseq
    %v480 = vshrl.u32 %v479, 7
    %v481 = vsub.s32 0, %v480
    %v482 = vrot.slane %v477, %v481
    %485 = vrot.lane.b32.xlu0 %v472, 96
    %v486 = vpop.permute.xlu0 %485
    %v487 = vsel %vm56, %v486, 0
    %489 = vmatprep.subr.mxu0 0.0
    %490 = vmatpush1.msra.mxu0 %v473
    %491 = vmatprep.subr.mxu0 0.0
    %492 = vmatpush1.msra.mxu0 %v474
    %493 = vmatprep.subr.mxu0 0.0
    %494 = vmatpush1.msra.mxu0 %v475
    %495 = vmatprep.subr.mxu0 0.0
    %496 = vmatpush1.msra.mxu0 %v476
    %497 = vmatprep.subr.mxu0 0.0
    %498 = vmatpush1.msra.mxu0 0.0
    %499 = vmatprep.subr.mxu0 0.0
    %500 = vmatpush1.msra.mxu0 0.0
    %501 = vmatprep.subr.mxu0 0.0
    %502 = vmatpush1.msra.mxu0 0.0
    %503 = vmatprep.subr.mxu0 0.0
    %504 = vmatpush1.msra.mxu0 0.0
    %505 = vmatprep.subr.mxu0 0.0
    %506 = vmatpush1.msra.mxu0 0.0
    %507 = vmatprep.subr.mxu0 0.0
    %508 = vmatpush1.msra.mxu0 0.0
    %509 = vmatprep.subr.mxu0 0.0
    %510 = vmatpush1.msra.mxu0 0.0
    %511 = vmatprep.subr.mxu0 0.0
    %512 = vmatpush1.msra.mxu0 0.0
    %513 = vmatprep.subr.mxu0 0.0
    %514 = vmatpush1.msra.mxu0 0.0
    %515 = vmatprep.subr.mxu0 0.0
    %516 = vmatpush1.msra.mxu0 0.0
    %517 = vmatprep.subr.mxu0 0.0
    %518 = vmatpush1.msra.mxu0 0.0
    %519 = vmatprep.subr.mxu0 0.0
    %520 = vmatpush1.msra.mxu0 0.0
    %521 = vmatprep.subr.mxu0 0.0
    %522 = vmatpush1.msra.mxu0 0.0
    %523 = vmatprep.subr.mxu0 0.0
    %524 = vmatpush1.msra.mxu0 0.0
    %525 = vmatprep.subr.mxu0 0.0
    %526 = vmatpush1.msra.mxu0 0.0
    %527 = vmatprep.subr.mxu0 0.0
    %528 = vmatpush1.msra.mxu0 0.0
    %529 = vmatprep.subr.mxu0 0.0
    %530 = vmatpush1.msra.mxu0 0.0
    %531 = vmatprep.subr.mxu0 0.0
    %532 = vmatpush1.msra.mxu0 0.0
    %533 = vmatprep.subr.mxu0 0.0
    %534 = vmatpush1.msra.mxu0 0.0
    %535 = vmatprep.subr.mxu0 0.0
    %536 = vmatpush1.msra.mxu0 0.0
    %537 = vmatprep.subr.mxu0 0.0
    %538 = vmatpush1.msra.mxu0 0.0
    %539 = vmatprep.subr.mxu0 0.0
    %540 = vmatpush1.msra.mxu0 0.0
    %541 = vmatprep.subr.mxu0 0.0
    %542 = vmatpush1.msra.mxu0 0.0
    %543 = vmatprep.subr.mxu0 0.0
    %544 = vmatpush1.msra.mxu0 0.0
    %545 = vmatprep.subr.mxu0 0.0
    %546 = vmatpush1.msra.mxu0 0.0
    %547 = vmatprep.subr.mxu0 0.0
    %548 = vmatpush1.msra.mxu0 0.0
    %549 = vmatprep.subr.mxu0 0.0
    %550 = vmatpush1.msra.mxu0 0.0
    %551 = vmatprep.subr.mxu0 0.0
    %552 = vmatpush1.msra.mxu0 0.0
    %553 = vmatprep.mubr.f32.mxu0 0.0
    %554 = vmatmul.mubr.f32.gmra.mrb[0].mxu0 %v487
    %v555 = vpop.f32.mrb[0].mxu0
    %v556 = vadd.f32 %v482, %v555
    %v557 = vpop.f32.mrb[0].mxu0
    %558 = vdwg.mxu0
    %v559 = vld [vmem:[%s6] sm:$0xff]
    %v560 = vld [vmem:[%s6 + $0x8] sm:$0xff]
    %v561 = vld [vmem:[%s6 + $0x10] sm:$0xff]
    %v562 = vld [vmem:[%s6 + $0x18] sm:$0xff]
    %v563 = vld [vmem:[%s7] sm:$0x1]
    %v565 = vlaneseq
    %v566 = vshrl.u32 %v565, 7
    %v567 = vsub.s32 0, %v566
    %v568 = vrot.slane %v563, %v567
    %v570 = vsel %vm56, %v360, 0
    %572 = vmatprep.subr.mxu0 0.0
    %573 = vmatpush1.msra.mxu0 %v559
    %574 = vmatprep.subr.mxu0 0.0
    %575 = vmatpush1.msra.mxu0 %v560
    %576 = vmatprep.subr.mxu0 0.0
    %577 = vmatpush1.msra.mxu0 %v561
    %578 = vmatprep.subr.mxu0 0.0
    %579 = vmatpush1.msra.mxu0 %v562
    %580 = vmatprep.subr.mxu0 0.0
    %581 = vmatpush1.msra.mxu0 0.0
    %582 = vmatprep.subr.mxu0 0.0
    %583 = vmatpush1.msra.mxu0 0.0
    %584 = vmatprep.subr.mxu0 0.0
    %585 = vmatpush1.msra.mxu0 0.0
    %586 = vmatprep.subr.mxu0 0.0
    %587 = vmatpush1.msra.mxu0 0.0
    %588 = vmatprep.subr.mxu0 0.0
    %589 = vmatpush1.msra.mxu0 0.0
    %590 = vmatprep.subr.mxu0 0.0
    %591 = vmatpush1.msra.mxu0 0.0
    %592 = vmatprep.subr.mxu0 0.0
    %593 = vmatpush1.msra.mxu0 0.0
    %594 = vmatprep.subr.mxu0 0.0
    %595 = vmatpush1.msra.mxu0 0.0
    %596 = vmatprep.subr.mxu0 0.0
    %597 = vmatpush1.msra.mxu0 0.0
    %598 = vmatprep.subr.mxu0 0.0
    %599 = vmatpush1.msra.mxu0 0.0
    %600 = vmatprep.subr.mxu0 0.0
    %601 = vmatpush1.msra.mxu0 0.0
    %602 = vmatprep.subr.mxu0 0.0
    %603 = vmatpush1.msra.mxu0 0.0
    %604 = vmatprep.subr.mxu0 0.0
    %605 = vmatpush1.msra.mxu0 0.0
    %606 = vmatprep.subr.mxu0 0.0
    %607 = vmatpush1.msra.mxu0 0.0
    %608 = vmatprep.subr.mxu0 0.0
    %609 = vmatpush1.msra.mxu0 0.0
    %610 = vmatprep.subr.mxu0 0.0
    %611 = vmatpush1.msra.mxu0 0.0
    %612 = vmatprep.subr.mxu0 0.0
    %613 = vmatpush1.msra.mxu0 0.0
    %614 = vmatprep.subr.mxu0 0.0
    %615 = vmatpush1.msra.mxu0 0.0
    %616 = vmatprep.subr.mxu0 0.0
    %617 = vmatpush1.msra.mxu0 0.0
    %618 = vmatprep.subr.mxu0 0.0
    %619 = vmatpush1.msra.mxu0 0.0
    %620 = vmatprep.subr.mxu0 0.0
    %621 = vmatpush1.msra.mxu0 0.0
    %622 = vmatprep.subr.mxu0 0.0
    %623 = vmatpush1.msra.mxu0 0.0
    %624 = vmatprep.subr.mxu0 0.0
    %625 = vmatpush1.msra.mxu0 0.0
    %626 = vmatprep.subr.mxu0 0.0
    %627 = vmatpush1.msra.mxu0 0.0
    %628 = vmatprep.subr.mxu0 0.0
    %629 = vmatpush1.msra.mxu0 0.0
    %630 = vmatprep.subr.mxu0 0.0
    %631 = vmatpush1.msra.mxu0 0.0
    %632 = vmatprep.subr.mxu0 0.0
    %633 = vmatpush1.msra.mxu0 0.0
    %634 = vmatprep.subr.mxu0 0.0
    %635 = vmatpush1.msra.mxu0 0.0
    %636 = vmatprep.mubr.f32.mxu0 0.0
    %637 = vmatmul.mubr.f32.gmra.mrb[0].mxu0 %v570
    %v638 = vpop.f32.mrb[0].mxu0
    %v639 = vadd.f32 %v568, %v638
    %v640 = vpop.f32.mrb[0].mxu0
    %641 = vdwg.mxu0
    %v642 = vadd.f32 %v556, %v639
    %v643 = vxor.u32 %v642, 2147483648
    %v644 = vmul.f32 %v643, 1.442695
    %v645 = vpow.pop %v644
    %v646 = vadd.f32 %v645, 1.0
    %v647 = vrcp.pop %v646
    %v648 = vmul.f32 1.0, %v647
    %650 = vrot.lane.b32.xlu0 %v639, 64
    %v651 = vpop.permute.xlu0 %650
    %v653 = vmul.f32 %v648, %v651
    %655 = vrot.lane.b32.xlu0 %v653, 64
    %v656 = vpop.permute.xlu0 %655
    %v658 = vadd.f32 %v556, %v656
    %v659 = vtanh.pop %v658
    %v660 = vsub.f32 1.0, %v648
    %662 = vrot.lane.b32.xlu0 %v659, 96
    %v663 = vpop.permute.xlu0 %662
    %v665 = vmul.f32 %v660, %v663
    %v666 = vmul.f32 %v648, %v357
    %v667 = vadd.f32 %v665, %v666
    %669 = vrot.lane.b32.xlu0 %v667, 96
    %v670 = vpop.permute.xlu0 %669
    %s672 = scalar_lea.vmem %s8, 2
    %673 = vst.msk [vmem:[%s672] sm:$0x3] %vm362, %v670
    %s674 = scalar_lea.vmem %s0, 4
    %v675 = vld [vmem:[%s674] sm:$0x3]
    %v676 = vld [vmem:[%s2] sm:$0xff]
    %v677 = vld [vmem:[%s2 + $0x8] sm:$0xff]
    %v678 = vld [vmem:[%s2 + $0x10] sm:$0xff]
    %v679 = vld [vmem:[%s2 + $0x18] sm:$0xff]
    %v680 = vld [vmem:[%s3] sm:$0x1]
    %v682 = vlaneseq
    %v683 = vshrl.u32 %v682, 7
    %v684 = vsub.s32 0, %v683
    %v685 = vrot.slane %v680, %v684
    %687 = vmatprep.subr.mxu0 0.0
    %688 = vmatpush1.msra.mxu0 %v676
    %689 = vmatprep.subr.mxu0 0.0
    %690 = vmatpush1.msra.mxu0 %v677
    %691 = vmatprep.subr.mxu0 0.0
    %692 = vmatpush1.msra.mxu0 %v678
    %693 = vmatprep.subr.mxu0 0.0
    %694 = vmatpush1.msra.mxu0 %v679
    %695 = vmatprep.subr.mxu0 0.0
    %696 = vmatpush1.msra.mxu0 0.0
    %697 = vmatprep.subr.mxu0 0.0
    %698 = vmatpush1.msra.mxu0 0.0
    %699 = vmatprep.subr.mxu0 0.0
    %700 = vmatpush1.msra.mxu0 0.0
    %701 = vmatprep.subr.mxu0 0.0
    %702 = vmatpush1.msra.mxu0 0.0
    %703 = vmatprep.subr.mxu0 0.0
    %704 = vmatpush1.msra.mxu0 0.0
    %705 = vmatprep.subr.mxu0 0.0
    %706 = vmatpush1.msra.mxu0 0.0
    %707 = vmatprep.subr.mxu0 0.0
    %708 = vmatpush1.msra.mxu0 0.0
    %709 = vmatprep.subr.mxu0 0.0
    %710 = vmatpush1.msra.mxu0 0.0
    %711 = vmatprep.subr.mxu0 0.0
    %712 = vmatpush1.msra.mxu0 0.0
    %713 = vmatprep.subr.mxu0 0.0
    %714 = vmatpush1.msra.mxu0 0.0
    %715 = vmatprep.subr.mxu0 0.0
    %716 = vmatpush1.msra.mxu0 0.0
    %717 = vmatprep.subr.mxu0 0.0
    %718 = vmatpush1.msra.mxu0 0.0
    %719 = vmatprep.subr.mxu0 0.0
    %720 = vmatpush1.msra.mxu0 0.0
    %721 = vmatprep.subr.mxu0 0.0
    %722 = vmatpush1.msra.mxu0 0.0
    %723 = vmatprep.subr.mxu0 0.0
    %724 = vmatpush1.msra.mxu0 0.0
    %725 = vmatprep.subr.mxu0 0.0
    %726 = vmatpush1.msra.mxu0 0.0
    %727 = vmatprep.subr.mxu0 0.0
    %728 = vmatpush1.msra.mxu0 0.0
    %729 = vmatprep.subr.mxu0 0.0
    %730 = vmatpush1.msra.mxu0 0.0
    %731 = vmatprep.subr.mxu0 0.0
    %732 = vmatpush1.msra.mxu0 0.0
    %733 = vmatprep.subr.mxu0 0.0
    %734 = vmatpush1.msra.mxu0 0.0
    %735 = vmatprep.subr.mxu0 0.0
    %736 = vmatpush1.msra.mxu0 0.0
    %737 = vmatprep.subr.mxu0 0.0
    %738 = vmatpush1.msra.mxu0 0.0
    %739 = vmatprep.subr.mxu0 0.0
    %740 = vmatpush1.msra.mxu0 0.0
    %741 = vmatprep.subr.mxu0 0.0
    %742 = vmatpush1.msra.mxu0 0.0
    %743 = vmatprep.subr.mxu0 0.0
    %744 = vmatpush1.msra.mxu0 0.0
    %745 = vmatprep.subr.mxu0 0.0
    %746 = vmatpush1.msra.mxu0 0.0
    %747 = vmatprep.subr.mxu0 0.0
    %748 = vmatpush1.msra.mxu0 0.0
    %749 = vmatprep.subr.mxu0 0.0
    %750 = vmatpush1.msra.mxu0 0.0
    %751 = vmatprep.mubr.f32.mxu0 0.0
    %752 = vmatmul.mubr.f32.gmra.mrb[0].mxu0 %v487
    %v753 = vpop.f32.mrb[0].mxu0
    %v754 = vadd.f32 %v685, %v753
    %v755 = vpop.f32.mrb[0].mxu0
    %756 = vdwg.mxu0
    %v757 = vadd.f32 %v675, %v754
    %v758 = vxor.u32 %v757, 2147483648
    %v759 = vmul.f32 %v758, 1.442695
    %v760 = vpow.pop %v759
    %v761 = vadd.f32 %v760, 1.0
    %v762 = vrcp.pop %v761
    %v763 = vmul.f32 1.0, %v762
    %765 = vrot.lane.b32.xlu0 %v754, 64
    %v766 = vpop.permute.xlu0 %765
    %v768 = vmul.f32 %v763, %v766
    %770 = vrot.lane.b32.xlu0 %v768, 64
    %v771 = vpop.permute.xlu0 %770
    %v773 = vadd.f32 %v675, %v771
    %v774 = vtanh.pop %v773
    %v775 = vsub.f32 1.0, %v763
    %777 = vrot.lane.b32.xlu0 %v774, 96
    %v778 = vpop.permute.xlu0 %777
    %v780 = vmul.f32 %v775, %v778
    %v781 = vmul.f32 %v763, %v472
    %v782 = vadd.f32 %v780, %v781
    %v783 = vld [vmem:[%s4] sm:$0xff]
    %v784 = vld [vmem:[%s4 + $0x8] sm:$0xff]
    %v785 = vld [vmem:[%s4 + $0x10] sm:$0xff]
    %v786 = vld [vmem:[%s4 + $0x18] sm:$0xff]
    %v787 = vld [vmem:[%s5] sm:$0x1]
    %v789 = vlaneseq
    %v790 = vshrl.u32 %v789, 7
    %v791 = vsub.s32 0, %v790
    %v792 = vrot.slane %v787, %v791
    %795 = vrot.lane.b32.xlu0 %v782, 96
    %v796 = vpop.permute.xlu0 %795
    %v797 = vsel %vm56, %v796, 0
    %799 = vmatprep.subr.mxu0 0.0
    %800 = vmatpush1.msra.mxu0 %v783
    %801 = vmatprep.subr.mxu0 0.0
    %802 = vmatpush1.msra.mxu0 %v784
    %803 = vmatprep.subr.mxu0 0.0
    %804 = vmatpush1.msra.mxu0 %v785
    %805 = vmatprep.subr.mxu0 0.0
    %806 = vmatpush1.msra.mxu0 %v786
    %807 = vmatprep.subr.mxu0 0.0
    %808 = vmatpush1.msra.mxu0 0.0
    %809 = vmatprep.subr.mxu0 0.0
    %810 = vmatpush1.msra.mxu0 0.0
    %811 = vmatprep.subr.mxu0 0.0
    %812 = vmatpush1.msra.mxu0 0.0
    %813 = vmatprep.subr.mxu0 0.0
    %814 = vmatpush1.msra.mxu0 0.0
    %815 = vmatprep.subr.mxu0 0.0
    %816 = vmatpush1.msra.mxu0 0.0
    %817 = vmatprep.subr.mxu0 0.0
    %818 = vmatpush1.msra.mxu0 0.0
    %819 = vmatprep.subr.mxu0 0.0
    %820 = vmatpush1.msra.mxu0 0.0
    %821 = vmatprep.subr.mxu0 0.0
    %822 = vmatpush1.msra.mxu0 0.0
    %823 = vmatprep.subr.mxu0 0.0
    %824 = vmatpush1.msra.mxu0 0.0
    %825 = vmatprep.subr.mxu0 0.0
    %826 = vmatpush1.msra.mxu0 0.0
    %827 = vmatprep.subr.mxu0 0.0
    %828 = vmatpush1.msra.mxu0 0.0
    %829 = vmatprep.subr.mxu0 0.0
    %830 = vmatpush1.msra.mxu0 0.0
    %831 = vmatprep.subr.mxu0 0.0
    %832 = vmatpush1.msra.mxu0 0.0
    %833 = vmatprep.subr.mxu0 0.0
    %834 = vmatpush1.msra.mxu0 0.0
    %835 = vmatprep.subr.mxu0 0.0
    %836 = vmatpush1.msra.mxu0 0.0
    %837 = vmatprep.subr.mxu0 0.0
    %838 = vmatpush1.msra.mxu0 0.0
    %839 = vmatprep.subr.mxu0 0.0
    %840 = vmatpush1.msra.mxu0 0.0
    %841 = vmatprep.subr.mxu0 0.0
    %842 = vmatpush1.msra.mxu0 0.0
    %843 = vmatprep.subr.mxu0 0.0
    %844 = vmatpush1.msra.mxu0 0.0
    %845 = vmatprep.subr.mxu0 0.0
    %846 = vmatpush1.msra.mxu0 0.0
    %847 = vmatprep.subr.mxu0 0.0
    %848 = vmatpush1.msra.mxu0 0.0
    %849 = vmatprep.subr.mxu0 0.0
    %850 = vmatpush1.msra.mxu0 0.0
    %851 = vmatprep.subr.mxu0 0.0
    %852 = vmatpush1.msra.mxu0 0.0
    %853 = vmatprep.subr.mxu0 0.0
    %854 = vmatpush1.msra.mxu0 0.0
    %855 = vmatprep.subr.mxu0 0.0
    %856 = vmatpush1.msra.mxu0 0.0
    %857 = vmatprep.subr.mxu0 0.0
    %858 = vmatpush1.msra.mxu0 0.0
    %859 = vmatprep.subr.mxu0 0.0
    %860 = vmatpush1.msra.mxu0 0.0
    %861 = vmatprep.subr.mxu0 0.0
    %862 = vmatpush1.msra.mxu0 0.0
    %863 = vmatprep.mubr.f32.mxu0 0.0
    %864 = vmatmul.mubr.f32.gmra.mrb[0].mxu0 %v797
    %v865 = vpop.f32.mrb[0].mxu0
    %v866 = vadd.f32 %v792, %v865
    %v867 = vpop.f32.mrb[0].mxu0
    %868 = vdwg.mxu0
    %v869 = vld [vmem:[%s6] sm:$0xff]
    %v870 = vld [vmem:[%s6 + $0x8] sm:$0xff]
    %v871 = vld [vmem:[%s6 + $0x10] sm:$0xff]
    %v872 = vld [vmem:[%s6 + $0x18] sm:$0xff]
    %v873 = vld [vmem:[%s7] sm:$0x1]
    %v875 = vlaneseq
    %v876 = vshrl.u32 %v875, 7
    %v877 = vsub.s32 0, %v876
    %v878 = vrot.slane %v873, %v877
    %v880 = vsel %vm56, %v670, 0
    %882 = vmatprep.subr.mxu0 0.0
    %883 = vmatpush1.msra.mxu0 %v869
    %884 = vmatprep.subr.mxu0 0.0
    %885 = vmatpush1.msra.mxu0 %v870
    %886 = vmatprep.subr.mxu0 0.0
    %887 = vmatpush1.msra.mxu0 %v871
    %888 = vmatprep.subr.mxu0 0.0
    %889 = vmatpush1.msra.mxu0 %v872
    %890 = vmatprep.subr.mxu0 0.0
    %891 = vmatpush1.msra.mxu0 0.0
    %892 = vmatprep.subr.mxu0 0.0
    %893 = vmatpush1.msra.mxu0 0.0
    %894 = vmatprep.subr.mxu0 0.0
    %895 = vmatpush1.msra.mxu0 0.0
    %896 = vmatprep.subr.mxu0 0.0
    %897 = vmatpush1.msra.mxu0 0.0
    %898 = vmatprep.subr.mxu0 0.0
    %899 = vmatpush1.msra.mxu0 0.0
    %900 = vmatprep.subr.mxu0 0.0
    %901 = vmatpush1.msra.mxu0 0.0
    %902 = vmatprep.subr.mxu0 0.0
    %903 = vmatpush1.msra.mxu0 0.0
    %904 = vmatprep.subr.mxu0 0.0
    %905 = vmatpush1.msra.mxu0 0.0
    %906 = vmatprep.subr.mxu0 0.0
    %907 = vmatpush1.msra.mxu0 0.0
    %908 = vmatprep.subr.mxu0 0.0
    %909 = vmatpush1.msra.mxu0 0.0
    %910 = vmatprep.subr.mxu0 0.0
    %911 = vmatpush1.msra.mxu0 0.0
    %912 = vmatprep.subr.mxu0 0.0
    %913 = vmatpush1.msra.mxu0 0.0
    %914 = vmatprep.subr.mxu0 0.0
    %915 = vmatpush1.msra.mxu0 0.0
    %916 = vmatprep.subr.mxu0 0.0
    %917 = vmatpush1.msra.mxu0 0.0
    %918 = vmatprep.subr.mxu0 0.0
    %919 = vmatpush1.msra.mxu0 0.0
    %920 = vmatprep.subr.mxu0 0.0
    %921 = vmatpush1.msra.mxu0 0.0
    %922 = vmatprep.subr.mxu0 0.0
    %923 = vmatpush1.msra.mxu0 0.0
    %924 = vmatprep.subr.mxu0 0.0
    %925 = vmatpush1.msra.mxu0 0.0
    %926 = vmatprep.subr.mxu0 0.0
    %927 = vmatpush1.msra.mxu0 0.0
    %928 = vmatprep.subr.mxu0 0.0
    %929 = vmatpush1.msra.mxu0 0.0
    %930 = vmatprep.subr.mxu0 0.0
    %931 = vmatpush1.msra.mxu0 0.0
    %932 = vmatprep.subr.mxu0 0.0
    %933 = vmatpush1.msra.mxu0 0.0
    %934 = vmatprep.subr.mxu0 0.0
    %935 = vmatpush1.msra.mxu0 0.0
    %936 = vmatprep.subr.mxu0 0.0
    %937 = vmatpush1.msra.mxu0 0.0
    %938 = vmatprep.subr.mxu0 0.0
    %939 = vmatpush1.msra.mxu0 0.0
    %940 = vmatprep.subr.mxu0 0.0
    %941 = vmatpush1.msra.mxu0 0.0
    %942 = vmatprep.subr.mxu0 0.0
    %943 = vmatpush1.msra.mxu0 0.0
    %944 = vmatprep.subr.mxu0 0.0
    %945 = vmatpush1.msra.mxu0 0.0
    %946 = vmatprep.mubr.f32.mxu0 0.0
    %947 = vmatmul.mubr.f32.gmra.mrb[0].mxu0 %v880
    %v948 = vpop.f32.mrb[0].mxu0
    %v949 = vadd.f32 %v878, %v948
    %v950 = vpop.f32.mrb[0].mxu0
    %951 = vdwg.mxu0
    %v952 = vadd.f32 %v866, %v949
    %v953 = vxor.u32 %v952, 2147483648
    %v954 = vmul.f32 %v953, 1.442695
    %v955 = vpow.pop %v954
    %v956 = vadd.f32 %v955, 1.0
    %v957 = vrcp.pop %v956
    %v958 = vmul.f32 1.0, %v957
    %960 = vrot.lane.b32.xlu0 %v949, 64
    %v961 = vpop.permute.xlu0 %960
    %v963 = vmul.f32 %v958, %v961
    %965 = vrot.lane.b32.xlu0 %v963, 64
    %v966 = vpop.permute.xlu0 %965
    %v968 = vadd.f32 %v866, %v966
    %v969 = vtanh.pop %v968
    %v970 = vsub.f32 1.0, %v958
    %972 = vrot.lane.b32.xlu0 %v969, 96
    %v973 = vpop.permute.xlu0 %972
    %v975 = vmul.f32 %v970, %v973
    %v976 = vmul.f32 %v958, %v667
    %v977 = vadd.f32 %v975, %v976
    %979 = vrot.lane.b32.xlu0 %v977, 96
    %v980 = vpop.permute.xlu0 %979
    %s982 = scalar_lea.vmem %s8, 4
    %983 = vst.msk [vmem:[%s982] sm:$0x3] %vm362, %v980
    %s984 = scalar_lea.vmem %s0, 6
    %v985 = vld [vmem:[%s984] sm:$0x3]
    %v986 = vld [vmem:[%s2] sm:$0xff]
    %v987 = vld [vmem:[%s2 + $0x8] sm:$0xff]
    %v988 = vld [vmem:[%s2 + $0x10] sm:$0xff]
    %v989 = vld [vmem:[%s2 + $0x18] sm:$0xff]
    %v990 = vld [vmem:[%s3] sm:$0x1]
    %v992 = vlaneseq
    %v993 = vshrl.u32 %v992, 7
    %v994 = vsub.s32 0, %v993
    %v995 = vrot.slane %v990, %v994
    %997 = vmatprep.subr.mxu0 0.0
    %998 = vmatpush1.msra.mxu0 %v986
    %999 = vmatprep.subr.mxu0 0.0
    %1000 = vmatpush1.msra.mxu0 %v987
    %1001 = vmatprep.subr.mxu0 0.0
    %1002 = vmatpush1.msra.mxu0 %v988
    %1003 = vmatprep.subr.mxu0 0.0
    %1004 = vmatpush1.msra.mxu0 %v989
    %1005 = vmatprep.subr.mxu0 0.0
    %1006 = vmatpush1.msra.mxu0 0.0
    %1007 = vmatprep.subr.mxu0 0.0
    %1008 = vmatpush1.msra.mxu0 0.0
    %1009 = vmatprep.subr.mxu0 0.0
    %1010 = vmatpush1.msra.mxu0 0.0
    %1011 = vmatprep.subr.mxu0 0.0
    %1012 = vmatpush1.msra.mxu0 0.0
    %1013 = vmatprep.subr.mxu0 0.0
    %1014 = vmatpush1.msra.mxu0 0.0
    %1015 = vmatprep.subr.mxu0 0.0
    %1016 = vmatpush1.msra.mxu0 0.0
    %1017 = vmatprep.subr.mxu0 0.0
    %1018 = vmatpush1.msra.mxu0 0.0
    %1019 = vmatprep.subr.mxu0 0.0
    %1020 = vmatpush1.msra.mxu0 0.0
    %1021 = vmatprep.subr.mxu0 0.0
    %1022 = vmatpush1.msra.mxu0 0.0
    %1023 = vmatprep.subr.mxu0 0.0
    %1024 = vmatpush1.msra.mxu0 0.0
    %1025 = vmatprep.subr.mxu0 0.0
    %1026 = vmatpush1.msra.mxu0 0.0
    %1027 = vmatprep.subr.mxu0 0.0
    %1028 = vmatpush1.msra.mxu0 0.0
    %1029 = vmatprep.subr.mxu0 0.0
    %1030 = vmatpush1.msra.mxu0 0.0
    %1031 = vmatprep.subr.mxu0 0.0
    %1032 = vmatpush1.msra.mxu0 0.0
    %1033 = vmatprep.subr.mxu0 0.0
    %1034 = vmatpush1.msra.mxu0 0.0
    %1035 = vmatprep.subr.mxu0 0.0
    %1036 = vmatpush1.msra.mxu0 0.0
    %1037 = vmatprep.subr.mxu0 0.0
    %1038 = vmatpush1.msra.mxu0 0.0
    %1039 = vmatprep.subr.mxu0 0.0
    %1040 = vmatpush1.msra.mxu0 0.0
    %1041 = vmatprep.subr.mxu0 0.0
    %1042 = vmatpush1.msra.mxu0 0.0
    %1043 = vmatprep.subr.mxu0 0.0
    %1044 = vmatpush1.msra.mxu0 0.0
    %1045 = vmatprep.subr.mxu0 0.0
    %1046 = vmatpush1.msra.mxu0 0.0
    %1047 = vmatprep.subr.mxu0 0.0
    %1048 = vmatpush1.msra.mxu0 0.0
    %1049 = vmatprep.subr.mxu0 0.0
    %1050 = vmatpush1.msra.mxu0 0.0
    %1051 = vmatprep.subr.mxu0 0.0
    %1052 = vmatpush1.msra.mxu0 0.0
    %1053 = vmatprep.subr.mxu0 0.0
    %1054 = vmatpush1.msra.mxu0 0.0
    %1055 = vmatprep.subr.mxu0 0.0
    %1056 = vmatpush1.msra.mxu0 0.0
    %1057 = vmatprep.subr.mxu0 0.0
    %1058 = vmatpush1.msra.mxu0 0.0
    %1059 = vmatprep.subr.mxu0 0.0
    %1060 = vmatpush1.msra.mxu0 0.0
    %1061 = vmatprep.mubr.f32.mxu0 0.0
    %1062 = vmatmul.mubr.f32.gmra.mrb[0].mxu0 %v797
    %v1063 = vpop.f32.mrb[0].mxu0
    %v1064 = vadd.f32 %v995, %v1063
    %v1065 = vpop.f32.mrb[0].mxu0
    %1066 = vdwg.mxu0
    %v1067 = vadd.f32 %v985, %v1064
    %v1068 = vxor.u32 %v1067, 2147483648
    %v1069 = vmul.f32 %v1068, 1.442695
    %v1070 = vpow.pop %v1069
    %v1071 = vadd.f32 %v1070, 1.0
    %v1072 = vrcp.pop %v1071
    %v1073 = vmul.f32 1.0, %v1072
    %1075 = vrot.lane.b32.xlu0 %v1064, 64
    %v1076 = vpop.permute.xlu0 %1075
    %v1078 = vmul.f32 %v1073, %v1076
    %1080 = vrot.lane.b32.xlu0 %v1078, 64
    %v1081 = vpop.permute.xlu0 %1080
    %v1083 = vadd.f32 %v985, %v1081
    %v1084 = vtanh.pop %v1083
    %v1085 = vsub.f32 1.0, %v1073
    %1087 = vrot.lane.b32.xlu0 %v1084, 96
    %v1088 = vpop.permute.xlu0 %1087
    %v1090 = vmul.f32 %v1085, %v1088
    %v1091 = vmul.f32 %v1073, %v782
    %v1092 = vadd.f32 %v1090, %v1091
    %v1093 = vld [vmem:[%s4] sm:$0xff]
    %v1094 = vld [vmem:[%s4 + $0x8] sm:$0xff]
    %v1095 = vld [vmem:[%s4 + $0x10] sm:$0xff]
    %v1096 = vld [vmem:[%s4 + $0x18] sm:$0xff]
    %v1097 = vld [vmem:[%s5] sm:$0x1]
    %v1099 = vlaneseq
    %v1100 = vshrl.u32 %v1099, 7
    %v1101 = vsub.s32 0, %v1100
    %v1102 = vrot.slane %v1097, %v1101
    %1105 = vrot.lane.b32.xlu0 %v1092, 96
    %v1106 = vpop.permute.xlu0 %1105
    %v1107 = vsel %vm56, %v1106, 0
    %1109 = vmatprep.subr.mxu0 0.0
    %1110 = vmatpush1.msra.mxu0 %v1093
    %1111 = vmatprep.subr.mxu0 0.0
    %1112 = vmatpush1.msra.mxu0 %v1094
    %1113 = vmatprep.subr.mxu0 0.0
    %1114 = vmatpush1.msra.mxu0 %v1095
    %1115 = vmatprep.subr.mxu0 0.0
    %1116 = vmatpush1.msra.mxu0 %v1096
    %1117 = vmatprep.subr.mxu0 0.0
    %1118 = vmatpush1.msra.mxu0 0.0
    %1119 = vmatprep.subr.mxu0 0.0
    %1120 = vmatpush1.msra.mxu0 0.0
    %1121 = vmatprep.subr.mxu0 0.0
    %1122 = vmatpush1.msra.mxu0 0.0
    %1123 = vmatprep.subr.mxu0 0.0
    %1124 = vmatpush1.msra.mxu0 0.0
    %1125 = vmatprep.subr.mxu0 0.0
    %1126 = vmatpush1.msra.mxu0 0.0
    %1127 = vmatprep.subr.mxu0 0.0
    %1128 = vmatpush1.msra.mxu0 0.0
    %1129 = vmatprep.subr.mxu0 0.0
    %1130 = vmatpush1.msra.mxu0 0.0
    %1131 = vmatprep.subr.mxu0 0.0
    %1132 = vmatpush1.msra.mxu0 0.0
    %1133 = vmatprep.subr.mxu0 0.0
    %1134 = vmatpush1.msra.mxu0 0.0
    %1135 = vmatprep.subr.mxu0 0.0
    %1136 = vmatpush1.msra.mxu0 0.0
    %1137 = vmatprep.subr.mxu0 0.0
    %1138 = vmatpush1.msra.mxu0 0.0
    %1139 = vmatprep.subr.mxu0 0.0
    %1140 = vmatpush1.msra.mxu0 0.0
    %1141 = vmatprep.subr.mxu0 0.0
    %1142 = vmatpush1.msra.mxu0 0.0
    %1143 = vmatprep.subr.mxu0 0.0
    %1144 = vmatpush1.msra.mxu0 0.0
    %1145 = vmatprep.subr.mxu0 0.0
    %1146 = vmatpush1.msra.mxu0 0.0
    %1147 = vmatprep.subr.mxu0 0.0
    %1148 = vmatpush1.msra.mxu0 0.0
    %1149 = vmatprep.subr.mxu0 0.0
    %1150 = vmatpush1.msra.mxu0 0.0
    %1151 = vmatprep.subr.mxu0 0.0
    %1152 = vmatpush1.msra.mxu0 0.0
    %1153 = vmatprep.subr.mxu0 0.0
    %1154 = vmatpush1.msra.mxu0 0.0
    %1155 = vmatprep.subr.mxu0 0.0
    %1156 = vmatpush1.msra.mxu0 0.0
    %1157 = vmatprep.subr.mxu0 0.0
    %1158 = vmatpush1.msra.mxu0 0.0
    %1159 = vmatprep.subr.mxu0 0.0
    %1160 = vmatpush1.msra.mxu0 0.0
    %1161 = vmatprep.subr.mxu0 0.0
    %1162 = vmatpush1.msra.mxu0 0.0
    %1163 = vmatprep.subr.mxu0 0.0
    %1164 = vmatpush1.msra.mxu0 0.0
    %1165 = vmatprep.subr.mxu0 0.0
    %1166 = vmatpush1.msra.mxu0 0.0
    %1167 = vmatprep.subr.mxu0 0.0
    %1168 = vmatpush1.msra.mxu0 0.0
    %1169 = vmatprep.subr.mxu0 0.0
    %1170 = vmatpush1.msra.mxu0 0.0
    %1171 = vmatprep.subr.mxu0 0.0
    %1172 = vmatpush1.msra.mxu0 0.0
    %1173 = vmatprep.mubr.f32.mxu0 0.0
    %1174 = vmatmul.mubr.f32.gmra.mrb[0].mxu0 %v1107
    %v1175 = vpop.f32.mrb[0].mxu0
    %v1176 = vadd.f32 %v1102, %v1175
    %v1177 = vpop.f32.mrb[0].mxu0
    %1178 = vdwg.mxu0
    %v1179 = vld [vmem:[%s6] sm:$0xff]
    %v1180 = vld [vmem:[%s6 + $0x8] sm:$0xff]
    %v1181 = vld [vmem:[%s6 + $0x10] sm:$0xff]
    %v1182 = vld [vmem:[%s6 + $0x18] sm:$0xff]
    %v1183 = vld [vmem:[%s7] sm:$0x1]
    %v1185 = vlaneseq
    %v1186 = vshrl.u32 %v1185, 7
    %v1187 = vsub.s32 0, %v1186
    %v1188 = vrot.slane %v1183, %v1187
    %v1190 = vsel %vm56, %v980, 0
    %1192 = vmatprep.subr.mxu0 0.0
    %1193 = vmatpush1.msra.mxu0 %v1179
    %1194 = vmatprep.subr.mxu0 0.0
    %1195 = vmatpush1.msra.mxu0 %v1180
    %1196 = vmatprep.subr.mxu0 0.0
    %1197 = vmatpush1.msra.mxu0 %v1181
    %1198 = vmatprep.subr.mxu0 0.0
    %1199 = vmatpush1.msra.mxu0 %v1182
    %1200 = vmatprep.subr.mxu0 0.0
    %1201 = vmatpush1.msra.mxu0 0.0
    %1202 = vmatprep.subr.mxu0 0.0
    %1203 = vmatpush1.msra.mxu0 0.0
    %1204 = vmatprep.subr.mxu0 0.0
    %1205 = vmatpush1.msra.mxu0 0.0
    %1206 = vmatprep.subr.mxu0 0.0
    %1207 = vmatpush1.msra.mxu0 0.0
    %1208 = vmatprep.subr.mxu0 0.0
    %1209 = vmatpush1.msra.mxu0 0.0
    %1210 = vmatprep.subr.mxu0 0.0
    %1211 = vmatpush1.msra.mxu0 0.0
    %1212 = vmatprep.subr.mxu0 0.0
    %1213 = vmatpush1.msra.mxu0 0.0
    %1214 = vmatprep.subr.mxu0 0.0
    %1215 = vmatpush1.msra.mxu0 0.0
    %1216 = vmatprep.subr.mxu0 0.0
    %1217 = vmatpush1.msra.mxu0 0.0
    %1218 = vmatprep.subr.mxu0 0.0
    %1219 = vmatpush1.msra.mxu0 0.0
    %1220 = vmatprep.subr.mxu0 0.0
    %1221 = vmatpush1.msra.mxu0 0.0
    %1222 = vmatprep.subr.mxu0 0.0
    %1223 = vmatpush1.msra.mxu0 0.0
    %1224 = vmatprep.subr.mxu0 0.0
    %1225 = vmatpush1.msra.mxu0 0.0
    %1226 = vmatprep.subr.mxu0 0.0
    %1227 = vmatpush1.msra.mxu0 0.0
    %1228 = vmatprep.subr.mxu0 0.0
    %1229 = vmatpush1.msra.mxu0 0.0
    %1230 = vmatprep.subr.mxu0 0.0
    %1231 = vmatpush1.msra.mxu0 0.0
    %1232 = vmatprep.subr.mxu0 0.0
    %1233 = vmatpush1.msra.mxu0 0.0
    %1234 = vmatprep.subr.mxu0 0.0
    %1235 = vmatpush1.msra.mxu0 0.0
    %1236 = vmatprep.subr.mxu0 0.0
    %1237 = vmatpush1.msra.mxu0 0.0
    %1238 = vmatprep.subr.mxu0 0.0
    %1239 = vmatpush1.msra.mxu0 0.0
    %1240 = vmatprep.subr.mxu0 0.0
    %1241 = vmatpush1.msra.mxu0 0.0
    %1242 = vmatprep.subr.mxu0 0.0
    %1243 = vmatpush1.msra.mxu0 0.0
    %1244 = vmatprep.subr.mxu0 0.0
    %1245 = vmatpush1.msra.mxu0 0.0
    %1246 = vmatprep.subr.mxu0 0.0
    %1247 = vmatpush1.msra.mxu0 0.0
    %1248 = vmatprep.subr.mxu0 0.0
    %1249 = vmatpush1.msra.mxu0 0.0
    %1250 = vmatprep.subr.mxu0 0.0
    %1251 = vmatpush1.msra.mxu0 0.0
    %1252 = vmatprep.subr.mxu0 0.0
    %1253 = vmatpush1.msra.mxu0 0.0
    %1254 = vmatprep.subr.mxu0 0.0
    %1255 = vmatpush1.msra.mxu0 0.0
    %1256 = vmatprep.mubr.f32.mxu0 0.0
    %1257 = vmatmul.mubr.f32.gmra.mrb[0].mxu0 %v1190
    %v1258 = vpop.f32.mrb[0].mxu0
    %v1259 = vadd.f32 %v1188, %v1258
    %v1260 = vpop.f32.mrb[0].mxu0
    %1261 = vdwg.mxu0
    %v1262 = vadd.f32 %v1176, %v1259
    %v1263 = vxor.u32 %v1262, 2147483648
    %v1264 = vmul.f32 %v1263, 1.442695
    %v1265 = vpow.pop %v1264
    %v1266 = vadd.f32 %v1265, 1.0
    %v1267 = vrcp.pop %v1266
    %v1268 = vmul.f32 1.0, %v1267
    %1270 = vrot.lane.b32.xlu0 %v1259, 64
    %v1271 = vpop.permute.xlu0 %1270
    %v1273 = vmul.f32 %v1268, %v1271
    %1275 = vrot.lane.b32.xlu0 %v1273, 64
    %v1276 = vpop.permute.xlu0 %1275
    %v1278 = vadd.f32 %v1176, %v1276
    %v1279 = vtanh.pop %v1278
    %v1280 = vsub.f32 1.0, %v1268
    %1282 = vrot.lane.b32.xlu0 %v1279, 96
    %v1283 = vpop.permute.xlu0 %1282
    %v1285 = vmul.f32 %v1280, %v1283
    %v1286 = vmul.f32 %v1268, %v977
    %v1287 = vadd.f32 %v1285, %v1286
    %1289 = vrot.lane.b32.xlu0 %v1287, 96
    %v1290 = vpop.permute.xlu0 %1289
    %s1292 = scalar_lea.vmem %s8, 6
    %1293 = vst.msk [vmem:[%s1292] sm:$0x3] %vm362, %v1290
    %s1294 = scalar_lea.vmem %s0, 8
    %v1295 = vld [vmem:[%s1294] sm:$0x3]
    %v1296 = vld [vmem:[%s2] sm:$0xff]
    %v1297 = vld [vmem:[%s2 + $0x8] sm:$0xff]
    %v1298 = vld [vmem:[%s2 + $0x10] sm:$0xff]
    %v1299 = vld [vmem:[%s2 + $0x18] sm:$0xff]
    %v1300 = vld [vmem:[%s3] sm:$0x1]
    %v1302 = vlaneseq
    %v1303 = vshrl.u32 %v1302, 7
    %v1304 = vsub.s32 0, %v1303
    %v1305 = vrot.slane %v1300, %v1304
    %1307 = vmatprep.subr.mxu0 0.0
    %1308 = vmatpush1.msra.mxu0 %v1296
    %1309 = vmatprep.subr.mxu0 0.0
    %1310 = vmatpush1.msra.mxu0 %v1297
    %1311 = vmatprep.subr.mxu0 0.0
    %1312 = vmatpush1.msra.mxu0 %v1298
    %1313 = vmatprep.subr.mxu0 0.0
    %1314 = vmatpush1.msra.mxu0 %v1299
    %1315 = vmatprep.subr.mxu0 0.0
    %1316 = vmatpush1.msra.mxu0 0.0
    %1317 = vmatprep.subr.mxu0 0.0
    %1318 = vmatpush1.msra.mxu0 0.0
    %1319 = vmatprep.subr.mxu0 0.0
    %1320 = vmatpush1.msra.mxu0 0.0
    %1321 = vmatprep.subr.mxu0 0.0
    %1322 = vmatpush1.msra.mxu0 0.0
    %1323 = vmatprep.subr.mxu0 0.0
    %1324 = vmatpush1.msra.mxu0 0.0
    %1325 = vmatprep.subr.mxu0 0.0
    %1326 = vmatpush1.msra.mxu0 0.0
    %1327 = vmatprep.subr.mxu0 0.0
    %1328 = vmatpush1.msra.mxu0 0.0
    %1329 = vmatprep.subr.mxu0 0.0
    %1330 = vmatpush1.msra.mxu0 0.0
    %1331 = vmatprep.subr.mxu0 0.0
    %1332 = vmatpush1.msra.mxu0 0.0
    %1333 = vmatprep.subr.mxu0 0.0
    %1334 = vmatpush1.msra.mxu0 0.0
    %1335 = vmatprep.subr.mxu0 0.0
    %1336 = vmatpush1.msra.mxu0 0.0
    %1337 = vmatprep.subr.mxu0 0.0
    %1338 = vmatpush1.msra.mxu0 0.0
    %1339 = vmatprep.subr.mxu0 0.0
    %1340 = vmatpush1.msra.mxu0 0.0
    %1341 = vmatprep.subr.mxu0 0.0
    %1342 = vmatpush1.msra.mxu0 0.0
    %1343 = vmatprep.subr.mxu0 0.0
    %1344 = vmatpush1.msra.mxu0 0.0
    %1345 = vmatprep.subr.mxu0 0.0
    %1346 = vmatpush1.msra.mxu0 0.0
    %1347 = vmatprep.subr.mxu0 0.0
    %1348 = vmatpush1.msra.mxu0 0.0
    %1349 = vmatprep.subr.mxu0 0.0
    %1350 = vmatpush1.msra.mxu0 0.0
    %1351 = vmatprep.subr.mxu0 0.0
    %1352 = vmatpush1.msra.mxu0 0.0
    %1353 = vmatprep.subr.mxu0 0.0
    %1354 = vmatpush1.msra.mxu0 0.0
    %1355 = vmatprep.subr.mxu0 0.0
    %1356 = vmatpush1.msra.mxu0 0.0
    %1357 = vmatprep.subr.mxu0 0.0
    %1358 = vmatpush1.msra.mxu0 0.0
    %1359 = vmatprep.subr.mxu0 0.0
    %1360 = vmatpush1.msra.mxu0 0.0
    %1361 = vmatprep.subr.mxu0 0.0
    %1362 = vmatpush1.msra.mxu0 0.0
    %1363 = vmatprep.subr.mxu0 0.0
    %1364 = vmatpush1.msra.mxu0 0.0
    %1365 = vmatprep.subr.mxu0 0.0
    %1366 = vmatpush1.msra.mxu0 0.0
    %1367 = vmatprep.subr.mxu0 0.0
    %1368 = vmatpush1.msra.mxu0 0.0
    %1369 = vmatprep.subr.mxu0 0.0
    %1370 = vmatpush1.msra.mxu0 0.0
    %1371 = vmatprep.mubr.f32.mxu0 0.0
    %1372 = vmatmul.mubr.f32.gmra.mrb[0].mxu0 %v1107
    %v1373 = vpop.f32.mrb[0].mxu0
    %v1374 = vadd.f32 %v1305, %v1373
    %v1375 = vpop.f32.mrb[0].mxu0
    %1376 = vdwg.mxu0
    %v1377 = vadd.f32 %v1295, %v1374
    %v1378 = vxor.u32 %v1377, 2147483648
    %v1379 = vmul.f32 %v1378, 1.442695
    %v1380 = vpow.pop %v1379
    %v1381 = vadd.f32 %v1380, 1.0
    %v1382 = vrcp.pop %v1381
    %v1383 = vmul.f32 1.0, %v1382
    %1385 = vrot.lane.b32.xlu0 %v1374, 64
    %v1386 = vpop.permute.xlu0 %1385
    %v1388 = vmul.f32 %v1383, %v1386
    %1390 = vrot.lane.b32.xlu0 %v1388, 64
    %v1391 = vpop.permute.xlu0 %1390
    %v1393 = vadd.f32 %v1295, %v1391
    %v1394 = vtanh.pop %v1393
    %v1395 = vsub.f32 1.0, %v1383
    %1397 = vrot.lane.b32.xlu0 %v1394, 96
    %v1398 = vpop.permute.xlu0 %1397
    %v1400 = vmul.f32 %v1395, %v1398
    %v1401 = vmul.f32 %v1383, %v1092
    %v1402 = vadd.f32 %v1400, %v1401
    %v1403 = vld [vmem:[%s4] sm:$0xff]
    %v1404 = vld [vmem:[%s4 + $0x8] sm:$0xff]
    %v1405 = vld [vmem:[%s4 + $0x10] sm:$0xff]
    %v1406 = vld [vmem:[%s4 + $0x18] sm:$0xff]
    %v1407 = vld [vmem:[%s5] sm:$0x1]
    %v1409 = vlaneseq
    %v1410 = vshrl.u32 %v1409, 7
    %v1411 = vsub.s32 0, %v1410
    %v1412 = vrot.slane %v1407, %v1411
    %1415 = vrot.lane.b32.xlu0 %v1402, 96
    %v1416 = vpop.permute.xlu0 %1415
    %v1417 = vsel %vm56, %v1416, 0
    %1419 = vmatprep.subr.mxu0 0.0
    %1420 = vmatpush1.msra.mxu0 %v1403
    %1421 = vmatprep.subr.mxu0 0.0
    %1422 = vmatpush1.msra.mxu0 %v1404
    %1423 = vmatprep.subr.mxu0 0.0
    %1424 = vmatpush1.msra.mxu0 %v1405
    %1425 = vmatprep.subr.mxu0 0.0
    %1426 = vmatpush1.msra.mxu0 %v1406
    %1427 = vmatprep.subr.mxu0 0.0
    %1428 = vmatpush1.msra.mxu0 0.0
    %1429 = vmatprep.subr.mxu0 0.0
    %1430 = vmatpush1.msra.mxu0 0.0
    %1431 = vmatprep.subr.mxu0 0.0
    %1432 = vmatpush1.msra.mxu0 0.0
    %1433 = vmatprep.subr.mxu0 0.0
    %1434 = vmatpush1.msra.mxu0 0.0
    %1435 = vmatprep.subr.mxu0 0.0
    %1436 = vmatpush1.msra.mxu0 0.0
    %1437 = vmatprep.subr.mxu0 0.0
    %1438 = vmatpush1.msra.mxu0 0.0
    %1439 = vmatprep.subr.mxu0 0.0
    %1440 = vmatpush1.msra.mxu0 0.0
    %1441 = vmatprep.subr.mxu0 0.0
    %1442 = vmatpush1.msra.mxu0 0.0
    %1443 = vmatprep.subr.mxu0 0.0
    %1444 = vmatpush1.msra.mxu0 0.0
    %1445 = vmatprep.subr.mxu0 0.0
    %1446 = vmatpush1.msra.mxu0 0.0
    %1447 = vmatprep.subr.mxu0 0.0
    %1448 = vmatpush1.msra.mxu0 0.0
    %1449 = vmatprep.subr.mxu0 0.0
    %1450 = vmatpush1.msra.mxu0 0.0
    %1451 = vmatprep.subr.mxu0 0.0
    %1452 = vmatpush1.msra.mxu0 0.0
    %1453 = vmatprep.subr.mxu0 0.0
    %1454 = vmatpush1.msra.mxu0 0.0
    %1455 = vmatprep.subr.mxu0 0.0
    %1456 = vmatpush1.msra.mxu0 0.0
    %1457 = vmatprep.subr.mxu0 0.0
    %1458 = vmatpush1.msra.mxu0 0.0
    %1459 = vmatprep.subr.mxu0 0.0
    %1460 = vmatpush1.msra.mxu0 0.0
    %1461 = vmatprep.subr.mxu0 0.0
    %1462 = vmatpush1.msra.mxu0 0.0
    %1463 = vmatprep.subr.mxu0 0.0
    %1464 = vmatpush1.msra.mxu0 0.0
    %1465 = vmatprep.subr.mxu0 0.0
    %1466 = vmatpush1.msra.mxu0 0.0
    %1467 = vmatprep.subr.mxu0 0.0
    %1468 = vmatpush1.msra.mxu0 0.0
    %1469 = vmatprep.subr.mxu0 0.0
    %1470 = vmatpush1.msra.mxu0 0.0
    %1471 = vmatprep.subr.mxu0 0.0
    %1472 = vmatpush1.msra.mxu0 0.0
    %1473 = vmatprep.subr.mxu0 0.0
    %1474 = vmatpush1.msra.mxu0 0.0
    %1475 = vmatprep.subr.mxu0 0.0
    %1476 = vmatpush1.msra.mxu0 0.0
    %1477 = vmatprep.subr.mxu0 0.0
    %1478 = vmatpush1.msra.mxu0 0.0
    %1479 = vmatprep.subr.mxu0 0.0
    %1480 = vmatpush1.msra.mxu0 0.0
    %1481 = vmatprep.subr.mxu0 0.0
    %1482 = vmatpush1.msra.mxu0 0.0
    %1483 = vmatprep.mubr.f32.mxu0 0.0
    %1484 = vmatmul.mubr.f32.gmra.mrb[0].mxu0 %v1417
    %v1485 = vpop.f32.mrb[0].mxu0
    %v1486 = vadd.f32 %v1412, %v1485
    %v1487 = vpop.f32.mrb[0].mxu0
    %1488 = vdwg.mxu0
    %v1489 = vld [vmem:[%s6] sm:$0xff]
    %v1490 = vld [vmem:[%s6 + $0x8] sm:$0xff]
    %v1491 = vld [vmem:[%s6 + $0x10] sm:$0xff]
    %v1492 = vld [vmem:[%s6 + $0x18] sm:$0xff]
    %v1493 = vld [vmem:[%s7] sm:$0x1]
    %v1495 = vlaneseq
    %v1496 = vshrl.u32 %v1495, 7
    %v1497 = vsub.s32 0, %v1496
    %v1498 = vrot.slane %v1493, %v1497
    %v1500 = vsel %vm56, %v1290, 0
    %1502 = vmatprep.subr.mxu0 0.0
    %1503 = vmatpush1.msra.mxu0 %v1489
    %1504 = vmatprep.subr.mxu0 0.0
    %1505 = vmatpush1.msra.mxu0 %v1490
    %1506 = vmatprep.subr.mxu0 0.0
    %1507 = vmatpush1.msra.mxu0 %v1491
    %1508 = vmatprep.subr.mxu0 0.0
    %1509 = vmatpush1.msra.mxu0 %v1492
    %1510 = vmatprep.subr.mxu0 0.0
    %1511 = vmatpush1.msra.mxu0 0.0
    %1512 = vmatprep.subr.mxu0 0.0
    %1513 = vmatpush1.msra.mxu0 0.0
    %1514 = vmatprep.subr.mxu0 0.0
    %1515 = vmatpush1.msra.mxu0 0.0
    %1516 = vmatprep.subr.mxu0 0.0
    %1517 = vmatpush1.msra.mxu0 0.0
    %1518 = vmatprep.subr.mxu0 0.0
    %1519 = vmatpush1.msra.mxu0 0.0
    %1520 = vmatprep.subr.mxu0 0.0
    %1521 = vmatpush1.msra.mxu0 0.0
    %1522 = vmatprep.subr.mxu0 0.0
    %1523 = vmatpush1.msra.mxu0 0.0
    %1524 = vmatprep.subr.mxu0 0.0
    %1525 = vmatpush1.msra.mxu0 0.0
    %1526 = vmatprep.subr.mxu0 0.0
    %1527 = vmatpush1.msra.mxu0 0.0
    %1528 = vmatprep.subr.mxu0 0.0
    %1529 = vmatpush1.msra.mxu0 0.0
    %1530 = vmatprep.subr.mxu0 0.0
    %1531 = vmatpush1.msra.mxu0 0.0
    %1532 = vmatprep.subr.mxu0 0.0
    %1533 = vmatpush1.msra.mxu0 0.0
    %1534 = vmatprep.subr.mxu0 0.0
    %1535 = vmatpush1.msra.mxu0 0.0
    %1536 = vmatprep.subr.mxu0 0.0
    %1537 = vmatpush1.msra.mxu0 0.0
    %1538 = vmatprep.subr.mxu0 0.0
    %1539 = vmatpush1.msra.mxu0 0.0
    %1540 = vmatprep.subr.mxu0 0.0
    %1541 = vmatpush1.msra.mxu0 0.0
    %1542 = vmatprep.subr.mxu0 0.0
    %1543 = vmatpush1.msra.mxu0 0.0
    %1544 = vmatprep.subr.mxu0 0.0
    %1545 = vmatpush1.msra.mxu0 0.0
    %1546 = vmatprep.subr.mxu0 0.0
    %1547 = vmatpush1.msra.mxu0 0.0
    %1548 = vmatprep.subr.mxu0 0.0
    %1549 = vmatpush1.msra.mxu0 0.0
    %1550 = vmatprep.subr.mxu0 0.0
    %1551 = vmatpush1.msra.mxu0 0.0
    %1552 = vmatprep.subr.mxu0 0.0
    %1553 = vmatpush1.msra.mxu0 0.0
    %1554 = vmatprep.subr.mxu0 0.0
    %1555 = vmatpush1.msra.mxu0 0.0
    %1556 = vmatprep.subr.mxu0 0.0
    %1557 = vmatpush1.msra.mxu0 0.0
    %1558 = vmatprep.subr.mxu0 0.0
    %1559 = vmatpush1.msra.mxu0 0.0
    %1560 = vmatprep.subr.mxu0 0.0
    %1561 = vmatpush1.msra.mxu0 0.0
    %1562 = vmatprep.subr.mxu0 0.0
    %1563 = vmatpush1.msra.mxu0 0.0
    %1564 = vmatprep.subr.mxu0 0.0
    %1565 = vmatpush1.msra.mxu0 0.0
    %1566 = vmatprep.mubr.f32.mxu0 0.0
    %1567 = vmatmul.mubr.f32.gmra.mrb[0].mxu0 %v1500
    %v1568 = vpop.f32.mrb[0].mxu0
    %v1569 = vadd.f32 %v1498, %v1568
    %v1570 = vpop.f32.mrb[0].mxu0
    %1571 = vdwg.mxu0
    %v1572 = vadd.f32 %v1486, %v1569
    %v1573 = vxor.u32 %v1572, 2147483648
    %v1574 = vmul.f32 %v1573, 1.442695
    %v1575 = vpow.pop %v1574
    %v1576 = vadd.f32 %v1575, 1.0
    %v1577 = vrcp.pop %v1576
    %v1578 = vmul.f32 1.0, %v1577
    %1580 = vrot.lane.b32.xlu0 %v1569, 64
    %v1581 = vpop.permute.xlu0 %1580
    %v1583 = vmul.f32 %v1578, %v1581
    %1585 = vrot.lane.b32.xlu0 %v1583, 64
    %v1586 = vpop.permute.xlu0 %1585
    %v1588 = vadd.f32 %v1486, %v1586
    %v1589 = vtanh.pop %v1588
    %v1590 = vsub.f32 1.0, %v1578
    %1592 = vrot.lane.b32.xlu0 %v1589, 96
    %v1593 = vpop.permute.xlu0 %1592
    %v1595 = vmul.f32 %v1590, %v1593
    %v1596 = vmul.f32 %v1578, %v1287
    %v1597 = vadd.f32 %v1595, %v1596
    %1599 = vrot.lane.b32.xlu0 %v1597, 96
    %v1600 = vpop.permute.xlu0 %1599
    %s1602 = scalar_lea.vmem %s8, 8
    %1603 = vst.msk [vmem:[%s1602] sm:$0x3] %vm362, %v1600
    %s1604 = scalar_lea.vmem %s0, 10
    %v1605 = vld [vmem:[%s1604] sm:$0x3]
    %v1606 = vld [vmem:[%s2] sm:$0xff]
    %v1607 = vld [vmem:[%s2 + $0x8] sm:$0xff]
    %v1608 = vld [vmem:[%s2 + $0x10] sm:$0xff]
    %v1609 = vld [vmem:[%s2 + $0x18] sm:$0xff]
    %v1610 = vld [vmem:[%s3] sm:$0x1]
    %v1612 = vlaneseq
    %v1613 = vshrl.u32 %v1612, 7
    %v1614 = vsub.s32 0, %v1613
    %v1615 = vrot.slane %v1610, %v1614
    %1617 = vmatprep.subr.mxu0 0.0
    %1618 = vmatpush1.msra.mxu0 %v1606
    %1619 = vmatprep.subr.mxu0 0.0
    %1620 = vmatpush1.msra.mxu0 %v1607
    %1621 = vmatprep.subr.mxu0 0.0
    %1622 = vmatpush1.msra.mxu0 %v1608
    %1623 = vmatprep.subr.mxu0 0.0
    %1624 = vmatpush1.msra.mxu0 %v1609
    %1625 = vmatprep.subr.mxu0 0.0
    %1626 = vmatpush1.msra.mxu0 0.0
    %1627 = vmatprep.subr.mxu0 0.0
    %1628 = vmatpush1.msra.mxu0 0.0
    %1629 = vmatprep.subr.mxu0 0.0
    %1630 = vmatpush1.msra.mxu0 0.0
    %1631 = vmatprep.subr.mxu0 0.0
    %1632 = vmatpush1.msra.mxu0 0.0
    %1633 = vmatprep.subr.mxu0 0.0
    %1634 = vmatpush1.msra.mxu0 0.0
    %1635 = vmatprep.subr.mxu0 0.0
    %1636 = vmatpush1.msra.mxu0 0.0
    %1637 = vmatprep.subr.mxu0 0.0
    %1638 = vmatpush1.msra.mxu0 0.0
    %1639 = vmatprep.subr.mxu0 0.0
    %1640 = vmatpush1.msra.mxu0 0.0
    %1641 = vmatprep.subr.mxu0 0.0
    %1642 = vmatpush1.msra.mxu0 0.0
    %1643 = vmatprep.subr.mxu0 0.0
    %1644 = vmatpush1.msra.mxu0 0.0
    %1645 = vmatprep.subr.mxu0 0.0
    %1646 = vmatpush1.msra.mxu0 0.0
    %1647 = vmatprep.subr.mxu0 0.0
    %1648 = vmatpush1.msra.mxu0 0.0
    %1649 = vmatprep.subr.mxu0 0.0
    %1650 = vmatpush1.msra.mxu0 0.0
    %1651 = vmatprep.subr.mxu0 0.0
    %1652 = vmatpush1.msra.mxu0 0.0
    %1653 = vmatprep.subr.mxu0 0.0
    %1654 = vmatpush1.msra.mxu0 0.0
    %1655 = vmatprep.subr.mxu0 0.0
    %1656 = vmatpush1.msra.mxu0 0.0
    %1657 = vmatprep.subr.mxu0 0.0
    %1658 = vmatpush1.msra.mxu0 0.0
    %1659 = vmatprep.subr.mxu0 0.0
    %1660 = vmatpush1.msra.mxu0 0.0
    %1661 = vmatprep.subr.mxu0 0.0
    %1662 = vmatpush1.msra.mxu0 0.0
    %1663 = vmatprep.subr.mxu0 0.0
    %1664 = vmatpush1.msra.mxu0 0.0
    %1665 = vmatprep.subr.mxu0 0.0
    %1666 = vmatpush1.msra.mxu0 0.0
    %1667 = vmatprep.subr.mxu0 0.0
    %1668 = vmatpush1.msra.mxu0 0.0
    %1669 = vmatprep.subr.mxu0 0.0
    %1670 = vmatpush1.msra.mxu0 0.0
    %1671 = vmatprep.subr.mxu0 0.0
    %1672 = vmatpush1.msra.mxu0 0.0
    %1673 = vmatprep.subr.mxu0 0.0
    %1674 = vmatpush1.msra.mxu0 0.0
    %1675 = vmatprep.subr.mxu0 0.0
    %1676 = vmatpush1.msra.mxu0 0.0
    %1677 = vmatprep.subr.mxu0 0.0
    %1678 = vmatpush1.msra.mxu0 0.0
    %1679 = vmatprep.subr.mxu0 0.0
    %1680 = vmatpush1.msra.mxu0 0.0
    %1681 = vmatprep.mubr.f32.mxu0 0.0
    %1682 = vmatmul.mubr.f32.gmra.mrb[0].mxu0 %v1417
    %v1683 = vpop.f32.mrb[0].mxu0
    %v1684 = vadd.f32 %v1615, %v1683
    %v1685 = vpop.f32.mrb[0].mxu0
    %1686 = vdwg.mxu0
    %v1687 = vadd.f32 %v1605, %v1684
    %v1688 = vxor.u32 %v1687, 2147483648
    %v1689 = vmul.f32 %v1688, 1.442695
    %v1690 = vpow.pop %v1689
    %v1691 = vadd.f32 %v1690, 1.0
    %v1692 = vrcp.pop %v1691
    %v1693 = vmul.f32 1.0, %v1692
    %1695 = vrot.lane.b32.xlu0 %v1684, 64
    %v1696 = vpop.permute.xlu0 %1695
    %v1698 = vmul.f32 %v1693, %v1696
    %1700 = vrot.lane.b32.xlu0 %v1698, 64
    %v1701 = vpop.permute.xlu0 %1700
    %v1703 = vadd.f32 %v1605, %v1701
    %v1704 = vtanh.pop %v1703
    %v1705 = vsub.f32 1.0, %v1693
    %1707 = vrot.lane.b32.xlu0 %v1704, 96
    %v1708 = vpop.permute.xlu0 %1707
    %v1710 = vmul.f32 %v1705, %v1708
    %v1711 = vmul.f32 %v1693, %v1402
    %v1712 = vadd.f32 %v1710, %v1711
    %v1713 = vld [vmem:[%s4] sm:$0xff]
    %v1714 = vld [vmem:[%s4 + $0x8] sm:$0xff]
    %v1715 = vld [vmem:[%s4 + $0x10] sm:$0xff]
    %v1716 = vld [vmem:[%s4 + $0x18] sm:$0xff]
    %v1717 = vld [vmem:[%s5] sm:$0x1]
    %v1719 = vlaneseq
    %v1720 = vshrl.u32 %v1719, 7
    %v1721 = vsub.s32 0, %v1720
    %v1722 = vrot.slane %v1717, %v1721
    %1725 = vrot.lane.b32.xlu0 %v1712, 96
    %v1726 = vpop.permute.xlu0 %1725
    %v1727 = vsel %vm56, %v1726, 0
    %1729 = vmatprep.subr.mxu0 0.0
    %1730 = vmatpush1.msra.mxu0 %v1713
    %1731 = vmatprep.subr.mxu0 0.0
    %1732 = vmatpush1.msra.mxu0 %v1714
    %1733 = vmatprep.subr.mxu0 0.0
    %1734 = vmatpush1.msra.mxu0 %v1715
    %1735 = vmatprep.subr.mxu0 0.0
    %1736 = vmatpush1.msra.mxu0 %v1716
    %1737 = vmatprep.subr.mxu0 0.0
    %1738 = vmatpush1.msra.mxu0 0.0
    %1739 = vmatprep.subr.mxu0 0.0
    %1740 = vmatpush1.msra.mxu0 0.0
    %1741 = vmatprep.subr.mxu0 0.0
    %1742 = vmatpush1.msra.mxu0 0.0
    %1743 = vmatprep.subr.mxu0 0.0
    %1744 = vmatpush1.msra.mxu0 0.0
    %1745 = vmatprep.subr.mxu0 0.0
    %1746 = vmatpush1.msra.mxu0 0.0
    %1747 = vmatprep.subr.mxu0 0.0
    %1748 = vmatpush1.msra.mxu0 0.0
    %1749 = vmatprep.subr.mxu0 0.0
    %1750 = vmatpush1.msra.mxu0 0.0
    %1751 = vmatprep.subr.mxu0 0.0
    %1752 = vmatpush1.msra.mxu0 0.0
    %1753 = vmatprep.subr.mxu0 0.0
    %1754 = vmatpush1.msra.mxu0 0.0
    %1755 = vmatprep.subr.mxu0 0.0
    %1756 = vmatpush1.msra.mxu0 0.0
    %1757 = vmatprep.subr.mxu0 0.0
    %1758 = vmatpush1.msra.mxu0 0.0
    %1759 = vmatprep.subr.mxu0 0.0
    %1760 = vmatpush1.msra.mxu0 0.0
    %1761 = vmatprep.subr.mxu0 0.0
    %1762 = vmatpush1.msra.mxu0 0.0
    %1763 = vmatprep.subr.mxu0 0.0
    %1764 = vmatpush1.msra.mxu0 0.0
    %1765 = vmatprep.subr.mxu0 0.0
    %1766 = vmatpush1.msra.mxu0 0.0
    %1767 = vmatprep.subr.mxu0 0.0
    %1768 = vmatpush1.msra.mxu0 0.0
    %1769 = vmatprep.subr.mxu0 0.0
    %1770 = vmatpush1.msra.mxu0 0.0
    %1771 = vmatprep.subr.mxu0 0.0
    %1772 = vmatpush1.msra.mxu0 0.0
    %1773 = vmatprep.subr.mxu0 0.0
    %1774 = vmatpush1.msra.mxu0 0.0
    %1775 = vmatprep.subr.mxu0 0.0
    %1776 = vmatpush1.msra.mxu0 0.0
    %1777 = vmatprep.subr.mxu0 0.0
    %1778 = vmatpush1.msra.mxu0 0.0
    %1779 = vmatprep.subr.mxu0 0.0
    %1780 = vmatpush1.msra.mxu0 0.0
    %1781 = vmatprep.subr.mxu0 0.0
    %1782 = vmatpush1.msra.mxu0 0.0
    %1783 = vmatprep.subr.mxu0 0.0
    %1784 = vmatpush1.msra.mxu0 0.0
    %1785 = vmatprep.subr.mxu0 0.0
    %1786 = vmatpush1.msra.mxu0 0.0
    %1787 = vmatprep.subr.mxu0 0.0
    %1788 = vmatpush1.msra.mxu0 0.0
    %1789 = vmatprep.subr.mxu0 0.0
    %1790 = vmatpush1.msra.mxu0 0.0
    %1791 = vmatprep.subr.mxu0 0.0
    %1792 = vmatpush1.msra.mxu0 0.0
    %1793 = vmatprep.mubr.f32.mxu0 0.0
    %1794 = vmatmul.mubr.f32.gmra.mrb[0].mxu0 %v1727
    %v1795 = vpop.f32.mrb[0].mxu0
    %v1796 = vadd.f32 %v1722, %v1795
    %v1797 = vpop.f32.mrb[0].mxu0
    %1798 = vdwg.mxu0
    %v1799 = vld [vmem:[%s6] sm:$0xff]
    %v1800 = vld [vmem:[%s6 + $0x8] sm:$0xff]
    %v1801 = vld [vmem:[%s6 + $0x10] sm:$0xff]
    %v1802 = vld [vmem:[%s6 + $0x18] sm:$0xff]
    %v1803 = vld [vmem:[%s7] sm:$0x1]
    %v1805 = vlaneseq
    %v1806 = vshrl.u32 %v1805, 7
    %v1807 = vsub.s32 0, %v1806
    %v1808 = vrot.slane %v1803, %v1807
    %v1810 = vsel %vm56, %v1600, 0
    %1812 = vmatprep.subr.mxu0 0.0
    %1813 = vmatpush1.msra.mxu0 %v1799
    %1814 = vmatprep.subr.mxu0 0.0
    %1815 = vmatpush1.msra.mxu0 %v1800
    %1816 = vmatprep.subr.mxu0 0.0
    %1817 = vmatpush1.msra.mxu0 %v1801
    %1818 = vmatprep.subr.mxu0 0.0
    %1819 = vmatpush1.msra.mxu0 %v1802
    %1820 = vmatprep.subr.mxu0 0.0
    %1821 = vmatpush1.msra.mxu0 0.0
    %1822 = vmatprep.subr.mxu0 0.0
    %1823 = vmatpush1.msra.mxu0 0.0
    %1824 = vmatprep.subr.mxu0 0.0
    %1825 = vmatpush1.msra.mxu0 0.0
    %1826 = vmatprep.subr.mxu0 0.0
    %1827 = vmatpush1.msra.mxu0 0.0
    %1828 = vmatprep.subr.mxu0 0.0
    %1829 = vmatpush1.msra.mxu0 0.0
    %1830 = vmatprep.subr.mxu0 0.0
    %1831 = vmatpush1.msra.mxu0 0.0
    %1832 = vmatprep.subr.mxu0 0.0
    %1833 = vmatpush1.msra.mxu0 0.0
    %1834 = vmatprep.subr.mxu0 0.0
    %1835 = vmatpush1.msra.mxu0 0.0
    %1836 = vmatprep.subr.mxu0 0.0
    %1837 = vmatpush1.msra.mxu0 0.0
    %1838 = vmatprep.subr.mxu0 0.0
    %1839 = vmatpush1.msra.mxu0 0.0
    %1840 = vmatprep.subr.mxu0 0.0
    %1841 = vmatpush1.msra.mxu0 0.0
    %1842 = vmatprep.subr.mxu0 0.0
    %1843 = vmatpush1.msra.mxu0 0.0
    %1844 = vmatprep.subr.mxu0 0.0
    %1845 = vmatpush1.msra.mxu0 0.0
    %1846 = vmatprep.subr.mxu0 0.0
    %1847 = vmatpush1.msra.mxu0 0.0
    %1848 = vmatprep.subr.mxu0 0.0
    %1849 = vmatpush1.msra.mxu0 0.0
    %1850 = vmatprep.subr.mxu0 0.0
    %1851 = vmatpush1.msra.mxu0 0.0
    %1852 = vmatprep.subr.mxu0 0.0
    %1853 = vmatpush1.msra.mxu0 0.0
    %1854 = vmatprep.subr.mxu0 0.0
    %1855 = vmatpush1.msra.mxu0 0.0
    %1856 = vmatprep.subr.mxu0 0.0
    %1857 = vmatpush1.msra.mxu0 0.0
    %1858 = vmatprep.subr.mxu0 0.0
    %1859 = vmatpush1.msra.mxu0 0.0
    %1860 = vmatprep.subr.mxu0 0.0
    %1861 = vmatpush1.msra.mxu0 0.0
    %1862 = vmatprep.subr.mxu0 0.0
    %1863 = vmatpush1.msra.mxu0 0.0
    %1864 = vmatprep.subr.mxu0 0.0
    %1865 = vmatpush1.msra.mxu0 0.0
    %1866 = vmatprep.subr.mxu0 0.0
    %1867 = vmatpush1.msra.mxu0 0.0
    %1868 = vmatprep.subr.mxu0 0.0
    %1869 = vmatpush1.msra.mxu0 0.0
    %1870 = vmatprep.subr.mxu0 0.0
    %1871 = vmatpush1.msra.mxu0 0.0
    %1872 = vmatprep.subr.mxu0 0.0
    %1873 = vmatpush1.msra.mxu0 0.0
    %1874 = vmatprep.subr.mxu0 0.0
    %1875 = vmatpush1.msra.mxu0 0.0
    %1876 = vmatprep.mubr.f32.mxu0 0.0
    %1877 = vmatmul.mubr.f32.gmra.mrb[0].mxu0 %v1810
    %v1878 = vpop.f32.mrb[0].mxu0
    %v1879 = vadd.f32 %v1808, %v1878
    %v1880 = vpop.f32.mrb[0].mxu0
    %1881 = vdwg.mxu0
    %v1882 = vadd.f32 %v1796, %v1879
    %v1883 = vxor.u32 %v1882, 2147483648
    %v1884 = vmul.f32 %v1883, 1.442695
    %v1885 = vpow.pop %v1884
    %v1886 = vadd.f32 %v1885, 1.0
    %v1887 = vrcp.pop %v1886
    %v1888 = vmul.f32 1.0, %v1887
    %1890 = vrot.lane.b32.xlu0 %v1879, 64
    %v1891 = vpop.permute.xlu0 %1890
    %v1893 = vmul.f32 %v1888, %v1891
    %1895 = vrot.lane.b32.xlu0 %v1893, 64
    %v1896 = vpop.permute.xlu0 %1895
    %v1898 = vadd.f32 %v1796, %v1896
    %v1899 = vtanh.pop %v1898
    %v1900 = vsub.f32 1.0, %v1888
    %1902 = vrot.lane.b32.xlu0 %v1899, 96
    %v1903 = vpop.permute.xlu0 %1902
    %v1905 = vmul.f32 %v1900, %v1903
    %v1906 = vmul.f32 %v1888, %v1597
    %v1907 = vadd.f32 %v1905, %v1906
    %1909 = vrot.lane.b32.xlu0 %v1907, 96
    %v1910 = vpop.permute.xlu0 %1909
    %s1912 = scalar_lea.vmem %s8, 10
    %1913 = vst.msk [vmem:[%s1912] sm:$0x3] %vm362, %v1910
    %s1914 = scalar_lea.vmem %s0, 12
    %v1915 = vld [vmem:[%s1914] sm:$0x3]
    %v1916 = vld [vmem:[%s2] sm:$0xff]
    %v1917 = vld [vmem:[%s2 + $0x8] sm:$0xff]
    %v1918 = vld [vmem:[%s2 + $0x10] sm:$0xff]
    %v1919 = vld [vmem:[%s2 + $0x18] sm:$0xff]
    %v1920 = vld [vmem:[%s3] sm:$0x1]
    %v1922 = vlaneseq
    %v1923 = vshrl.u32 %v1922, 7
    %v1924 = vsub.s32 0, %v1923
    %v1925 = vrot.slane %v1920, %v1924
    %1927 = vmatprep.subr.mxu0 0.0
    %1928 = vmatpush1.msra.mxu0 %v1916
    %1929 = vmatprep.subr.mxu0 0.0
    %1930 = vmatpush1.msra.mxu0 %v1917
    %1931 = vmatprep.subr.mxu0 0.0
    %1932 = vmatpush1.msra.mxu0 %v1918
    %1933 = vmatprep.subr.mxu0 0.0
    %1934 = vmatpush1.msra.mxu0 %v1919
    %1935 = vmatprep.subr.mxu0 0.0
    %1936 = vmatpush1.msra.mxu0 0.0
    %1937 = vmatprep.subr.mxu0 0.0
    %1938 = vmatpush1.msra.mxu0 0.0
    %1939 = vmatprep.subr.mxu0 0.0
    %1940 = vmatpush1.msra.mxu0 0.0
    %1941 = vmatprep.subr.mxu0 0.0
    %1942 = vmatpush1.msra.mxu0 0.0
    %1943 = vmatprep.subr.mxu0 0.0
    %1944 = vmatpush1.msra.mxu0 0.0
    %1945 = vmatprep.subr.mxu0 0.0
    %1946 = vmatpush1.msra.mxu0 0.0
    %1947 = vmatprep.subr.mxu0 0.0
    %1948 = vmatpush1.msra.mxu0 0.0
    %1949 = vmatprep.subr.mxu0 0.0
    %1950 = vmatpush1.msra.mxu0 0.0
    %1951 = vmatprep.subr.mxu0 0.0
    %1952 = vmatpush1.msra.mxu0 0.0
    %1953 = vmatprep.subr.mxu0 0.0
    %1954 = vmatpush1.msra.mxu0 0.0
    %1955 = vmatprep.subr.mxu0 0.0
    %1956 = vmatpush1.msra.mxu0 0.0
    %1957 = vmatprep.subr.mxu0 0.0
    %1958 = vmatpush1.msra.mxu0 0.0
    %1959 = vmatprep.subr.mxu0 0.0
    %1960 = vmatpush1.msra.mxu0 0.0
    %1961 = vmatprep.subr.mxu0 0.0
    %1962 = vmatpush1.msra.mxu0 0.0
    %1963 = vmatprep.subr.mxu0 0.0
    %1964 = vmatpush1.msra.mxu0 0.0
    %1965 = vmatprep.subr.mxu0 0.0
    %1966 = vmatpush1.msra.mxu0 0.0
    %1967 = vmatprep.subr.mxu0 0.0
    %1968 = vmatpush1.msra.mxu0 0.0
    %1969 = vmatprep.subr.mxu0 0.0
    %1970 = vmatpush1.msra.mxu0 0.0
    %1971 = vmatprep.subr.mxu0 0.0
    %1972 = vmatpush1.msra.mxu0 0.0
    %1973 = vmatprep.subr.mxu0 0.0
    %1974 = vmatpush1.msra.mxu0 0.0
    %1975 = vmatprep.subr.mxu0 0.0
    %1976 = vmatpush1.msra.mxu0 0.0
    %1977 = vmatprep.subr.mxu0 0.0
    %1978 = vmatpush1.msra.mxu0 0.0
    %1979 = vmatprep.subr.mxu0 0.0
    %1980 = vmatpush1.msra.mxu0 0.0
    %1981 = vmatprep.subr.mxu0 0.0
    %1982 = vmatpush1.msra.mxu0 0.0
    %1983 = vmatprep.subr.mxu0 0.0
    %1984 = vmatpush1.msra.mxu0 0.0
    %1985 = vmatprep.subr.mxu0 0.0
    %1986 = vmatpush1.msra.mxu0 0.0
    %1987 = vmatprep.subr.mxu0 0.0
    %1988 = vmatpush1.msra.mxu0 0.0
    %1989 = vmatprep.subr.mxu0 0.0
    %1990 = vmatpush1.msra.mxu0 0.0
    %1991 = vmatprep.mubr.f32.mxu0 0.0
    %1992 = vmatmul.mubr.f32.gmra.mrb[0].mxu0 %v1727
    %v1993 = vpop.f32.mrb[0].mxu0
    %v1994 = vadd.f32 %v1925, %v1993
    %v1995 = vpop.f32.mrb[0].mxu0
    %1996 = vdwg.mxu0
    %v1997 = vadd.f32 %v1915, %v1994
    %v1998 = vxor.u32 %v1997, 2147483648
    %v1999 = vmul.f32 %v1998, 1.442695
    %v2000 = vpow.pop %v1999
    %v2001 = vadd.f32 %v2000, 1.0
    %v2002 = vrcp.pop %v2001
    %v2003 = vmul.f32 1.0, %v2002
    %2005 = vrot.lane.b32.xlu0 %v1994, 64
    %v2006 = vpop.permute.xlu0 %2005
    %v2008 = vmul.f32 %v2003, %v2006
    %2010 = vrot.lane.b32.xlu0 %v2008, 64
    %v2011 = vpop.permute.xlu0 %2010
    %v2013 = vadd.f32 %v1915, %v2011
    %v2014 = vtanh.pop %v2013
    %v2015 = vsub.f32 1.0, %v2003
    %2017 = vrot.lane.b32.xlu0 %v2014, 96
    %v2018 = vpop.permute.xlu0 %2017
    %v2020 = vmul.f32 %v2015, %v2018
    %v2021 = vmul.f32 %v2003, %v1712
    %v2022 = vadd.f32 %v2020, %v2021
    %v2023 = vld [vmem:[%s4] sm:$0xff]
    %v2024 = vld [vmem:[%s4 + $0x8] sm:$0xff]
    %v2025 = vld [vmem:[%s4 + $0x10] sm:$0xff]
    %v2026 = vld [vmem:[%s4 + $0x18] sm:$0xff]
    %v2027 = vld [vmem:[%s5] sm:$0x1]
    %v2029 = vlaneseq
    %v2030 = vshrl.u32 %v2029, 7
    %v2031 = vsub.s32 0, %v2030
    %v2032 = vrot.slane %v2027, %v2031
    %2035 = vrot.lane.b32.xlu0 %v2022, 96
    %v2036 = vpop.permute.xlu0 %2035
    %v2037 = vsel %vm56, %v2036, 0
    %2039 = vmatprep.subr.mxu0 0.0
    %2040 = vmatpush1.msra.mxu0 %v2023
    %2041 = vmatprep.subr.mxu0 0.0
    %2042 = vmatpush1.msra.mxu0 %v2024
    %2043 = vmatprep.subr.mxu0 0.0
    %2044 = vmatpush1.msra.mxu0 %v2025
    %2045 = vmatprep.subr.mxu0 0.0
    %2046 = vmatpush1.msra.mxu0 %v2026
    %2047 = vmatprep.subr.mxu0 0.0
    %2048 = vmatpush1.msra.mxu0 0.0
    %2049 = vmatprep.subr.mxu0 0.0
    %2050 = vmatpush1.msra.mxu0 0.0
    %2051 = vmatprep.subr.mxu0 0.0
    %2052 = vmatpush1.msra.mxu0 0.0
    %2053 = vmatprep.subr.mxu0 0.0
    %2054 = vmatpush1.msra.mxu0 0.0
    %2055 = vmatprep.subr.mxu0 0.0
    %2056 = vmatpush1.msra.mxu0 0.0
    %2057 = vmatprep.subr.mxu0 0.0
    %2058 = vmatpush1.msra.mxu0 0.0
    %2059 = vmatprep.subr.mxu0 0.0
    %2060 = vmatpush1.msra.mxu0 0.0
    %2061 = vmatprep.subr.mxu0 0.0
    %2062 = vmatpush1.msra.mxu0 0.0
    %2063 = vmatprep.subr.mxu0 0.0
    %2064 = vmatpush1.msra.mxu0 0.0
    %2065 = vmatprep.subr.mxu0 0.0
    %2066 = vmatpush1.msra.mxu0 0.0
    %2067 = vmatprep.subr.mxu0 0.0
    %2068 = vmatpush1.msra.mxu0 0.0
    %2069 = vmatprep.subr.mxu0 0.0
    %2070 = vmatpush1.msra.mxu0 0.0
    %2071 = vmatprep.subr.mxu0 0.0
    %2072 = vmatpush1.msra.mxu0 0.0
    %2073 = vmatprep.subr.mxu0 0.0
    %2074 = vmatpush1.msra.mxu0 0.0
    %2075 = vmatprep.subr.mxu0 0.0
    %2076 = vmatpush1.msra.mxu0 0.0
    %2077 = vmatprep.subr.mxu0 0.0
    %2078 = vmatpush1.msra.mxu0 0.0
    %2079 = vmatprep.subr.mxu0 0.0
    %2080 = vmatpush1.msra.mxu0 0.0
    %2081 = vmatprep.subr.mxu0 0.0
    %2082 = vmatpush1.msra.mxu0 0.0
    %2083 = vmatprep.subr.mxu0 0.0
    %2084 = vmatpush1.msra.mxu0 0.0
    %2085 = vmatprep.subr.mxu0 0.0
    %2086 = vmatpush1.msra.mxu0 0.0
    %2087 = vmatprep.subr.mxu0 0.0
    %2088 = vmatpush1.msra.mxu0 0.0
    %2089 = vmatprep.subr.mxu0 0.0
    %2090 = vmatpush1.msra.mxu0 0.0
    %2091 = vmatprep.subr.mxu0 0.0
    %2092 = vmatpush1.msra.mxu0 0.0
    %2093 = vmatprep.subr.mxu0 0.0
    %2094 = vmatpush1.msra.mxu0 0.0
    %2095 = vmatprep.subr.mxu0 0.0
    %2096 = vmatpush1.msra.mxu0 0.0
    %2097 = vmatprep.subr.mxu0 0.0
    %2098 = vmatpush1.msra.mxu0 0.0
    %2099 = vmatprep.subr.mxu0 0.0
    %2100 = vmatpush1.msra.mxu0 0.0
    %2101 = vmatprep.subr.mxu0 0.0
    %2102 = vmatpush1.msra.mxu0 0.0
    %2103 = vmatprep.mubr.f32.mxu0 0.0
    %2104 = vmatmul.mubr.f32.gmra.mrb[0].mxu0 %v2037
    %v2105 = vpop.f32.mrb[0].mxu0
    %v2106 = vadd.f32 %v2032, %v2105
    %v2107 = vpop.f32.mrb[0].mxu0
    %2108 = vdwg.mxu0
    %v2109 = vld [vmem:[%s6] sm:$0xff]
    %v2110 = vld [vmem:[%s6 + $0x8] sm:$0xff]
    %v2111 = vld [vmem:[%s6 + $0x10] sm:$0xff]
    %v2112 = vld [vmem:[%s6 + $0x18] sm:$0xff]
    %v2113 = vld [vmem:[%s7] sm:$0x1]
    %v2115 = vlaneseq
    %v2116 = vshrl.u32 %v2115, 7
    %v2117 = vsub.s32 0, %v2116
    %v2118 = vrot.slane %v2113, %v2117
    %v2120 = vsel %vm56, %v1910, 0
    %2122 = vmatprep.subr.mxu0 0.0
    %2123 = vmatpush1.msra.mxu0 %v2109
    %2124 = vmatprep.subr.mxu0 0.0
    %2125 = vmatpush1.msra.mxu0 %v2110
    %2126 = vmatprep.subr.mxu0 0.0
    %2127 = vmatpush1.msra.mxu0 %v2111
    %2128 = vmatprep.subr.mxu0 0.0
    %2129 = vmatpush1.msra.mxu0 %v2112
    %2130 = vmatprep.subr.mxu0 0.0
    %2131 = vmatpush1.msra.mxu0 0.0
    %2132 = vmatprep.subr.mxu0 0.0
    %2133 = vmatpush1.msra.mxu0 0.0
    %2134 = vmatprep.subr.mxu0 0.0
    %2135 = vmatpush1.msra.mxu0 0.0
    %2136 = vmatprep.subr.mxu0 0.0
    %2137 = vmatpush1.msra.mxu0 0.0
    %2138 = vmatprep.subr.mxu0 0.0
    %2139 = vmatpush1.msra.mxu0 0.0
    %2140 = vmatprep.subr.mxu0 0.0
    %2141 = vmatpush1.msra.mxu0 0.0
    %2142 = vmatprep.subr.mxu0 0.0
    %2143 = vmatpush1.msra.mxu0 0.0
    %2144 = vmatprep.subr.mxu0 0.0
    %2145 = vmatpush1.msra.mxu0 0.0
    %2146 = vmatprep.subr.mxu0 0.0
    %2147 = vmatpush1.msra.mxu0 0.0
    %2148 = vmatprep.subr.mxu0 0.0
    %2149 = vmatpush1.msra.mxu0 0.0
    %2150 = vmatprep.subr.mxu0 0.0
    %2151 = vmatpush1.msra.mxu0 0.0
    %2152 = vmatprep.subr.mxu0 0.0
    %2153 = vmatpush1.msra.mxu0 0.0
    %2154 = vmatprep.subr.mxu0 0.0
    %2155 = vmatpush1.msra.mxu0 0.0
    %2156 = vmatprep.subr.mxu0 0.0
    %2157 = vmatpush1.msra.mxu0 0.0
    %2158 = vmatprep.subr.mxu0 0.0
    %2159 = vmatpush1.msra.mxu0 0.0
    %2160 = vmatprep.subr.mxu0 0.0
    %2161 = vmatpush1.msra.mxu0 0.0
    %2162 = vmatprep.subr.mxu0 0.0
    %2163 = vmatpush1.msra.mxu0 0.0
    %2164 = vmatprep.subr.mxu0 0.0
    %2165 = vmatpush1.msra.mxu0 0.0
    %2166 = vmatprep.subr.mxu0 0.0
    %2167 = vmatpush1.msra.mxu0 0.0
    %2168 = vmatprep.subr.mxu0 0.0
    %2169 = vmatpush1.msra.mxu0 0.0
    %2170 = vmatprep.subr.mxu0 0.0
    %2171 = vmatpush1.msra.mxu0 0.0
    %2172 = vmatprep.subr.mxu0 0.0
    %2173 = vmatpush1.msra.mxu0 0.0
    %2174 = vmatprep.subr.mxu0 0.0
    %2175 = vmatpush1.msra.mxu0 0.0
    %2176 = vmatprep.subr.mxu0 0.0
    %2177 = vmatpush1.msra.mxu0 0.0
    %2178 = vmatprep.subr.mxu0 0.0
    %2179 = vmatpush1.msra.mxu0 0.0
    %2180 = vmatprep.subr.mxu0 0.0
    %2181 = vmatpush1.msra.mxu0 0.0
    %2182 = vmatprep.subr.mxu0 0.0
    %2183 = vmatpush1.msra.mxu0 0.0
    %2184 = vmatprep.subr.mxu0 0.0
    %2185 = vmatpush1.msra.mxu0 0.0
    %2186 = vmatprep.mubr.f32.mxu0 0.0
    %2187 = vmatmul.mubr.f32.gmra.mrb[0].mxu0 %v2120
    %v2188 = vpop.f32.mrb[0].mxu0
    %v2189 = vadd.f32 %v2118, %v2188
    %v2190 = vpop.f32.mrb[0].mxu0
    %2191 = vdwg.mxu0
    %v2192 = vadd.f32 %v2106, %v2189
    %v2193 = vxor.u32 %v2192, 2147483648
    %v2194 = vmul.f32 %v2193, 1.442695
    %v2195 = vpow.pop %v2194
    %v2196 = vadd.f32 %v2195, 1.0
    %v2197 = vrcp.pop %v2196
    %v2198 = vmul.f32 1.0, %v2197
    %2200 = vrot.lane.b32.xlu0 %v2189, 64
    %v2201 = vpop.permute.xlu0 %2200
    %v2203 = vmul.f32 %v2198, %v2201
    %2205 = vrot.lane.b32.xlu0 %v2203, 64
    %v2206 = vpop.permute.xlu0 %2205
    %v2208 = vadd.f32 %v2106, %v2206
    %v2209 = vtanh.pop %v2208
    %v2210 = vsub.f32 1.0, %v2198
    %2212 = vrot.lane.b32.xlu0 %v2209, 96
    %v2213 = vpop.permute.xlu0 %2212
    %v2215 = vmul.f32 %v2210, %v2213
    %v2216 = vmul.f32 %v2198, %v1907
    %v2217 = vadd.f32 %v2215, %v2216
    %2219 = vrot.lane.b32.xlu0 %v2217, 96
    %v2220 = vpop.permute.xlu0 %2219
    %s2222 = scalar_lea.vmem %s8, 12
    %2223 = vst.msk [vmem:[%s2222] sm:$0x3] %vm362, %v2220
    %s2224 = scalar_lea.vmem %s0, 14
    %v2225 = vld [vmem:[%s2224] sm:$0x3]
    %v2226 = vld [vmem:[%s2] sm:$0xff]
    %v2227 = vld [vmem:[%s2 + $0x8] sm:$0xff]
    %v2228 = vld [vmem:[%s2 + $0x10] sm:$0xff]
    %v2229 = vld [vmem:[%s2 + $0x18] sm:$0xff]
    %v2230 = vld [vmem:[%s3] sm:$0x1]
    %v2232 = vlaneseq
    %v2233 = vshrl.u32 %v2232, 7
    %v2234 = vsub.s32 0, %v2233
    %v2235 = vrot.slane %v2230, %v2234
    %2237 = vmatprep.subr.mxu0 0.0
    %2238 = vmatpush1.msra.mxu0 %v2226
    %2239 = vmatprep.subr.mxu0 0.0
    %2240 = vmatpush1.msra.mxu0 %v2227
    %2241 = vmatprep.subr.mxu0 0.0
    %2242 = vmatpush1.msra.mxu0 %v2228
    %2243 = vmatprep.subr.mxu0 0.0
    %2244 = vmatpush1.msra.mxu0 %v2229
    %2245 = vmatprep.subr.mxu0 0.0
    %2246 = vmatpush1.msra.mxu0 0.0
    %2247 = vmatprep.subr.mxu0 0.0
    %2248 = vmatpush1.msra.mxu0 0.0
    %2249 = vmatprep.subr.mxu0 0.0
    %2250 = vmatpush1.msra.mxu0 0.0
    %2251 = vmatprep.subr.mxu0 0.0
    %2252 = vmatpush1.msra.mxu0 0.0
    %2253 = vmatprep.subr.mxu0 0.0
    %2254 = vmatpush1.msra.mxu0 0.0
    %2255 = vmatprep.subr.mxu0 0.0
    %2256 = vmatpush1.msra.mxu0 0.0
    %2257 = vmatprep.subr.mxu0 0.0
    %2258 = vmatpush1.msra.mxu0 0.0
    %2259 = vmatprep.subr.mxu0 0.0
    %2260 = vmatpush1.msra.mxu0 0.0
    %2261 = vmatprep.subr.mxu0 0.0
    %2262 = vmatpush1.msra.mxu0 0.0
    %2263 = vmatprep.subr.mxu0 0.0
    %2264 = vmatpush1.msra.mxu0 0.0
    %2265 = vmatprep.subr.mxu0 0.0
    %2266 = vmatpush1.msra.mxu0 0.0
    %2267 = vmatprep.subr.mxu0 0.0
    %2268 = vmatpush1.msra.mxu0 0.0
    %2269 = vmatprep.subr.mxu0 0.0
    %2270 = vmatpush1.msra.mxu0 0.0
    %2271 = vmatprep.subr.mxu0 0.0
    %2272 = vmatpush1.msra.mxu0 0.0
    %2273 = vmatprep.subr.mxu0 0.0
    %2274 = vmatpush1.msra.mxu0 0.0
    %2275 = vmatprep.subr.mxu0 0.0
    %2276 = vmatpush1.msra.mxu0 0.0
    %2277 = vmatprep.subr.mxu0 0.0
    %2278 = vmatpush1.msra.mxu0 0.0
    %2279 = vmatprep.subr.mxu0 0.0
    %2280 = vmatpush1.msra.mxu0 0.0
    %2281 = vmatprep.subr.mxu0 0.0
    %2282 = vmatpush1.msra.mxu0 0.0
    %2283 = vmatprep.subr.mxu0 0.0
    %2284 = vmatpush1.msra.mxu0 0.0
    %2285 = vmatprep.subr.mxu0 0.0
    %2286 = vmatpush1.msra.mxu0 0.0
    %2287 = vmatprep.subr.mxu0 0.0
    %2288 = vmatpush1.msra.mxu0 0.0
    %2289 = vmatprep.subr.mxu0 0.0
    %2290 = vmatpush1.msra.mxu0 0.0
    %2291 = vmatprep.subr.mxu0 0.0
    %2292 = vmatpush1.msra.mxu0 0.0
    %2293 = vmatprep.subr.mxu0 0.0
    %2294 = vmatpush1.msra.mxu0 0.0
    %2295 = vmatprep.subr.mxu0 0.0
    %2296 = vmatpush1.msra.mxu0 0.0
    %2297 = vmatprep.subr.mxu0 0.0
    %2298 = vmatpush1.msra.mxu0 0.0
    %2299 = vmatprep.subr.mxu0 0.0
    %2300 = vmatpush1.msra.mxu0 0.0
    %2301 = vmatprep.mubr.f32.mxu0 0.0
    %2302 = vmatmul.mubr.f32.gmra.mrb[0].mxu0 %v2037
    %v2303 = vpop.f32.mrb[0].mxu0
    %v2304 = vadd.f32 %v2235, %v2303
    %v2305 = vpop.f32.mrb[0].mxu0
    %2306 = vdwg.mxu0
    %v2307 = vadd.f32 %v2225, %v2304
    %v2308 = vxor.u32 %v2307, 2147483648
    %v2309 = vmul.f32 %v2308, 1.442695
    %v2310 = vpow.pop %v2309
    %v2311 = vadd.f32 %v2310, 1.0
    %v2312 = vrcp.pop %v2311
    %v2313 = vmul.f32 1.0, %v2312
    %2315 = vrot.lane.b32.xlu0 %v2304, 64
    %v2316 = vpop.permute.xlu0 %2315
    %v2318 = vmul.f32 %v2313, %v2316
    %2320 = vrot.lane.b32.xlu0 %v2318, 64
    %v2321 = vpop.permute.xlu0 %2320
    %v2323 = vadd.f32 %v2225, %v2321
    %v2324 = vtanh.pop %v2323
    %v2325 = vsub.f32 1.0, %v2313
    %2327 = vrot.lane.b32.xlu0 %v2324, 96
    %v2328 = vpop.permute.xlu0 %2327
    %v2330 = vmul.f32 %v2325, %v2328
    %v2331 = vmul.f32 %v2313, %v2022
    %v2332 = vadd.f32 %v2330, %v2331
    %v2333 = vld [vmem:[%s4] sm:$0xff]
    %v2334 = vld [vmem:[%s4 + $0x8] sm:$0xff]
    %v2335 = vld [vmem:[%s4 + $0x10] sm:$0xff]
    %v2336 = vld [vmem:[%s4 + $0x18] sm:$0xff]
    %v2337 = vld [vmem:[%s5] sm:$0x1]
    %v2339 = vlaneseq
    %v2340 = vshrl.u32 %v2339, 7
    %v2341 = vsub.s32 0, %v2340
    %v2342 = vrot.slane %v2337, %v2341
    %2345 = vrot.lane.b32.xlu0 %v2332, 96
    %v2346 = vpop.permute.xlu0 %2345
    %v2347 = vsel %vm56, %v2346, 0
    %2349 = vmatprep.subr.mxu0 0.0
    %2350 = vmatpush1.msra.mxu0 %v2333
    %2351 = vmatprep.subr.mxu0 0.0
    %2352 = vmatpush1.msra.mxu0 %v2334
    %2353 = vmatprep.subr.mxu0 0.0
    %2354 = vmatpush1.msra.mxu0 %v2335
    %2355 = vmatprep.subr.mxu0 0.0
    %2356 = vmatpush1.msra.mxu0 %v2336
    %2357 = vmatprep.subr.mxu0 0.0
    %2358 = vmatpush1.msra.mxu0 0.0
    %2359 = vmatprep.subr.mxu0 0.0
    %2360 = vmatpush1.msra.mxu0 0.0
    %2361 = vmatprep.subr.mxu0 0.0
    %2362 = vmatpush1.msra.mxu0 0.0
    %2363 = vmatprep.subr.mxu0 0.0
    %2364 = vmatpush1.msra.mxu0 0.0
    %2365 = vmatprep.subr.mxu0 0.0
    %2366 = vmatpush1.msra.mxu0 0.0
    %2367 = vmatprep.subr.mxu0 0.0
    %2368 = vmatpush1.msra.mxu0 0.0
    %2369 = vmatprep.subr.mxu0 0.0
    %2370 = vmatpush1.msra.mxu0 0.0
    %2371 = vmatprep.subr.mxu0 0.0
    %2372 = vmatpush1.msra.mxu0 0.0
    %2373 = vmatprep.subr.mxu0 0.0
    %2374 = vmatpush1.msra.mxu0 0.0
    %2375 = vmatprep.subr.mxu0 0.0
    %2376 = vmatpush1.msra.mxu0 0.0
    %2377 = vmatprep.subr.mxu0 0.0
    %2378 = vmatpush1.msra.mxu0 0.0
    %2379 = vmatprep.subr.mxu0 0.0
    %2380 = vmatpush1.msra.mxu0 0.0
    %2381 = vmatprep.subr.mxu0 0.0
    %2382 = vmatpush1.msra.mxu0 0.0
    %2383 = vmatprep.subr.mxu0 0.0
    %2384 = vmatpush1.msra.mxu0 0.0
    %2385 = vmatprep.subr.mxu0 0.0
    %2386 = vmatpush1.msra.mxu0 0.0
    %2387 = vmatprep.subr.mxu0 0.0
    %2388 = vmatpush1.msra.mxu0 0.0
    %2389 = vmatprep.subr.mxu0 0.0
    %2390 = vmatpush1.msra.mxu0 0.0
    %2391 = vmatprep.subr.mxu0 0.0
    %2392 = vmatpush1.msra.mxu0 0.0
    %2393 = vmatprep.subr.mxu0 0.0
    %2394 = vmatpush1.msra.mxu0 0.0
    %2395 = vmatprep.subr.mxu0 0.0
    %2396 = vmatpush1.msra.mxu0 0.0
    %2397 = vmatprep.subr.mxu0 0.0
    %2398 = vmatpush1.msra.mxu0 0.0
    %2399 = vmatprep.subr.mxu0 0.0
    %2400 = vmatpush1.msra.mxu0 0.0
    %2401 = vmatprep.subr.mxu0 0.0
    %2402 = vmatpush1.msra.mxu0 0.0
    %2403 = vmatprep.subr.mxu0 0.0
    %2404 = vmatpush1.msra.mxu0 0.0
    %2405 = vmatprep.subr.mxu0 0.0
    %2406 = vmatpush1.msra.mxu0 0.0
    %2407 = vmatprep.subr.mxu0 0.0
    %2408 = vmatpush1.msra.mxu0 0.0
    %2409 = vmatprep.subr.mxu0 0.0
    %2410 = vmatpush1.msra.mxu0 0.0
    %2411 = vmatprep.subr.mxu0 0.0
    %2412 = vmatpush1.msra.mxu0 0.0
    %2413 = vmatprep.mubr.f32.mxu0 0.0
    %2414 = vmatmul.mubr.f32.gmra.mrb[0].mxu0 %v2347
    %v2415 = vpop.f32.mrb[0].mxu0
    %v2416 = vadd.f32 %v2342, %v2415
    %v2417 = vpop.f32.mrb[0].mxu0
    %2418 = vdwg.mxu0
    %v2419 = vld [vmem:[%s6] sm:$0xff]
    %v2420 = vld [vmem:[%s6 + $0x8] sm:$0xff]
    %v2421 = vld [vmem:[%s6 + $0x10] sm:$0xff]
    %v2422 = vld [vmem:[%s6 + $0x18] sm:$0xff]
    %v2423 = vld [vmem:[%s7] sm:$0x1]
    %v2425 = vlaneseq
    %v2426 = vshrl.u32 %v2425, 7
    %v2427 = vsub.s32 0, %v2426
    %v2428 = vrot.slane %v2423, %v2427
    %v2430 = vsel %vm56, %v2220, 0
    %2432 = vmatprep.subr.mxu0 0.0
    %2433 = vmatpush1.msra.mxu0 %v2419
    %2434 = vmatprep.subr.mxu0 0.0
    %2435 = vmatpush1.msra.mxu0 %v2420
    %2436 = vmatprep.subr.mxu0 0.0
    %2437 = vmatpush1.msra.mxu0 %v2421
    %2438 = vmatprep.subr.mxu0 0.0
    %2439 = vmatpush1.msra.mxu0 %v2422
    %2440 = vmatprep.subr.mxu0 0.0
    %2441 = vmatpush1.msra.mxu0 0.0
    %2442 = vmatprep.subr.mxu0 0.0
    %2443 = vmatpush1.msra.mxu0 0.0
    %2444 = vmatprep.subr.mxu0 0.0
    %2445 = vmatpush1.msra.mxu0 0.0
    %2446 = vmatprep.subr.mxu0 0.0
    %2447 = vmatpush1.msra.mxu0 0.0
    %2448 = vmatprep.subr.mxu0 0.0
    %2449 = vmatpush1.msra.mxu0 0.0
    %2450 = vmatprep.subr.mxu0 0.0
    %2451 = vmatpush1.msra.mxu0 0.0
    %2452 = vmatprep.subr.mxu0 0.0
    %2453 = vmatpush1.msra.mxu0 0.0
    %2454 = vmatprep.subr.mxu0 0.0
    %2455 = vmatpush1.msra.mxu0 0.0
    %2456 = vmatprep.subr.mxu0 0.0
    %2457 = vmatpush1.msra.mxu0 0.0
    %2458 = vmatprep.subr.mxu0 0.0
    %2459 = vmatpush1.msra.mxu0 0.0
    %2460 = vmatprep.subr.mxu0 0.0
    %2461 = vmatpush1.msra.mxu0 0.0
    %2462 = vmatprep.subr.mxu0 0.0
    %2463 = vmatpush1.msra.mxu0 0.0
    %2464 = vmatprep.subr.mxu0 0.0
    %2465 = vmatpush1.msra.mxu0 0.0
    %2466 = vmatprep.subr.mxu0 0.0
    %2467 = vmatpush1.msra.mxu0 0.0
    %2468 = vmatprep.subr.mxu0 0.0
    %2469 = vmatpush1.msra.mxu0 0.0
    %2470 = vmatprep.subr.mxu0 0.0
    %2471 = vmatpush1.msra.mxu0 0.0
    %2472 = vmatprep.subr.mxu0 0.0
    %2473 = vmatpush1.msra.mxu0 0.0
    %2474 = vmatprep.subr.mxu0 0.0
    %2475 = vmatpush1.msra.mxu0 0.0
    %2476 = vmatprep.subr.mxu0 0.0
    %2477 = vmatpush1.msra.mxu0 0.0
    %2478 = vmatprep.subr.mxu0 0.0
    %2479 = vmatpush1.msra.mxu0 0.0
    %2480 = vmatprep.subr.mxu0 0.0
    %2481 = vmatpush1.msra.mxu0 0.0
    %2482 = vmatprep.subr.mxu0 0.0
    %2483 = vmatpush1.msra.mxu0 0.0
    %2484 = vmatprep.subr.mxu0 0.0
    %2485 = vmatpush1.msra.mxu0 0.0
    %2486 = vmatprep.subr.mxu0 0.0
    %2487 = vmatpush1.msra.mxu0 0.0
    %2488 = vmatprep.subr.mxu0 0.0
    %2489 = vmatpush1.msra.mxu0 0.0
    %2490 = vmatprep.subr.mxu0 0.0
    %2491 = vmatpush1.msra.mxu0 0.0
    %2492 = vmatprep.subr.mxu0 0.0
    %2493 = vmatpush1.msra.mxu0 0.0
    %2494 = vmatprep.subr.mxu0 0.0
    %2495 = vmatpush1.msra.mxu0 0.0
    %2496 = vmatprep.mubr.f32.mxu0 0.0
    %2497 = vmatmul.mubr.f32.gmra.mrb[0].mxu0 %v2430
    %v2498 = vpop.f32.mrb[0].mxu0
    %v2499 = vadd.f32 %v2428, %v2498
    %v2500 = vpop.f32.mrb[0].mxu0
    %2501 = vdwg.mxu0
    %v2502 = vadd.f32 %v2416, %v2499
    %v2503 = vxor.u32 %v2502, 2147483648
    %v2504 = vmul.f32 %v2503, 1.442695
    %v2505 = vpow.pop %v2504
    %v2506 = vadd.f32 %v2505, 1.0
    %v2507 = vrcp.pop %v2506
    %v2508 = vmul.f32 1.0, %v2507
    %2510 = vrot.lane.b32.xlu0 %v2499, 64
    %v2511 = vpop.permute.xlu0 %2510
    %v2513 = vmul.f32 %v2508, %v2511
    %2515 = vrot.lane.b32.xlu0 %v2513, 64
    %v2516 = vpop.permute.xlu0 %2515
    %v2518 = vadd.f32 %v2416, %v2516
    %v2519 = vtanh.pop %v2518
    %v2520 = vsub.f32 1.0, %v2508
    %2522 = vrot.lane.b32.xlu0 %v2519, 96
    %v2523 = vpop.permute.xlu0 %2522
    %v2525 = vmul.f32 %v2520, %v2523
    %v2526 = vmul.f32 %v2508, %v2217
    %v2527 = vadd.f32 %v2525, %v2526
    %2529 = vrot.lane.b32.xlu0 %v2527, 96
    %v2530 = vpop.permute.xlu0 %2529
    %s2532 = scalar_lea.vmem %s8, 14
    %2533 = vst.msk [vmem:[%s2532] sm:$0x3] %vm362, %v2530
    %2535 = vst.msk [vmem:[#allocation2] sm:$0x3] %vm362, %v2346
    %2536 = vst.msk [vmem:[%s42] sm:$0x3] %vm362, %v2530
    // Predicated region
    $region38: #{two_step_network_forward.1} parent=1 // pred_check
      %p2537 = pneg %p32
    $region39: #{two_step_network_forward.1} parent=1 // pred_check_branch
      %2539 = sbr.rel (%p2537) target = $region41
    $region40: #{two_step_network_forward.1} parent=1 // pred_region
      %v2540 = vld [vmem:[#allocation2] sm:$0x3]
      %v2541 = vld [vmem:[#allocation2 + $0x2] sm:$0x3]
      %2542 = vst.msk [vmem:[#allocation3] sm:$0x3] %vm362, %v2540
      %2543 = vst.msk [vmem:[#allocation3 + $0x2] sm:$0x3] %vm362, %v2541
    $region41: #{two_step_network_forward.1} parent=1 // pred_fallthru
      _
    // Predicated region
    $region42: #{two_step_network_forward.1} parent=1 // pred_check
      _
    $region43: #{two_step_network_forward.1} parent=1 // pred_check_branch
      %2545 = sbr.rel (0) target = $region45
    $region44: #{two_step_network_forward.1} parent=1 // pred_region
      _
    $region45: #{two_step_network_forward.1} parent=1 // pred_fallthru
      _
    // Predicated region
    $region46: #{two_step_network_forward.1} parent=1 // pred_check
      _
    $region47: #{two_step_network_forward.1} parent=1 // pred_check_branch
      %2547 = sbr.rel (0) target = $region49
    $region48: #{two_step_network_forward.1} parent=1 // pred_region
      %s2549 = ssub.s32 64, 64
      %2550 = vsyncadd [#allocation4], %s2549
      %s2551 = sshll.u32 [#allocation3], 4
      %s2552 = int_to_ptr.vmem [resolvable:$true] %s2551
      %2557 = dma.vmem_to_hbm [thread:$0]  %s2552, 64, %s9, [#allocation4], 32, 32, 2
    $region49: #{two_step_network_forward.1} parent=1 // pred_fallthru
      _
    // Predicated region
    $region50: #{two_step_network_forward.1} parent=1 // pred_check
      _
    $region51: #{two_step_network_forward.1} parent=1 // pred_check_branch
      %2559 = sbr.rel (0) target = $region53
    $region52: #{two_step_network_forward.1} parent=1 // pred_region
      _
    $region53: #{two_step_network_forward.1} parent=1 // pred_fallthru
      _
    // Predicated region
    $region54: #{two_step_network_forward.1} parent=1 // pred_check
      _
    $region55: #{two_step_network_forward.1} parent=1 // pred_check_branch
      %2561 = sbr.rel (0) target = $region57
    $region56: #{two_step_network_forward.1} parent=1 // pred_region
      %2562 = dma.done [#allocation4], 64
    $region57: #{two_step_network_forward.1} parent=1 // pred_fallthru
      _
    %2563 = vsyncpa [#allocation4], 1

</llo_original>
